<compile_context>
chip_gen: v6e
topology: v6e:2x2x1
jax: 0.10.0
libtpu: 0.0.40
codegen_flags: <defaults>
</compile_context>

<pallas_src>
import jax
import jax.numpy as jnp
import numpy as np
from jax.experimental import pallas as pl
from jax.experimental.pallas import tpu as pltpu


def _locnet_kernel(x_ref,
                   w1_ref, b1_ref, w2_ref, b2_ref, w3_ref, b3_ref,
                   w4_ref, b4_ref, w5_ref, b5_ref, w6_ref, b6_ref,
                   out_ref, feat_acc_ref):
    """One grid step = nb point clouds x l_tile points.

    grid = (B // nb ["parallel"], L_pad // l_tile ["arbitrary", reduction last]).
    feat_acc_ref: (nb, 1024) f32 VMEM scratch holding the running max over point tiles.
    """
    k = pl.program_id(1)
    nb, l_tile, _ = x_ref.shape
    rows = nb * l_tile
    bf16, f32 = jnp.bfloat16, jnp.float32

    @pl.when(k == 0)
    def _init():
        feat_acc_ref[...] = jnp.full_like(feat_acc_ref, -jnp.inf)

    # Channels-last flattened points; conv1d(k=1) is a per-point linear layer.
    x = x_ref[...].reshape(rows, 3)                            # [rows, 3] f32
    w1 = w1_ref[...]                                           # [3, 64]  f32

    # conv1 (din=3): three broadcast FMAs on the VPU, skip the degenerate MXU matmul.
    h = (x[:, 0:1] * w1[0:1, :]
         + x[:, 1:2] * w1[1:2, :]
         + x[:, 2:3] * w1[2:3, :]
         + b1_ref[...])
    h = jnp.maximum(h, 0.0)                                    # [rows, 64] f32

    # conv2 / conv3: bf16 operands, f32 accumulation on the MXU.
    h = jnp.dot(h.astype(bf16), w2_ref[...],
                preferred_element_type=f32) + b2_ref[...]
    h = jnp.maximum(h, 0.0)                                    # [rows, 256]
    h = jnp.dot(h.astype(bf16), w3_ref[...],
                preferred_element_type=f32) + b3_ref[...]      # [rows, 1024], no ReLU

    # MaxPool1d over this point tile, folded into the running max per cloud.
    tile_max = jnp.max(h.reshape(nb, l_tile, h.shape[-1]), axis=1)   # [nb, 1024]
    feat_acc_ref[...] = jnp.maximum(feat_acc_ref[...], tile_max)

    @pl.when(k == pl.num_programs(1) - 1)
    def _head():
        # MLP head 1024 -> 512 -> 256 -> out_pad at M = nb (fc weights stay VMEM-resident).
        feat = feat_acc_ref[...]
        f = jnp.dot(feat.astype(bf16), w4_ref[...],
                    preferred_element_type=f32) + b4_ref[...]
        f = jnp.maximum(f, 0.0)                                # [nb, 512]
        f = jnp.dot(f.astype(bf16), w5_ref[...],
                    preferred_element_type=f32) + b5_ref[...]
        f = jnp.maximum(f, 0.0)                                # [nb, 256]
        f = jnp.dot(f.astype(bf16), w6_ref[...],
                    preferred_element_type=f32) + b6_ref[...]
        out_ref[...] = f        # lane-dense (nb, out_pad) unmasked store


def _choose_tiles(B, L, target_rows=1024, max_l_tile=512):
    """Pick (nb clouds / step, l_tile points / step, padded L).

    - l_tile is a multiple of 8 (clean sublane tiles for the reshape / max-pool).
    - nb*l_tile targets ~1024 rows so the conv matmuls fill the MXU M dimension
      (and rows stay a multiple of 512 when l_tile allows, good for v5e's 4 MXUs),
      while the [rows,1024] f32 intermediate stays ~4 MiB (safe on v7x's 64 MiB VMEM).
    - keep the parallel batch axis >= 2 when B allows so both v7x TensorCores get work.
    - nb must divide B and be a multiple of 8 (out-block sublane legality) or equal B.
    """
    if L <= max_l_tile:
        l_tile = ((L + 7) // 8) * 8
    else:
        l_tile = max_l_tile
    L_pad = ((L + l_tile - 1) // l_tile) * l_tile

    nb = max(1, min(B, target_rows // l_tile))
    if nb >= B and B > 1:
        nb = max(1, B // 2)                      # grid batch axis >= 2 (v7x: 2 TCs)
    while nb > 1 and (B % nb != 0 or nb % 8 != 0):
        nb -= 1
    if B % nb != 0 or (nb % 8 != 0 and nb != B):
        nb = B                                   # full-extent block is always legal
    return nb, l_tile, L_pad


def locnet_reg_kitti(obs, params):
    """obs: [B, L, 3] float32.  params: dict from init_params (fc3 stored pre-padded)."""
    B, L, C = obs.shape
    assert C == 3, "the input size must be <BxLx3>"
    out_dims = params["out_dims"]
    (w1, b1), (w2, b2), (w3, b3) = params["conv1"], params["conv2"], params["conv3"]
    (w4, b4), (w5, b5), (w6p, b6p) = params["fc1"], params["fc2"], params["fc3"]
    out_pad = w6p.shape[1]
    feat_dim = w3.shape[1]

    nb, l_tile, L_pad = _choose_tiles(B, L)
    if L_pad != L:
        # Pad points by repeating the last point of each cloud: conv outputs of the
        # duplicates equal the real ones, so the max-pool result is unchanged.
        pad = jnp.broadcast_to(obs[:, -1:, :], (B, L_pad - L, 3))
        obs = jnp.concatenate([obs, pad], axis=1)

    grid = (B // nb, L_pad // l_tile)

    def const_spec(arr):
        # Whole-array block, constant index -> DMA'd once, reused on every grid step.
        return pl.BlockSpec(arr.shape, lambda i, k, _nd=arr.ndim: (0,) * _nd)

    grid_spec = pltpu.PrefetchScalarGridSpec(
        num_scalar_prefetch=0,
        grid=grid,
        in_specs=[
            pl.BlockSpec((nb, l_tile, 3), lambda i, k: (i, k, 0)),
            const_spec(w1), const_spec(b1),
            const_spec(w2), const_spec(b2),
            const_spec(w3), const_spec(b3),
            const_spec(w4), const_spec(b4),
            const_spec(w5), const_spec(b5),
            const_spec(w6p), const_spec(b6p),
        ],
        out_specs=pl.BlockSpec((nb, out_pad), lambda i, k: (i, 0)),
        scratch_shapes=[pltpu.VMEM((nb, feat_dim), jnp.float32)],
    )

    out = pl.pallas_call(
        _locnet_kernel,
        out_shape=jax.ShapeDtypeStruct((B, out_pad), jnp.float32),
        grid_spec=grid_spec,
        compiler_params=pltpu.CompilerParams(
            dimension_semantics=("parallel", "arbitrary"),
            vmem_limit_bytes=32 * 1024 * 1024),
    )(obs, w1, b1, w2, b2, w3, b3, w4, b4, w5, b5, w6p, b6p)

    return out[:, :out_dims]


def _xavier_uniform_relu(key, din, dout):
    # matches nn.init.xavier_uniform_ with gain=calculate_gain('relu')=sqrt(2)
    gain = float(np.sqrt(2.0))
    bound = gain * float(np.sqrt(6.0 / (din + dout)))
    return jax.random.uniform(key, (din, dout), jnp.float32, -bound, bound)


def init_params(key, out_dims):
    dims = [(3, 64), (64, 256), (256, 1024), (1024, 512), (512, 256), (256, out_dims)]
    names = ["conv1", "conv2", "conv3", "fc1", "fc2", "fc3"]
    out_pad = max(128, ((out_dims + 127) // 128) * 128)
    params = {"out_dims": out_dims}
    keys = jax.random.split(key, len(dims))
    for k, name, (din, dout) in zip(keys, names, dims):
        w = _xavier_uniform_relu(k, din, dout)
        b = jnp.zeros((1, dout), jnp.float32)          # bias fill 0.0 (conv & fc)
        if name == "fc3":
            # Hoisted lane-dense padding: zero weight columns up to a multiple of 128
            # so the kernel's output store is an unmasked (nb, 128) block.
            w = jnp.zeros((din, out_pad), jnp.float32).at[:, :dout].set(w)
            b = jnp.zeros((1, out_pad), jnp.float32)
        if name != "conv1":
            # bf16 weights: halve HBM traffic, native MXU rate on v6e/v7x.
            w = w.astype(jnp.bfloat16)
        params[name] = (w, b)
    return params


def _reference(obs, params):
    # Pure-JAX reference mirroring the kernel's exact op/precision sequence:
    # conv1 as explicit f32 broadcast FMAs, every other matmul with bf16 operands and
    # f32 accumulation, f32 bias/ReLU/max.
    bf16, f32 = jnp.bfloat16, jnp.float32
    (w1, b1), (w2, b2), (w3, b3) = params["conv1"], params["conv2"], params["conv3"]
    (w4, b4), (w5, b5), (w6, b6) = params["fc1"], params["fc2"], params["fc3"]
    h = (obs[..., 0:1] * w1[0:1, :]
         + obs[..., 1:2] * w1[1:2, :]
         + obs[..., 2:3] * w1[2:3, :]
         + b1)
    h = jnp.maximum(h, 0.0)
    h = jnp.maximum(jnp.dot(h.astype(bf16), w2, preferred_element_type=f32) + b2, 0.0)
    h = jnp.dot(h.astype(bf16), w3, preferred_element_type=f32) + b3
    feat = jnp.max(h, axis=1)                          # [B, 1024]
    f = jnp.maximum(jnp.dot(feat.astype(bf16), w4, preferred_element_type=f32) + b4, 0.0)
    f = jnp.maximum(jnp.dot(f.astype(bf16), w5, preferred_element_type=f32) + b5, 0.0)
    f = jnp.dot(f.astype(bf16), w6, preferred_element_type=f32) + b6
    return f[:, :params["out_dims"]]


if __name__ == "__main__":
    # B=32 clouds of L=16 points, out_dims=6.
    # _choose_tiles -> nb=16, l_tile=16 -> grid=(2, 1): 256 rows/step, both v7x TCs used.
    B, L, out_dims = 32, 16, 6
    key = jax.random.PRNGKey(0)
    k_obs, k_par = jax.random.split(key)
    obs = jax.random.normal(k_obs, (B, L, 3), jnp.float32)   # [B, L, 3] (PyTorch input layout)
    params = init_params(k_par, out_dims)

    out = jax.block_until_ready(locnet_reg_kitti(obs, params))
    ref = jax.block_until_ready(_reference(obs, params))

    assert out.shape == (B, out_dims)
    # Kernel and reference run the identical precision pipeline; remaining differences
    # are f32 accumulation-order noise in the MXU matmuls.
    np.testing.assert_allclose(np.asarray(out), np.asarray(ref), rtol=5e-3, atol=5e-3)

    print("KERNEL_OK")
</pallas_src>

<mosaic_0001>
module attributes {stable_mosaic.version = 11 : i64} {
  func.func @_locnet_kernel(%arg0: i32, %arg1: i32, %arg2: memref<16x16x3xf32, #tpu.memory_space<vmem>>, %arg3: memref<3x64xf32, #tpu.memory_space<vmem>>, %arg4: memref<1x64xf32, #tpu.memory_space<vmem>>, %arg5: memref<64x256xbf16, #tpu.memory_space<vmem>>, %arg6: memref<1x256xf32, #tpu.memory_space<vmem>>, %arg7: memref<256x1024xbf16, #tpu.memory_space<vmem>>, %arg8: memref<1x1024xf32, #tpu.memory_space<vmem>>, %arg9: memref<1024x512xbf16, #tpu.memory_space<vmem>>, %arg10: memref<1x512xf32, #tpu.memory_space<vmem>>, %arg11: memref<512x256xbf16, #tpu.memory_space<vmem>>, %arg12: memref<1x256xf32, #tpu.memory_space<vmem>>, %arg13: memref<256x128xbf16, #tpu.memory_space<vmem>>, %arg14: memref<1x128xf32, #tpu.memory_space<vmem>>, %arg15: memref<16x128xf32, #tpu.memory_space<vmem>>, %arg16: memref<16x1024xf32, #tpu.memory_space<vmem>>) attributes {dimension_semantics = [#tpu.dimension_semantics<parallel>, #tpu.dimension_semantics<arbitrary>], iteration_bounds = array<i64: 2, 1>, scalar_prefetch = 0 : i64, scratch_operands = 1 : i64, tpu.core_type = #tpu.core_type<tc>, window_params = [{transform_indices = @transform_0, window_bounds = array<i64: 16, 16, 3>}, {pipeline_mode = #tpu.pipeline_mode<synchronous>, transform_indices = @transform_1, window_bounds = array<i64: 3, 64>}, {pipeline_mode = #tpu.pipeline_mode<synchronous>, transform_indices = @transform_2, window_bounds = array<i64: 1, 64>}, {pipeline_mode = #tpu.pipeline_mode<synchronous>, transform_indices = @transform_3, window_bounds = array<i64: 64, 256>}, {pipeline_mode = #tpu.pipeline_mode<synchronous>, transform_indices = @transform_4, window_bounds = array<i64: 1, 256>}, {pipeline_mode = #tpu.pipeline_mode<synchronous>, transform_indices = @transform_5, window_bounds = array<i64: 256, 1024>}, {pipeline_mode = #tpu.pipeline_mode<synchronous>, transform_indices = @transform_6, window_bounds = array<i64: 1, 1024>}, {pipeline_mode = #tpu.pipeline_mode<synchronous>, transform_indices = @transform_7, window_bounds = array<i64: 1024, 512>}, {pipeline_mode = #tpu.pipeline_mode<synchronous>, transform_indices = @transform_8, window_bounds = array<i64: 1, 512>}, {pipeline_mode = #tpu.pipeline_mode<synchronous>, transform_indices = @transform_9, window_bounds = array<i64: 512, 256>}, {pipeline_mode = #tpu.pipeline_mode<synchronous>, transform_indices = @transform_10, window_bounds = array<i64: 1, 256>}, {pipeline_mode = #tpu.pipeline_mode<synchronous>, transform_indices = @transform_11, window_bounds = array<i64: 256, 128>}, {pipeline_mode = #tpu.pipeline_mode<synchronous>, transform_indices = @transform_12, window_bounds = array<i64: 1, 128>}, {transform_indices = @transform_13, window_bounds = array<i64: 16, 128>}]} {
    %c0_i32 = arith.constant 0 : i32
    %0 = arith.cmpi eq, %arg1, %c0_i32 : i32
    %1 = arith.extui %0 : i1 to i32
    %c0_i32_0 = arith.constant 0 : i32
    %2 = arith.cmpi ne, %1, %c0_i32_0 : i32
    scf.if %2 {
      %cst_25 = arith.constant 0xFF800000 : f32
      %50 = vector.broadcast %cst_25 : f32 to vector<16x1024xf32>
      %c0_26 = arith.constant 0 : index
      %c0_27 = arith.constant 0 : index
      %51 = vector.load %arg16[%c0_26, %c0_27] : memref<16x1024xf32, #tpu.memory_space<vmem>>, vector<16x1024xf32>
      tpu.vector_store %arg16[%c0_26, %c0_27], %50 {strides = array<i32>} : memref<16x1024xf32, #tpu.memory_space<vmem>>, vector<16x1024xf32>,
    } else {
    }
    %c0 = arith.constant 0 : index
    %c0_1 = arith.constant 0 : index
    %c0_2 = arith.constant 0 : index
    %3 = vector.load %arg2[%c0, %c0_1, %c0_2] : memref<16x16x3xf32, #tpu.memory_space<vmem>>, vector<16x16x3xf32>
    %4 = vector.shape_cast %3 : vector<16x16x3xf32> to vector<256x3xf32>
    %c0_3 = arith.constant 0 : index
    %c0_4 = arith.constant 0 : index
    %5 = vector.load %arg3[%c0_3, %c0_4] : memref<3x64xf32, #tpu.memory_space<vmem>>, vector<3x64xf32>
    %6 = vector.extract_strided_slice %4 {offsets = [0, 0], sizes = [256, 1], strides = [1, 1]} : vector<256x3xf32> to vector<256x1xf32>
    %7 = vector.extract_strided_slice %5 {offsets = [0, 0], sizes = [1, 64], strides = [1, 1]} : vector<3x64xf32> to vector<1x64xf32>
    %8 = vector.broadcast %6 : vector<256x1xf32> to vector<256x64xf32>
    %9 = vector.broadcast %7 : vector<1x64xf32> to vector<256x64xf32>
    %10 = arith.mulf %8, %9 : vector<256x64xf32>
    %11 = vector.extract_strided_slice %4 {offsets = [0, 1], sizes = [256, 1], strides = [1, 1]} : vector<256x3xf32> to vector<256x1xf32>
    %12 = vector.extract_strided_slice %5 {offsets = [1, 0], sizes = [1, 64], strides = [1, 1]} : vector<3x64xf32> to vector<1x64xf32>
    %13 = vector.broadcast %11 : vector<256x1xf32> to vector<256x64xf32>
    %14 = vector.broadcast %12 : vector<1x64xf32> to vector<256x64xf32>
    %15 = arith.mulf %13, %14 : vector<256x64xf32>
    %16 = arith.addf %10, %15 : vector<256x64xf32>
    %17 = vector.extract_strided_slice %4 {offsets = [0, 2], sizes = [256, 1], strides = [1, 1]} : vector<256x3xf32> to vector<256x1xf32>
    %18 = vector.extract_strided_slice %5 {offsets = [2, 0], sizes = [1, 64], strides = [1, 1]} : vector<3x64xf32> to vector<1x64xf32>
    %19 = vector.broadcast %17 : vector<256x1xf32> to vector<256x64xf32>
    %20 = vector.broadcast %18 : vector<1x64xf32> to vector<256x64xf32>
    %21 = arith.mulf %19, %20 : vector<256x64xf32>
    %22 = arith.addf %16, %21 : vector<256x64xf32>
    %c0_5 = arith.constant 0 : index
    %c0_6 = arith.constant 0 : index
    %23 = vector.load %arg4[%c0_5, %c0_6] : memref<1x64xf32, #tpu.memory_space<vmem>>, vector<1x64xf32>
    %24 = vector.broadcast %23 : vector<1x64xf32> to vector<256x64xf32>
    %25 = arith.addf %22, %24 : vector<256x64xf32>
    %cst = arith.constant 0.000000e+00 : f32
    %26 = vector.broadcast %cst : f32 to vector<256x64xf32>
    %27 = arith.maximumf %25, %26 : vector<256x64xf32>
    %28 = arith.truncf %27 : vector<256x64xf32> to vector<256x64xbf16>
    %c0_7 = arith.constant 0 : index
    %c0_8 = arith.constant 0 : index
    %29 = vector.load %arg5[%c0_7, %c0_8] : memref<64x256xbf16, #tpu.memory_space<vmem>>, vector<64x256xbf16>
    %cst_9 = arith.constant dense<0.000000e+00> : vector<256x256xf32>
    %30 = tpu.matmul %28, %29, %cst_9 {dimension_numbers = #tpu.dot_dimension_numbers<[1], [0], [0], [1], [0, 0, 1, 1], [], []>} : vector<256x64xbf16>, vector<64x256xbf16>, vector<256x256xf32> -> vector<256x256xf32>
    %c0_10 = arith.constant 0 : index
    %c0_11 = arith.constant 0 : index
    %31 = vector.load %arg6[%c0_10, %c0_11] : memref<1x256xf32, #tpu.memory_space<vmem>>, vector<1x256xf32>
    %32 = vector.broadcast %31 : vector<1x256xf32> to vector<256x256xf32>
    %33 = arith.addf %30, %32 : vector<256x256xf32>
    %cst_12 = arith.constant 0.000000e+00 : f32
    %34 = vector.broadcast %cst_12 : f32 to vector<256x256xf32>
    %35 = arith.maximumf %33, %34 : vector<256x256xf32>
    %36 = arith.truncf %35 : vector<256x256xf32> to vector<256x256xbf16>
    %c0_13 = arith.constant 0 : index
    %c0_14 = arith.constant 0 : index
    %37 = vector.load %arg7[%c0_13, %c0_14] : memref<256x1024xbf16, #tpu.memory_space<vmem>>, vector<256x1024xbf16>
    %cst_15 = arith.constant dense<0.000000e+00> : vector<256x1024xf32>
    %38 = tpu.matmul %36, %37, %cst_15 {dimension_numbers = #tpu.dot_dimension_numbers<[1], [0], [0], [1], [0, 0, 1, 1], [], []>} : vector<256x256xbf16>, vector<256x1024xbf16>, vector<256x1024xf32> -> vector<256x1024xf32>
    %c0_16 = arith.constant 0 : index
    %c0_17 = arith.constant 0 : index
    %39 = vector.load %arg8[%c0_16, %c0_17] : memref<1x1024xf32, #tpu.memory_space<vmem>>, vector<1x1024xf32>
    %40 = vector.broadcast %39 : vector<1x1024xf32> to vector<256x1024xf32>
    %41 = arith.addf %38, %40 : vector<256x1024xf32>
    %42 = vector.shape_cast %41 : vector<256x1024xf32> to vector<16x16x1024xf32>
    %cst_18 = arith.constant dense<0xFF800000> : vector<16x1024xf32>
    %43 = vector.multi_reduction <maximumf>, %42, %cst_18 [1] : vector<16x16x1024xf32> to vector<16x1024xf32>
    %c0_19 = arith.constant 0 : index
    %c0_20 = arith.constant 0 : index
    %44 = vector.load %arg16[%c0_19, %c0_20] : memref<16x1024xf32, #tpu.memory_space<vmem>>, vector<16x1024xf32>
    %45 = arith.maximumf %44, %43 : vector<16x1024xf32>
    %c0_21 = arith.constant 0 : index
    %c0_22 = arith.constant 0 : index
    %46 = vector.load %arg16[%c0_21, %c0_22] : memref<16x1024xf32, #tpu.memory_space<vmem>>, vector<16x1024xf32>
    tpu.vector_store %arg16[%c0_21, %c0_22], %45 {strides = array<i32>} : memref<16x1024xf32, #tpu.memory_space<vmem>>, vector<16x1024xf32>,
    %c0_i32_23 = arith.constant 0 : i32
    %47 = arith.cmpi eq, %arg1, %c0_i32_23 : i32
    %48 = arith.extui %47 : i1 to i32
    %c0_i32_24 = arith.constant 0 : i32
    %49 = arith.cmpi ne, %48, %c0_i32_24 : i32
    scf.if %49 {
      %c0_25 = arith.constant 0 : index
      %c0_26 = arith.constant 0 : index
      %50 = vector.load %arg16[%c0_25, %c0_26] : memref<16x1024xf32, #tpu.memory_space<vmem>>, vector<16x1024xf32>
      %51 = arith.truncf %50 : vector<16x1024xf32> to vector<16x1024xbf16>
      %c0_27 = arith.constant 0 : index
      %c0_28 = arith.constant 0 : index
      %52 = vector.load %arg9[%c0_27, %c0_28] : memref<1024x512xbf16, #tpu.memory_space<vmem>>, vector<1024x512xbf16>
      %cst_29 = arith.constant dense<0.000000e+00> : vector<16x512xf32>
      %53 = tpu.matmul %51, %52, %cst_29 {dimension_numbers = #tpu.dot_dimension_numbers<[1], [0], [0], [1], [0, 0, 1, 1], [], []>} : vector<16x1024xbf16>, vector<1024x512xbf16>, vector<16x512xf32> -> vector<16x512xf32>
      %c0_30 = arith.constant 0 : index
      %c0_31 = arith.constant 0 : index
      %54 = vector.load %arg10[%c0_30, %c0_31] : memref<1x512xf32, #tpu.memory_space<vmem>>, vector<1x512xf32>
      %55 = vector.broadcast %54 : vector<1x512xf32> to vector<16x512xf32>
      %56 = arith.addf %53, %55 : vector<16x512xf32>
      %cst_32 = arith.constant 0.000000e+00 : f32
      %57 = vector.broadcast %cst_32 : f32 to vector<16x512xf32>
      %58 = arith.maximumf %56, %57 : vector<16x512xf32>
      %59 = arith.truncf %58 : vector<16x512xf32> to vector<16x512xbf16>
      %c0_33 = arith.constant 0 : index
      %c0_34 = arith.constant 0 : index
      %60 = vector.load %arg11[%c0_33, %c0_34] : memref<512x256xbf16, #tpu.memory_space<vmem>>, vector<512x256xbf16>
      %cst_35 = arith.constant dense<0.000000e+00> : vector<16x256xf32>
      %61 = tpu.matmul %59, %60, %cst_35 {dimension_numbers = #tpu.dot_dimension_numbers<[1], [0], [0], [1], [0, 0, 1, 1], [], []>} : vector<16x512xbf16>, vector<512x256xbf16>, vector<16x256xf32> -> vector<16x256xf32>
      %c0_36 = arith.constant 0 : index
      %c0_37 = arith.constant 0 : index
      %62 = vector.load %arg12[%c0_36, %c0_37] : memref<1x256xf32, #tpu.memory_space<vmem>>, vector<1x256xf32>
      %63 = vector.broadcast %62 : vector<1x256xf32> to vector<16x256xf32>
      %64 = arith.addf %61, %63 : vector<16x256xf32>
      %cst_38 = arith.constant 0.000000e+00 : f32
      %65 = vector.broadcast %cst_38 : f32 to vector<16x256xf32>
      %66 = arith.maximumf %64, %65 : vector<16x256xf32>
      %67 = arith.truncf %66 : vector<16x256xf32> to vector<16x256xbf16>
      %c0_39 = arith.constant 0 : index
      %c0_40 = arith.constant 0 : index
      %68 = vector.load %arg13[%c0_39, %c0_40] : memref<256x128xbf16, #tpu.memory_space<vmem>>, vector<256x128xbf16>
      %cst_41 = arith.constant dense<0.000000e+00> : vector<16x128xf32>
      %69 = tpu.matmul %67, %68, %cst_41 {dimension_numbers = #tpu.dot_dimension_numbers<[1], [0], [0], [1], [0, 0, 1, 1], [], []>} : vector<16x256xbf16>, vector<256x128xbf16>, vector<16x128xf32> -> vector<16x128xf32>
      %c0_42 = arith.constant 0 : index
      %c0_43 = arith.constant 0 : index
      %70 = vector.load %arg14[%c0_42, %c0_43] : memref<1x128xf32, #tpu.memory_space<vmem>>, vector<1x128xf32>
      %71 = vector.broadcast %70 : vector<1x128xf32> to vector<16x128xf32>
      %72 = arith.addf %69, %71 : vector<16x128xf32>
      %c0_44 = arith.constant 0 : index
      %c0_45 = arith.constant 0 : index
      %73 = vector.load %arg15[%c0_44, %c0_45] : memref<16x128xf32, #tpu.memory_space<vmem>>, vector<16x128xf32>
      tpu.vector_store %arg15[%c0_44, %c0_45], %72 {strides = array<i32>} : memref<16x128xf32, #tpu.memory_space<vmem>>, vector<16x128xf32>,
    } else {
    }
    return
  }
  func.func @transform_0(%arg0: i32, %arg1: i32) -> (i32, i32, i32) {
    %c0_i32 = arith.constant 0 : i32
    %c0_i32_0 = arith.constant 0 : i32
    return %arg0, %arg1, %c0_i32 : i32, i32, i32
  }
  func.func @transform_1(%arg0: i32, %arg1: i32) -> (i32, i32) {
    %c0_i32 = arith.constant 0 : i32
    %c0_i32_0 = arith.constant 0 : i32
    %c0_i32_1 = arith.constant 0 : i32
    return %c0_i32, %c0_i32_0 : i32, i32
  }
  func.func @transform_2(%arg0: i32, %arg1: i32) -> (i32, i32) {
    %c0_i32 = arith.constant 0 : i32
    %c0_i32_0 = arith.constant 0 : i32
    %c0_i32_1 = arith.constant 0 : i32
    return %c0_i32, %c0_i32_0 : i32, i32
  }
  func.func @transform_3(%arg0: i32, %arg1: i32) -> (i32, i32) {
    %c0_i32 = arith.constant 0 : i32
    %c0_i32_0 = arith.constant 0 : i32
    %c0_i32_1 = arith.constant 0 : i32
    return %c0_i32, %c0_i32_0 : i32, i32
  }
  func.func @transform_4(%arg0: i32, %arg1: i32) -> (i32, i32) {
    %c0_i32 = arith.constant 0 : i32
    %c0_i32_0 = arith.constant 0 : i32
    %c0_i32_1 = arith.constant 0 : i32
    return %c0_i32, %c0_i32_0 : i32, i32
  }
  func.func @transform_5(%arg0: i32, %arg1: i32) -> (i32, i32) {
    %c0_i32 = arith.constant 0 : i32
    %c0_i32_0 = arith.constant 0 : i32
    %c0_i32_1 = arith.constant 0 : i32
    return %c0_i32, %c0_i32_0 : i32, i32
  }
  func.func @transform_6(%arg0: i32, %arg1: i32) -> (i32, i32) {
    %c0_i32 = arith.constant 0 : i32
    %c0_i32_0 = arith.constant 0 : i32
    %c0_i32_1 = arith.constant 0 : i32
    return %c0_i32, %c0_i32_0 : i32, i32
  }
  func.func @transform_7(%arg0: i32, %arg1: i32) -> (i32, i32) {
    %c0_i32 = arith.constant 0 : i32
    %c0_i32_0 = arith.constant 0 : i32
    %c0_i32_1 = arith.constant 0 : i32
    return %c0_i32, %c0_i32_0 : i32, i32
  }
  func.func @transform_8(%arg0: i32, %arg1: i32) -> (i32, i32) {
    %c0_i32 = arith.constant 0 : i32
    %c0_i32_0 = arith.constant 0 : i32
    %c0_i32_1 = arith.constant 0 : i32
    return %c0_i32, %c0_i32_0 : i32, i32
  }
  func.func @transform_9(%arg0: i32, %arg1: i32) -> (i32, i32) {
    %c0_i32 = arith.constant 0 : i32
    %c0_i32_0 = arith.constant 0 : i32
    %c0_i32_1 = arith.constant 0 : i32
    return %c0_i32, %c0_i32_0 : i32, i32
  }
  func.func @transform_10(%arg0: i32, %arg1: i32) -> (i32, i32) {
    %c0_i32 = arith.constant 0 : i32
    %c0_i32_0 = arith.constant 0 : i32
    %c0_i32_1 = arith.constant 0 : i32
    return %c0_i32, %c0_i32_0 : i32, i32
  }
  func.func @transform_11(%arg0: i32, %arg1: i32) -> (i32, i32) {
    %c0_i32 = arith.constant 0 : i32
    %c0_i32_0 = arith.constant 0 : i32
    %c0_i32_1 = arith.constant 0 : i32
    return %c0_i32, %c0_i32_0 : i32, i32
  }
  func.func @transform_12(%arg0: i32, %arg1: i32) -> (i32, i32) {
    %c0_i32 = arith.constant 0 : i32
    %c0_i32_0 = arith.constant 0 : i32
    %c0_i32_1 = arith.constant 0 : i32
    return %c0_i32, %c0_i32_0 : i32, i32
  }
  func.func @transform_13(%arg0: i32, %arg1: i32) -> (i32, i32) {
    %c0_i32 = arith.constant 0 : i32
    %c0_i32_0 = arith.constant 0 : i32
    return %arg0, %c0_i32 : i32, i32
  }
}

</mosaic_0001>

<llo_original>
// kernel: tpu_custom_call.1
$region0: #{tpu_custom_call.1}
  #allocation0 [shape = 'u32[]', space=smem, size = 0x4, offset = 0x4, fixed_abs, tag = 'smem constant byte address 0x4 - core index']
  #allocation1 [shape = 'u32[144,128]{1,0:T(1,128)}', space=vmem, size = 0x12000, scoped, tag = 'internal scratch']
  #allocation2 [shape = 'f32[16,1024]{1,0:T(8,128)}', space=vmem, size = 0x10000, scoped, tag = 'scratch operand']
  %s0 = inlined_call_operand.vmem [shape: f32[32,16,3], index: 0, kind: input, shape index: {}]
  %s1 = inlined_call_operand.hbm [shape: f32[3,64], index: 1, kind: input, shape index: {}]
  %s2 = inlined_call_operand.hbm [shape: f32[1,64], index: 2, kind: input, shape index: {}]
  %s3 = inlined_call_operand.vmem [shape: bf16[64,256], index: 3, kind: input, shape index: {}]
  %s4 = inlined_call_operand.hbm [shape: f32[1,256], index: 4, kind: input, shape index: {}]
  %s5 = inlined_call_operand.hbm [shape: bf16[256,1024], index: 5, kind: input, shape index: {}]
  %s6 = inlined_call_operand.hbm [shape: f32[1,1024], index: 6, kind: input, shape index: {}]
  %s7 = inlined_call_operand.hbm [shape: bf16[1024,512], index: 7, kind: input, shape index: {}]
  %s8 = inlined_call_operand.hbm [shape: f32[1,512], index: 8, kind: input, shape index: {}]
  %s9 = inlined_call_operand.vmem [shape: bf16[512,256], index: 9, kind: input, shape index: {}]
  %s10 = inlined_call_operand.hbm [shape: f32[1,256], index: 10, kind: input, shape index: {}]
  %s11 = inlined_call_operand.hbm [shape: bf16[256,128], index: 11, kind: input, shape index: {}]
  %s12 = inlined_call_operand.vmem [shape: f32[1,128], index: 12, kind: input, shape index: {}]
  %s13 = inlined_call_operand.hbm [shape: f32[32,128], index: 13, kind: output, shape index: {}]
  %s14 = sld [smem:[#allocation0]]
  $region129: #{tpu_custom_call.1} parent=0
    _
  %s16 = ssub.s32 1, %s14
  %s17 = scalar_select 0, %s16, %s14
  $region1: #{tpu_custom_call.1} parent=0
    #allocation3 [shape = 'u8[2048]{0}', space=vmem, size = 0x800, scoped, tag = 'input window, operand 1, single buffered']
    #allocation4 [shape = 's32[2]{0}', space=sflag, size = 0x8, scoped, tag = 'scoped memory for tpu_custom_call.1']
    #allocation5 [shape = 's32[2]{0}', space=sflag, size = 0x8, scoped, tag = 'scoped memory for tpu_custom_call.1']
    #allocation6 [shape = 'u8[512]{0}', space=vmem, size = 0x400, scoped, tag = 'input window, operand 2, single buffered']
    #allocation7 [shape = 's32[1]{0}', space=sflag, size = 0x4, scoped, tag = 'scoped memory for tpu_custom_call.1']
    #allocation8 [shape = 'u8[1024]{0}', space=vmem, size = 0x400, scoped, tag = 'input window, operand 4, single buffered']
    #allocation9 [shape = 'u8[524288]{0}', space=vmem, size = 0x80000, scoped, tag = 'input window, operand 5, single buffered']
    #allocation10 [shape = 's32[1]{0}', space=sflag, size = 0x4, scoped, tag = 'scoped memory for tpu_custom_call.1']
    #allocation11 [shape = 'u8[4096]{0}', space=vmem, size = 0x1000, scoped, tag = 'input window, operand 6, single buffered']
    #allocation12 [shape = 'u8[1048576]{0}', space=vmem, size = 0x100000, scoped, tag = 'input window, operand 7, single buffered']
    #allocation13 [shape = 's32[1]{0}', space=sflag, size = 0x4, scoped, tag = 'scoped memory for tpu_custom_call.1']
    #allocation14 [shape = 'u8[2048]{0}', space=vmem, size = 0x800, scoped, tag = 'input window, operand 8, single buffered']
    #allocation15 [shape = 'u8[1024]{0}', space=vmem, size = 0x400, scoped, tag = 'input window, operand 10, single buffered']
    #allocation16 [shape = 's32[1]{0}', space=sflag, size = 0x4, scoped, tag = 'scoped memory for tpu_custom_call.1']
    #allocation17 [shape = 'u8[65536]{0}', space=vmem, size = 0x10000, scoped, tag = 'input window, operand 11, single buffered']
    #allocation18 [shape = 'u8[16384]{0}', space=vmem, size = 0x4000, scoped, tag = 'output window, operand 0']
    %18 = vsyncpa [#allocation4], 0
    %19 = vsyncpa [#allocation7], 0
    %20 = vsyncpa [#allocation10], 0
    %21 = vsyncpa [#allocation13], 0
    %22 = vsyncpa [#allocation16], 0
    %23 = vsyncpa [#allocation5], 0
    %s24 = scalar_lea.sflag [#allocation5], 1
    %25 = vsyncpa %s24, 0
    loop: start=0, step=1, limit=4
    $region2: #{tpu_custom_call.1} parent=1 // loop_pre_header
      _
    $region3: #{tpu_custom_call.1} parent=1 // loop_header
      %s27 = sphi 0, %s31
      %p28 = scmp.ge.s32.totalorder %s27, 4
      %s34 = sphi 0, %s46
      %s35 = sphi 0, %s42
      %s36 = sphi 0, %s34
      %s37 = sphi 0, %s35
      %s38 = sphi 0, %s36
      %s39 = sphi 0, %s37
      %s51 = sphi 0, %s53
      %s54 = sphi 0, %s51
      %s55 = sphi 0, %s54
      %s71 = sphi 0, %s55
      %s75 = sphi 0, %s75
      %s77 = sphi 0, %s75
      %s78 = sphi 0, %s77
      %s92 = sphi 0, %s78
      %s96 = sphi 0, %s96
      %s98 = sphi 0, %s96
      %s99 = sphi 0, %s98
      %s113 = sphi 0, %s99
      %s117 = sphi 0, %s117
      %s119 = sphi 0, %s117
      %s120 = sphi 0, %s119
      %s134 = sphi 0, %s120
      %s138 = sphi 0, %s138
      %s140 = sphi 0, %s138
      %s141 = sphi 0, %s140
      %s155 = sphi 0, %s141
      %s159 = sphi 0, %s159
      %s161 = sphi 0, %s159
      %s162 = sphi 0, %s161
      %s176 = sphi 0, %s162
      %s180 = sphi 0, %s180
      %s182 = sphi 0, %s180
      %s183 = sphi 0, %s182
      %s197 = sphi 0, %s183
      %s201 = sphi 0, %s201
      %s203 = sphi 0, %s201
      %s204 = sphi 0, %s203
      %s218 = sphi 0, %s204
      %s222 = sphi 0, %s222
      %s224 = sphi 0, %s222
      %s225 = sphi 0, %s224
      %s239 = sphi 0, %s225
      %s243 = sphi 0, %s243
      %s245 = sphi 0, %s243
      %s246 = sphi 0, %s245
      %s260 = sphi 0, %s246
      %s264 = sphi 0, %s264
      %s266 = sphi 0, %s264
      %s267 = sphi 0, %s266
      %s281 = sphi 0, %s267
      %s285 = sphi 0, %s285
      %s287 = sphi 0, %s285
      %s288 = sphi 0, %s287
      %s302 = sphi 0, %s288
      %s306 = sphi 0, %s306
      %s308 = sphi 0, %s306
      %s309 = sphi 0, %s308
      %s323 = sphi 0, %s309
      %s329 = sphi 0, %s331
      %s332 = sphi 0, %s329
      %s333 = sphi 0, %s332
      %s349 = sphi 0, %s333
    $region4: #{tpu_custom_call.1} parent=1 // loop_header_branch
      %30 = sbr.rel (%p28) target = $region8
    $region5: #{tpu_custom_call.1} parent=1 // loop_body
      %s32 = ssub.s32 %s27, 1
      %s33 = ssub.s32 %s27, 2
      %s40 = sadd.s32 1, %s35
      %p41 = scmp.ge.s32.totalorder %s40, 1
      %s42 = scalar_select %p41, 0, %s40
      %s43 = sadd.s32 1, %s34
      %s44 = scalar_select %p41, %s43, %s34
      %p45 = scmp.ge.s32.totalorder %s44, 2
      %s46 = scalar_select %p45, 0, %s44
      %s47 = ssub.s32 %s34, %s46
      %s48 = ssub.s32 %s35, %s42
      %s49 = sor.u32 %s47, %s48
      %p50 = scmp.eq.s32.totalorder %s49, 0
      %s52 = sadd.s32 %s51, 1
      %s53 = scalar_select %p50, %s51, %s52
      %p56 = pneg %p50
      %p57 = scmp.eq.s32.totalorder %s27, 1
      %p58 = por %p56, %p57
      %p59 = scmp.ne.s32.totalorder %s51, %s54
      %p60 = scmp.eq.s32.totalorder %s27, 0
      %p61 = por %p59, %p60
      %p62 = scmp.ne.s32.totalorder %s51, %s54
      %p63 = scmp.eq.s32.totalorder %s32, 1
      %p64 = por %p62, %p63
      %p65 = scmp.ne.s32.totalorder %s54, %s55
      %p66 = scmp.eq.s32.totalorder %s32, 0
      %p67 = por %p65, %p66
      %p68 = scmp.ne.s32.totalorder %s54, %s55
      %p69 = scmp.eq.s32.totalorder %s33, 1
      %p70 = por %p68, %p69
      %p72 = scmp.ne.s32.totalorder %s55, %s71
      %p73 = scmp.eq.s32.totalorder %s33, 0
      %p74 = por %p72, %p73
      %s76 = sadd.s32 %s75, 1
      %p79 = scmp.eq.s32.totalorder %s27, 1
      %p80 = scmp.ne.s32.totalorder %s75, %s77
      %p81 = scmp.eq.s32.totalorder %s27, 0
      %p82 = por %p80, %p81
      %p83 = scmp.ne.s32.totalorder %s75, %s77
      %p84 = scmp.eq.s32.totalorder %s32, 1
      %p85 = por %p83, %p84
      %p86 = scmp.ne.s32.totalorder %s77, %s78
      %p87 = scmp.eq.s32.totalorder %s32, 0
      %p88 = por %p86, %p87
      %p89 = scmp.ne.s32.totalorder %s77, %s78
      %p90 = scmp.eq.s32.totalorder %s33, 1
      %p91 = por %p89, %p90
      %p93 = scmp.ne.s32.totalorder %s78, %s92
      %p94 = scmp.eq.s32.totalorder %s33, 0
      %p95 = por %p93, %p94
      %s97 = sadd.s32 %s96, 1
      %p100 = scmp.eq.s32.totalorder %s27, 1
      %p101 = scmp.ne.s32.totalorder %s96, %s98
      %p102 = scmp.eq.s32.totalorder %s27, 0
      %p103 = por %p101, %p102
      %p104 = scmp.ne.s32.totalorder %s96, %s98
      %p105 = scmp.eq.s32.totalorder %s32, 1
      %p106 = por %p104, %p105
      %p107 = scmp.ne.s32.totalorder %s98, %s99
      %p108 = scmp.eq.s32.totalorder %s32, 0
      %p109 = por %p107, %p108
      %p110 = scmp.ne.s32.totalorder %s98, %s99
      %p111 = scmp.eq.s32.totalorder %s33, 1
      %p112 = por %p110, %p111
      %p114 = scmp.ne.s32.totalorder %s99, %s113
      %p115 = scmp.eq.s32.totalorder %s33, 0
      %p116 = por %p114, %p115
      %s118 = sadd.s32 %s117, 1
      %p121 = scmp.eq.s32.totalorder %s27, 1
      %p122 = scmp.ne.s32.totalorder %s117, %s119
      %p123 = scmp.eq.s32.totalorder %s27, 0
      %p124 = por %p122, %p123
      %p125 = scmp.ne.s32.totalorder %s117, %s119
      %p126 = scmp.eq.s32.totalorder %s32, 1
      %p127 = por %p125, %p126
      %p128 = scmp.ne.s32.totalorder %s119, %s120
      %p129 = scmp.eq.s32.totalorder %s32, 0
      %p130 = por %p128, %p129
      %p131 = scmp.ne.s32.totalorder %s119, %s120
      %p132 = scmp.eq.s32.totalorder %s33, 1
      %p133 = por %p131, %p132
      %p135 = scmp.ne.s32.totalorder %s120, %s134
      %p136 = scmp.eq.s32.totalorder %s33, 0
      %p137 = por %p135, %p136
      %s139 = sadd.s32 %s138, 1
      %p142 = scmp.eq.s32.totalorder %s27, 1
      %p143 = scmp.ne.s32.totalorder %s138, %s140
      %p144 = scmp.eq.s32.totalorder %s27, 0
      %p145 = por %p143, %p144
      %p146 = scmp.ne.s32.totalorder %s138, %s140
      %p147 = scmp.eq.s32.totalorder %s32, 1
      %p148 = por %p146, %p147
      %p149 = scmp.ne.s32.totalorder %s140, %s141
      %p150 = scmp.eq.s32.totalorder %s32, 0
      %p151 = por %p149, %p150
      %p152 = scmp.ne.s32.totalorder %s140, %s141
      %p153 = scmp.eq.s32.totalorder %s33, 1
      %p154 = por %p152, %p153
      %p156 = scmp.ne.s32.totalorder %s141, %s155
      %p157 = scmp.eq.s32.totalorder %s33, 0
      %p158 = por %p156, %p157
      %s160 = sadd.s32 %s159, 1
      %p163 = scmp.eq.s32.totalorder %s27, 1
      %p164 = scmp.ne.s32.totalorder %s159, %s161
      %p165 = scmp.eq.s32.totalorder %s27, 0
      %p166 = por %p164, %p165
      %p167 = scmp.ne.s32.totalorder %s159, %s161
      %p168 = scmp.eq.s32.totalorder %s32, 1
      %p169 = por %p167, %p168
      %p170 = scmp.ne.s32.totalorder %s161, %s162
      %p171 = scmp.eq.s32.totalorder %s32, 0
      %p172 = por %p170, %p171
      %p173 = scmp.ne.s32.totalorder %s161, %s162
      %p174 = scmp.eq.s32.totalorder %s33, 1
      %p175 = por %p173, %p174
      %p177 = scmp.ne.s32.totalorder %s162, %s176
      %p178 = scmp.eq.s32.totalorder %s33, 0
      %p179 = por %p177, %p178
      %s181 = sadd.s32 %s180, 1
      %p184 = scmp.eq.s32.totalorder %s27, 1
      %p185 = scmp.ne.s32.totalorder %s180, %s182
      %p186 = scmp.eq.s32.totalorder %s27, 0
      %p187 = por %p185, %p186
      %p188 = scmp.ne.s32.totalorder %s180, %s182
      %p189 = scmp.eq.s32.totalorder %s32, 1
      %p190 = por %p188, %p189
      %p191 = scmp.ne.s32.totalorder %s182, %s183
      %p192 = scmp.eq.s32.totalorder %s32, 0
      %p193 = por %p191, %p192
      %p194 = scmp.ne.s32.totalorder %s182, %s183
      %p195 = scmp.eq.s32.totalorder %s33, 1
      %p196 = por %p194, %p195
      %p198 = scmp.ne.s32.totalorder %s183, %s197
      %p199 = scmp.eq.s32.totalorder %s33, 0
      %p200 = por %p198, %p199
      %s202 = sadd.s32 %s201, 1
      %p205 = scmp.eq.s32.totalorder %s27, 1
      %p206 = scmp.ne.s32.totalorder %s201, %s203
      %p207 = scmp.eq.s32.totalorder %s27, 0
      %p208 = por %p206, %p207
      %p209 = scmp.ne.s32.totalorder %s201, %s203
      %p210 = scmp.eq.s32.totalorder %s32, 1
      %p211 = por %p209, %p210
      %p212 = scmp.ne.s32.totalorder %s203, %s204
      %p213 = scmp.eq.s32.totalorder %s32, 0
      %p214 = por %p212, %p213
      %p215 = scmp.ne.s32.totalorder %s203, %s204
      %p216 = scmp.eq.s32.totalorder %s33, 1
      %p217 = por %p215, %p216
      %p219 = scmp.ne.s32.totalorder %s204, %s218
      %p220 = scmp.eq.s32.totalorder %s33, 0
      %p221 = por %p219, %p220
      %s223 = sadd.s32 %s222, 1
      %p226 = scmp.eq.s32.totalorder %s27, 1
      %p227 = scmp.ne.s32.totalorder %s222, %s224
      %p228 = scmp.eq.s32.totalorder %s27, 0
      %p229 = por %p227, %p228
      %p230 = scmp.ne.s32.totalorder %s222, %s224
      %p231 = scmp.eq.s32.totalorder %s32, 1
      %p232 = por %p230, %p231
      %p233 = scmp.ne.s32.totalorder %s224, %s225
      %p234 = scmp.eq.s32.totalorder %s32, 0
      %p235 = por %p233, %p234
      %p236 = scmp.ne.s32.totalorder %s224, %s225
      %p237 = scmp.eq.s32.totalorder %s33, 1
      %p238 = por %p236, %p237
      %p240 = scmp.ne.s32.totalorder %s225, %s239
      %p241 = scmp.eq.s32.totalorder %s33, 0
      %p242 = por %p240, %p241
      %s244 = sadd.s32 %s243, 1
      %p247 = scmp.eq.s32.totalorder %s27, 1
      %p248 = scmp.ne.s32.totalorder %s243, %s245
      %p249 = scmp.eq.s32.totalorder %s27, 0
      %p250 = por %p248, %p249
      %p251 = scmp.ne.s32.totalorder %s243, %s245
      %p252 = scmp.eq.s32.totalorder %s32, 1
      %p253 = por %p251, %p252
      %p254 = scmp.ne.s32.totalorder %s245, %s246
      %p255 = scmp.eq.s32.totalorder %s32, 0
      %p256 = por %p254, %p255
      %p257 = scmp.ne.s32.totalorder %s245, %s246
      %p258 = scmp.eq.s32.totalorder %s33, 1
      %p259 = por %p257, %p258
      %p261 = scmp.ne.s32.totalorder %s246, %s260
      %p262 = scmp.eq.s32.totalorder %s33, 0
      %p263 = por %p261, %p262
      %s265 = sadd.s32 %s264, 1
      %p268 = scmp.eq.s32.totalorder %s27, 1
      %p269 = scmp.ne.s32.totalorder %s264, %s266
      %p270 = scmp.eq.s32.totalorder %s27, 0
      %p271 = por %p269, %p270
      %p272 = scmp.ne.s32.totalorder %s264, %s266
      %p273 = scmp.eq.s32.totalorder %s32, 1
      %p274 = por %p272, %p273
      %p275 = scmp.ne.s32.totalorder %s266, %s267
      %p276 = scmp.eq.s32.totalorder %s32, 0
      %p277 = por %p275, %p276
      %p278 = scmp.ne.s32.totalorder %s266, %s267
      %p279 = scmp.eq.s32.totalorder %s33, 1
      %p280 = por %p278, %p279
      %p282 = scmp.ne.s32.totalorder %s267, %s281
      %p283 = scmp.eq.s32.totalorder %s33, 0
      %p284 = por %p282, %p283
      %s286 = sadd.s32 %s285, 1
      %p289 = scmp.eq.s32.totalorder %s27, 1
      %p290 = scmp.ne.s32.totalorder %s285, %s287
      %p291 = scmp.eq.s32.totalorder %s27, 0
      %p292 = por %p290, %p291
      %p293 = scmp.ne.s32.totalorder %s285, %s287
      %p294 = scmp.eq.s32.totalorder %s32, 1
      %p295 = por %p293, %p294
      %p296 = scmp.ne.s32.totalorder %s287, %s288
      %p297 = scmp.eq.s32.totalorder %s32, 0
      %p298 = por %p296, %p297
      %p299 = scmp.ne.s32.totalorder %s287, %s288
      %p300 = scmp.eq.s32.totalorder %s33, 1
      %p301 = por %p299, %p300
      %p303 = scmp.ne.s32.totalorder %s288, %s302
      %p304 = scmp.eq.s32.totalorder %s33, 0
      %p305 = por %p303, %p304
      %s307 = sadd.s32 %s306, 1
      %p310 = scmp.eq.s32.totalorder %s27, 1
      %p311 = scmp.ne.s32.totalorder %s306, %s308
      %p312 = scmp.eq.s32.totalorder %s27, 0
      %p313 = por %p311, %p312
      %p314 = scmp.ne.s32.totalorder %s306, %s308
      %p315 = scmp.eq.s32.totalorder %s32, 1
      %p316 = por %p314, %p315
      %p317 = scmp.ne.s32.totalorder %s308, %s309
      %p318 = scmp.eq.s32.totalorder %s32, 0
      %p319 = por %p317, %p318
      %p320 = scmp.ne.s32.totalorder %s308, %s309
      %p321 = scmp.eq.s32.totalorder %s33, 1
      %p322 = por %p320, %p321
      %p324 = scmp.ne.s32.totalorder %s309, %s323
      %p325 = scmp.eq.s32.totalorder %s33, 0
      %p326 = por %p324, %p325
      %s327 = ssub.s32 %s34, %s46
      %p328 = scmp.eq.s32.totalorder %s327, 0
      %s330 = sadd.s32 %s329, 1
      %s331 = scalar_select %p328, %s329, %s330
      %p334 = pneg %p328
      %p335 = scmp.eq.s32.totalorder %s27, 1
      %p336 = por %p334, %p335
      %p337 = scmp.ne.s32.totalorder %s329, %s332
      %p338 = scmp.eq.s32.totalorder %s27, 0
      %p339 = por %p337, %p338
      %p340 = scmp.ne.s32.totalorder %s329, %s332
      %p341 = scmp.eq.s32.totalorder %s32, 1
      %p342 = por %p340, %p341
      %p343 = scmp.ne.s32.totalorder %s332, %s333
      %p344 = scmp.eq.s32.totalorder %s32, 0
      %p345 = por %p343, %p344
      %p346 = scmp.ne.s32.totalorder %s332, %s333
      %p347 = scmp.eq.s32.totalorder %s33, 1
      %p348 = por %p346, %p347
      %p350 = scmp.ne.s32.totalorder %s333, %s349
      %p351 = scmp.eq.s32.totalorder %s33, 0
      %p352 = por %p350, %p351
      %p353 = scmp.le.s32.totalorder 1, %s27
      %p354 = scmp.lt.s32.totalorder %s27, 3
      %p355 = pnand %p353, %p354
      %p356 = pneg %p355
      // Predicated region
      $region9: #{tpu_custom_call.1} parent=5 // pred_check
        _
      $region10: #{tpu_custom_call.1} parent=5 // pred_check_branch
        %358 = sbr.rel (%p355) target = $region12
      $region11: #{tpu_custom_call.1} parent=5 // pred_region
        %s359 = ssub.s32 %s27, 1
        // Predicated region
        $region13: #{tpu_custom_call.1} parent=11 // pred_check
          %p360 = pneg %p88
        $region14: #{tpu_custom_call.1} parent=11 // pred_check_branch
          %362 = sbr.rel (%p360) target = $region16
        $region15: #{tpu_custom_call.1} parent=11 // pred_region
          %s364 = ssub.s32 64, 64
          %365 = vsyncadd [#allocation4], %s364
          %s367 = sshll.u32 [#allocation3], 4
          %s368 = int_to_ptr.vmem [resolvable:$true] %s367
          %370 = dma.hbm_to_vmem [thread:$0]  %s1, 64, %s368, [#allocation4]
        $region16: #{tpu_custom_call.1} parent=11 // pred_fallthru
          _
        // Predicated region
        $region17: #{tpu_custom_call.1} parent=11 // pred_check
          %p371 = pneg %p109
        $region18: #{tpu_custom_call.1} parent=11 // pred_check_branch
          %373 = sbr.rel (%p371) target = $region20
        $region19: #{tpu_custom_call.1} parent=11 // pred_region
          %s375 = ssub.s32 16, 16
          %376 = vsyncadd [#allocation7], %s375
          %s378 = sshll.u32 [#allocation6], 4
          %s379 = int_to_ptr.vmem [resolvable:$true] %s378
          %381 = dma.hbm_to_vmem [thread:$0]  %s2, 16, %s379, [#allocation7]
        $region20: #{tpu_custom_call.1} parent=11 // pred_fallthru
          _
        // Predicated region
        $region21: #{tpu_custom_call.1} parent=11 // pred_check
          %p382 = pneg %p130
        $region22: #{tpu_custom_call.1} parent=11 // pred_check_branch
          %384 = sbr.rel (%p382) target = $region24
        $region23: #{tpu_custom_call.1} parent=11 // pred_region
          _
        $region24: #{tpu_custom_call.1} parent=11 // pred_fallthru
          _
        // Predicated region
        $region25: #{tpu_custom_call.1} parent=11 // pred_check
          %p385 = pneg %p151
        $region26: #{tpu_custom_call.1} parent=11 // pred_check_branch
          %387 = sbr.rel (%p385) target = $region28
        $region27: #{tpu_custom_call.1} parent=11 // pred_region
          %s389 = ssub.s32 32, 32
          %390 = vsyncadd [#allocation7], %s389
          %s392 = sshll.u32 [#allocation8], 4
          %s393 = int_to_ptr.vmem [resolvable:$true] %s392
          %395 = dma.hbm_to_vmem [thread:$0]  %s4, 32, %s393, [#allocation7]
        $region28: #{tpu_custom_call.1} parent=11 // pred_fallthru
          _
        // Predicated region
        $region29: #{tpu_custom_call.1} parent=11 // pred_check
          %p396 = pneg %p172
        $region30: #{tpu_custom_call.1} parent=11 // pred_check_branch
          %398 = sbr.rel (%p396) target = $region32
        $region31: #{tpu_custom_call.1} parent=11 // pred_region
          %s400 = ssub.s32 16384, 16384
          %401 = vsyncadd [#allocation10], %s400
          %s402 = sshll.u32 [#allocation9], 4
          %s403 = int_to_ptr.vmem [resolvable:$true] %s402
          %408 = dma.hbm_to_vmem [thread:$0]  %s5, 16384, %s403, [#allocation10], 512, 512, 32
        $region32: #{tpu_custom_call.1} parent=11 // pred_fallthru
          _
        // Predicated region
        $region33: #{tpu_custom_call.1} parent=11 // pred_check
          %p409 = pneg %p193
        $region34: #{tpu_custom_call.1} parent=11 // pred_check_branch
          %411 = sbr.rel (%p409) target = $region36
        $region35: #{tpu_custom_call.1} parent=11 // pred_region
          %s413 = ssub.s32 128, 128
          %414 = vsyncadd [#allocation10], %s413
          %s416 = sshll.u32 [#allocation11], 4
          %s417 = int_to_ptr.vmem [resolvable:$true] %s416
          %419 = dma.hbm_to_vmem [thread:$0]  %s6, 128, %s417, [#allocation10]
        $region36: #{tpu_custom_call.1} parent=11 // pred_fallthru
          _
        // Predicated region
        $region37: #{tpu_custom_call.1} parent=11 // pred_check
          %p420 = pneg %p214
        $region38: #{tpu_custom_call.1} parent=11 // pred_check_branch
          %422 = sbr.rel (%p420) target = $region40
        $region39: #{tpu_custom_call.1} parent=11 // pred_region
          %s424 = ssub.s32 32768, 32768
          %425 = vsyncadd [#allocation13], %s424
          %s426 = sshll.u32 [#allocation12], 4
          %s427 = int_to_ptr.vmem [resolvable:$true] %s426
          %432 = dma.hbm_to_vmem [thread:$0]  %s7, 32768, %s427, [#allocation13], 256, 256, 16
        $region40: #{tpu_custom_call.1} parent=11 // pred_fallthru
          _
        // Predicated region
        $region41: #{tpu_custom_call.1} parent=11 // pred_check
          %p433 = pneg %p235
        $region42: #{tpu_custom_call.1} parent=11 // pred_check_branch
          %435 = sbr.rel (%p433) target = $region44
        $region43: #{tpu_custom_call.1} parent=11 // pred_region
          %s437 = ssub.s32 64, 64
          %438 = vsyncadd [#allocation13], %s437
          %s440 = sshll.u32 [#allocation14], 4
          %s441 = int_to_ptr.vmem [resolvable:$true] %s440
          %443 = dma.hbm_to_vmem [thread:$0]  %s8, 64, %s441, [#allocation13]
        $region44: #{tpu_custom_call.1} parent=11 // pred_fallthru
          _
        // Predicated region
        $region45: #{tpu_custom_call.1} parent=11 // pred_check
          %p444 = pneg %p256
        $region46: #{tpu_custom_call.1} parent=11 // pred_check_branch
          %446 = sbr.rel (%p444) target = $region48
        $region47: #{tpu_custom_call.1} parent=11 // pred_region
          _
        $region48: #{tpu_custom_call.1} parent=11 // pred_fallthru
          _
        // Predicated region
        $region49: #{tpu_custom_call.1} parent=11 // pred_check
          %p447 = pneg %p277
        $region50: #{tpu_custom_call.1} parent=11 // pred_check_branch
          %449 = sbr.rel (%p447) target = $region52
        $region51: #{tpu_custom_call.1} parent=11 // pred_region
          %s451 = ssub.s32 32, 32
          %452 = vsyncadd [#allocation16], %s451
          %s454 = sshll.u32 [#allocation15], 4
          %s455 = int_to_ptr.vmem [resolvable:$true] %s454
          %457 = dma.hbm_to_vmem [thread:$0]  %s10, 32, %s455, [#allocation16]
        $region52: #{tpu_custom_call.1} parent=11 // pred_fallthru
          _
        // Predicated region
        $region53: #{tpu_custom_call.1} parent=11 // pred_check
          %p458 = pneg %p298
        $region54: #{tpu_custom_call.1} parent=11 // pred_check_branch
          %460 = sbr.rel (%p458) target = $region56
        $region55: #{tpu_custom_call.1} parent=11 // pred_region
          %s462 = ssub.s32 2048, 2048
          %463 = vsyncadd [#allocation16], %s462
          %s464 = sshll.u32 [#allocation17], 4
          %s465 = int_to_ptr.vmem [resolvable:$true] %s464
          %470 = dma.hbm_to_vmem [thread:$0]  %s11, 2048, %s465, [#allocation16], 64, 64, 4
        $region56: #{tpu_custom_call.1} parent=11 // pred_fallthru
          _
        // Predicated region
        $region57: #{tpu_custom_call.1} parent=11 // pred_check
          %p471 = pneg %p319
        $region58: #{tpu_custom_call.1} parent=11 // pred_check_branch
          %473 = sbr.rel (%p471) target = $region60
        $region59: #{tpu_custom_call.1} parent=11 // pred_region
          _
        $region60: #{tpu_custom_call.1} parent=11 // pred_fallthru
          _
      $region12: #{tpu_custom_call.1} parent=5 // pred_fallthru
        _
      %p474 = scmp.lt.s32.totalorder %s27, 2
      // Predicated region
      $region61: #{tpu_custom_call.1} parent=5 // pred_check
        %p475 = pneg %p474
      $region62: #{tpu_custom_call.1} parent=5 // pred_check_branch
        %477 = sbr.rel (%p475) target = $region64
      $region63: #{tpu_custom_call.1} parent=5 // pred_region
        // Predicated region
        $region65: #{tpu_custom_call.1} parent=63 // pred_check
          %p478 = pneg %p61
        $region66: #{tpu_custom_call.1} parent=63 // pred_check_branch
          %480 = sbr.rel (%p478) target = $region68
        $region67: #{tpu_custom_call.1} parent=63 // pred_region
          %s481 = smul.u32 16, %s34
          %s482 = smul.u32 2, %s35
          %p483 = scmp.lt.s32.totalorder %s481, 31
          %s484 = scalar_select %p483, %s481, 31
          %p485 = scmp.lt.s32.totalorder %s482, 1
          %s486 = scalar_select %p485, %s482, 1
          %s487 = smul.addr %s484, 2
          %s488 = sadd.s32 %s486, %s487
          %s489 = smul.addr %s488, 8
          %s490 = scalar_lea.vmem %s0, %s489
          %s491 = smul.u32 16, %s34
          %s492 = smul.u32 2, %s35
        $region68: #{tpu_custom_call.1} parent=63 // pred_fallthru
          _
      $region64: #{tpu_custom_call.1} parent=5 // pred_fallthru
        _
      %p493 = scmp.le.s32.totalorder 1, %s27
      %p494 = scmp.lt.s32.totalorder %s27, 3
      %p495 = pnand %p493, %p494
      %p496 = pneg %p495
      // Predicated region
      $region69: #{tpu_custom_call.1} parent=5 // pred_check
        _
      $region70: #{tpu_custom_call.1} parent=5 // pred_check_branch
        %498 = sbr.rel (%p495) target = $region72
      $region71: #{tpu_custom_call.1} parent=5 // pred_region
        %s499 = ssub.s32 %s27, 1
        // Predicated region
        $region73: #{tpu_custom_call.1} parent=71 // pred_check
          %p500 = pneg %p88
        $region74: #{tpu_custom_call.1} parent=71 // pred_check_branch
          %502 = sbr.rel (%p500) target = $region76
        $region75: #{tpu_custom_call.1} parent=71 // pred_region
          %503 = dma.done [#allocation4], 64
        $region76: #{tpu_custom_call.1} parent=71 // pred_fallthru
          _
        // Predicated region
        $region77: #{tpu_custom_call.1} parent=71 // pred_check
          %p504 = pneg %p109
        $region78: #{tpu_custom_call.1} parent=71 // pred_check_branch
          %506 = sbr.rel (%p504) target = $region80
        $region79: #{tpu_custom_call.1} parent=71 // pred_region
          %507 = dma.done [#allocation7], 16
        $region80: #{tpu_custom_call.1} parent=71 // pred_fallthru
          _
        // Predicated region
        $region81: #{tpu_custom_call.1} parent=71 // pred_check
          %p508 = pneg %p151
        $region82: #{tpu_custom_call.1} parent=71 // pred_check_branch
          %510 = sbr.rel (%p508) target = $region84
        $region83: #{tpu_custom_call.1} parent=71 // pred_region
          %511 = dma.done [#allocation7], 32
        $region84: #{tpu_custom_call.1} parent=71 // pred_fallthru
          _
        // Predicated region
        $region85: #{tpu_custom_call.1} parent=71 // pred_check
          %p512 = pneg %p172
        $region86: #{tpu_custom_call.1} parent=71 // pred_check_branch
          %514 = sbr.rel (%p512) target = $region88
        $region87: #{tpu_custom_call.1} parent=71 // pred_region
          %515 = dma.done [#allocation10], 16384
        $region88: #{tpu_custom_call.1} parent=71 // pred_fallthru
          _
        // Predicated region
        $region89: #{tpu_custom_call.1} parent=71 // pred_check
          %p516 = pneg %p193
        $region90: #{tpu_custom_call.1} parent=71 // pred_check_branch
          %518 = sbr.rel (%p516) target = $region92
        $region91: #{tpu_custom_call.1} parent=71 // pred_region
          %519 = dma.done [#allocation10], 128
        $region92: #{tpu_custom_call.1} parent=71 // pred_fallthru
          _
        // Predicated region
        $region93: #{tpu_custom_call.1} parent=71 // pred_check
          %p520 = pneg %p214
        $region94: #{tpu_custom_call.1} parent=71 // pred_check_branch
          %522 = sbr.rel (%p520) target = $region96
        $region95: #{tpu_custom_call.1} parent=71 // pred_region
          %523 = dma.done [#allocation13], 32768
        $region96: #{tpu_custom_call.1} parent=71 // pred_fallthru
          _
        // Predicated region
        $region97: #{tpu_custom_call.1} parent=71 // pred_check
          %p524 = pneg %p235
        $region98: #{tpu_custom_call.1} parent=71 // pred_check_branch
          %526 = sbr.rel (%p524) target = $region100
        $region99: #{tpu_custom_call.1} parent=71 // pred_region
          %527 = dma.done [#allocation13], 64
        $region100: #{tpu_custom_call.1} parent=71 // pred_fallthru
          _
        // Predicated region
        $region101: #{tpu_custom_call.1} parent=71 // pred_check
          %p528 = pneg %p277
        $region102: #{tpu_custom_call.1} parent=71 // pred_check_branch
          %530 = sbr.rel (%p528) target = $region104
        $region103: #{tpu_custom_call.1} parent=71 // pred_region
          %531 = dma.done [#allocation16], 32
        $region104: #{tpu_custom_call.1} parent=71 // pred_fallthru
          _
        // Predicated region
        $region105: #{tpu_custom_call.1} parent=71 // pred_check
          %p532 = pneg %p298
        $region106: #{tpu_custom_call.1} parent=71 // pred_check_branch
          %534 = sbr.rel (%p532) target = $region108
        $region107: #{tpu_custom_call.1} parent=71 // pred_region
          %535 = dma.done [#allocation16], 2048
        $region108: #{tpu_custom_call.1} parent=71 // pred_fallthru
          _
        %s536 = smul.u32 16, %s36
        %s537 = smul.u32 2, %s37
        %p538 = scmp.lt.s32.totalorder %s536, 31
        %s539 = scalar_select %p538, %s536, 31
        %p540 = scmp.lt.s32.totalorder %s537, 1
        %s541 = scalar_select %p540, %s537, 1
        %s542 = smul.addr %s539, 2
        %s543 = sadd.s32 %s541, %s542
        %s544 = smul.addr %s543, 8
        %s545 = scalar_lea.vmem %s0, %s544
        %p546 = pneg %p67
        %p547 = pneg %p64
        %p548 = pneg %p88
        %p549 = pneg %p85
        %p550 = pneg %p109
        %p551 = pneg %p106
        %p552 = pneg %p130
        %p553 = pneg %p127
        %p554 = pneg %p151
        %p555 = pneg %p148
        %p556 = pneg %p172
        %p557 = pneg %p169
        %p558 = pneg %p193
        %p559 = pneg %p190
        %p560 = pneg %p214
        %p561 = pneg %p211
        %p562 = pneg %p235
        %p563 = pneg %p232
        %p564 = pneg %p256
        %p565 = pneg %p253
        %p566 = pneg %p277
        %p567 = pneg %p274
        %p568 = pneg %p298
        %p569 = pneg %p295
        %p570 = pneg %p319
        %p571 = pneg %p316
        %p572 = pneg %p345
        %p573 = pneg %p342
        %s574 = sand.u32 %s332, 1
        %s575 = scalar_lea.sflag [#allocation5], %s574
        %s576 = sand.u32 %s332, 1
        %s577 = smul.addr %s576, 16
        %s578 = scalar_lea.vmem [#allocation18], %s577
        %s579 = smul.u32 16, %s36
        %s580 = smul.u32 2, %s37
        %p581 = scmp.lt.s32.totalorder %s579, 31
        %s582 = scalar_select %p581, %s579, 31
        %p583 = scmp.lt.s32.totalorder %s580, 1
        %s584 = scalar_select %p583, %s580, 1
        %s585 = smul.addr %s582, 2
        %s586 = sadd.s32 %s584, %s585
        %s587 = smul.addr %s586, 8
        %s588 = scalar_lea.vmem %s0, %s587
        %s589 = smul.u32 16, %s36
        %s590 = smul.u32 2, %s37
        %s591 = smul.u32 2, %s36
        %p593 = scmp.eq.s32.totalorder %s37, 0
        // Predicated region
        $region109: #{tpu_custom_call.1} parent=71 // pred_check
          %p594 = pneg %p593
        $region110: #{tpu_custom_call.1} parent=71 // pred_check_branch
          %596 = sbr.rel (%p594) target = $region112
        $region111: #{tpu_custom_call.1} parent=71 // pred_region
          %597 = vst [vmem:[#allocation2] sm:$0xff] -inf
          %598 = vst [vmem:[#allocation2 + $0x8] sm:$0xff] -inf
          %599 = vst [vmem:[#allocation2 + $0x10] sm:$0xff] -inf
          %600 = vst [vmem:[#allocation2 + $0x18] sm:$0xff] -inf
          %601 = vst [vmem:[#allocation2 + $0x20] sm:$0xff] -inf
          %602 = vst [vmem:[#allocation2 + $0x28] sm:$0xff] -inf
          %603 = vst [vmem:[#allocation2 + $0x30] sm:$0xff] -inf
          %604 = vst [vmem:[#allocation2 + $0x38] sm:$0xff] -inf
          %605 = vst [vmem:[#allocation2 + $0x40] sm:$0xff] -inf
          %606 = vst [vmem:[#allocation2 + $0x48] sm:$0xff] -inf
          %607 = vst [vmem:[#allocation2 + $0x50] sm:$0xff] -inf
          %608 = vst [vmem:[#allocation2 + $0x58] sm:$0xff] -inf
          %609 = vst [vmem:[#allocation2 + $0x60] sm:$0xff] -inf
          %610 = vst [vmem:[#allocation2 + $0x68] sm:$0xff] -inf
          %611 = vst [vmem:[#allocation2 + $0x70] sm:$0xff] -inf
          %612 = vst [vmem:[#allocation2 + $0x78] sm:$0xff] -inf
        $region112: #{tpu_custom_call.1} parent=71 // pred_fallthru
          _
        %v613 = vld [vmem:[%s588] sm:$0xff]
        %v614 = vld [vmem:[%s588 + $0x8] sm:$0xff]
        %v615 = vld [vmem:[%s588 + $0x10] sm:$0xff]
        %v616 = vld [vmem:[%s588 + $0x18] sm:$0xff]
        %v617 = vld [vmem:[%s588 + $0x20] sm:$0xff]
        %v618 = vld [vmem:[%s588 + $0x28] sm:$0xff]
        %v619 = vld [vmem:[%s588 + $0x30] sm:$0xff]
        %v620 = vld [vmem:[%s588 + $0x38] sm:$0xff]
        %v621 = vld [vmem:[%s588 + $0x40] sm:$0xff]
        %v622 = vld [vmem:[%s588 + $0x48] sm:$0xff]
        %v623 = vld [vmem:[%s588 + $0x50] sm:$0xff]
        %v624 = vld [vmem:[%s588 + $0x58] sm:$0xff]
        %v625 = vld [vmem:[%s588 + $0x60] sm:$0xff]
        %v626 = vld [vmem:[%s588 + $0x68] sm:$0xff]
        %v627 = vld [vmem:[%s588 + $0x70] sm:$0xff]
        %v628 = vld [vmem:[%s588 + $0x78] sm:$0xff]
        %v629 = vld [vmem:[%s588 + $0x80] sm:$0xff]
        %v630 = vld [vmem:[%s588 + $0x88] sm:$0xff]
        %v631 = vld [vmem:[%s588 + $0x90] sm:$0xff]
        %v632 = vld [vmem:[%s588 + $0x98] sm:$0xff]
        %v633 = vld [vmem:[%s588 + $0xa0] sm:$0xff]
        %v634 = vld [vmem:[%s588 + $0xa8] sm:$0xff]
        %v635 = vld [vmem:[%s588 + $0xb0] sm:$0xff]
        %v636 = vld [vmem:[%s588 + $0xb8] sm:$0xff]
        %v637 = vld [vmem:[%s588 + $0xc0] sm:$0xff]
        %v638 = vld [vmem:[%s588 + $0xc8] sm:$0xff]
        %v639 = vld [vmem:[%s588 + $0xd0] sm:$0xff]
        %v640 = vld [vmem:[%s588 + $0xd8] sm:$0xff]
        %v641 = vld [vmem:[%s588 + $0xe0] sm:$0xff]
        %v642 = vld [vmem:[%s588 + $0xe8] sm:$0xff]
        %v643 = vld [vmem:[%s588 + $0xf0] sm:$0xff]
        %v644 = vld [vmem:[%s588 + $0xf8] sm:$0xff]
        %v645 = vld [vmem:[#allocation3] sm:$0x7]
        %647 = vset.pattern.permute.xlu0 0
        %648 = vperm.xlu0 %647, %v613
        %v649 = vpop.permute.xlu0 %648
        %652 = vset.pattern.permute.xlu0 0
        %653 = vperm.xlu0 %652, %v614
        %v654 = vpop.permute.xlu0 %653
        %657 = vset.pattern.permute.xlu0 0
        %658 = vperm.xlu0 %657, %v615
        %v659 = vpop.permute.xlu0 %658
        %662 = vset.pattern.permute.xlu0 0
        %663 = vperm.xlu0 %662, %v616
        %v664 = vpop.permute.xlu0 %663
        %667 = vset.pattern.permute.xlu0 0
        %668 = vperm.xlu0 %667, %v617
        %v669 = vpop.permute.xlu0 %668
        %672 = vset.pattern.permute.xlu0 0
        %673 = vperm.xlu0 %672, %v618
        %v674 = vpop.permute.xlu0 %673
        %677 = vset.pattern.permute.xlu0 0
        %678 = vperm.xlu0 %677, %v619
        %v679 = vpop.permute.xlu0 %678
        %682 = vset.pattern.permute.xlu0 0
        %683 = vperm.xlu0 %682, %v620
        %v684 = vpop.permute.xlu0 %683
        %687 = vset.pattern.permute.xlu0 0
        %688 = vperm.xlu0 %687, %v621
        %v689 = vpop.permute.xlu0 %688
        %692 = vset.pattern.permute.xlu0 0
        %693 = vperm.xlu0 %692, %v622
        %v694 = vpop.permute.xlu0 %693
        %697 = vset.pattern.permute.xlu0 0
        %698 = vperm.xlu0 %697, %v623
        %v699 = vpop.permute.xlu0 %698
        %702 = vset.pattern.permute.xlu0 0
        %703 = vperm.xlu0 %702, %v624
        %v704 = vpop.permute.xlu0 %703
        %707 = vset.pattern.permute.xlu0 0
        %708 = vperm.xlu0 %707, %v625
        %v709 = vpop.permute.xlu0 %708
        %712 = vset.pattern.permute.xlu0 0
        %713 = vperm.xlu0 %712, %v626
        %v714 = vpop.permute.xlu0 %713
        %717 = vset.pattern.permute.xlu0 0
        %718 = vperm.xlu0 %717, %v627
        %v719 = vpop.permute.xlu0 %718
        %722 = vset.pattern.permute.xlu0 0
        %723 = vperm.xlu0 %722, %v628
        %v724 = vpop.permute.xlu0 %723
        %727 = vset.pattern.permute.xlu0 0
        %728 = vperm.xlu0 %727, %v629
        %v729 = vpop.permute.xlu0 %728
        %732 = vset.pattern.permute.xlu0 0
        %733 = vperm.xlu0 %732, %v630
        %v734 = vpop.permute.xlu0 %733
        %737 = vset.pattern.permute.xlu0 0
        %738 = vperm.xlu0 %737, %v631
        %v739 = vpop.permute.xlu0 %738
        %742 = vset.pattern.permute.xlu0 0
        %743 = vperm.xlu0 %742, %v632
        %v744 = vpop.permute.xlu0 %743
        %747 = vset.pattern.permute.xlu0 0
        %748 = vperm.xlu0 %747, %v633
        %v749 = vpop.permute.xlu0 %748
        %752 = vset.pattern.permute.xlu0 0
        %753 = vperm.xlu0 %752, %v634
        %v754 = vpop.permute.xlu0 %753
        %757 = vset.pattern.permute.xlu0 0
        %758 = vperm.xlu0 %757, %v635
        %v759 = vpop.permute.xlu0 %758
        %762 = vset.pattern.permute.xlu0 0
        %763 = vperm.xlu0 %762, %v636
        %v764 = vpop.permute.xlu0 %763
        %767 = vset.pattern.permute.xlu0 0
        %768 = vperm.xlu0 %767, %v637
        %v769 = vpop.permute.xlu0 %768
        %772 = vset.pattern.permute.xlu0 0
        %773 = vperm.xlu0 %772, %v638
        %v774 = vpop.permute.xlu0 %773
        %777 = vset.pattern.permute.xlu0 0
        %778 = vperm.xlu0 %777, %v639
        %v779 = vpop.permute.xlu0 %778
        %782 = vset.pattern.permute.xlu0 0
        %783 = vperm.xlu0 %782, %v640
        %v784 = vpop.permute.xlu0 %783
        %787 = vset.pattern.permute.xlu0 0
        %788 = vperm.xlu0 %787, %v641
        %v789 = vpop.permute.xlu0 %788
        %792 = vset.pattern.permute.xlu0 0
        %793 = vperm.xlu0 %792, %v642
        %v794 = vpop.permute.xlu0 %793
        %797 = vset.pattern.permute.xlu0 0
        %798 = vperm.xlu0 %797, %v643
        %v799 = vpop.permute.xlu0 %798
        %802 = vset.pattern.permute.xlu0 0
        %803 = vperm.xlu0 %802, %v644
        %v804 = vpop.permute.xlu0 %803
        %v806 = vlaneseq
        %v807 = vshrl.u32 %v806, 7
        %v808 = vsub.s32 0, %v807
        %v809 = vrot.slane %v645, %v808
        %v810 = vmul.f32 %v649, %v809
        %v811 = vmul.f32 %v654, %v809
        %v812 = vmul.f32 %v659, %v809
        %v813 = vmul.f32 %v664, %v809
        %v814 = vmul.f32 %v669, %v809
        %v815 = vmul.f32 %v674, %v809
        %v816 = vmul.f32 %v679, %v809
        %v817 = vmul.f32 %v684, %v809
        %v818 = vmul.f32 %v689, %v809
        %v819 = vmul.f32 %v694, %v809
        %v820 = vmul.f32 %v699, %v809
        %v821 = vmul.f32 %v704, %v809
        %v822 = vmul.f32 %v709, %v809
        %v823 = vmul.f32 %v714, %v809
        %v824 = vmul.f32 %v719, %v809
        %v825 = vmul.f32 %v724, %v809
        %v826 = vmul.f32 %v729, %v809
        %v827 = vmul.f32 %v734, %v809
        %v828 = vmul.f32 %v739, %v809
        %v829 = vmul.f32 %v744, %v809
        %v830 = vmul.f32 %v749, %v809
        %v831 = vmul.f32 %v754, %v809
        %v832 = vmul.f32 %v759, %v809
        %v833 = vmul.f32 %v764, %v809
        %v834 = vmul.f32 %v769, %v809
        %v835 = vmul.f32 %v774, %v809
        %v836 = vmul.f32 %v779, %v809
        %v837 = vmul.f32 %v784, %v809
        %v838 = vmul.f32 %v789, %v809
        %v839 = vmul.f32 %v794, %v809
        %v840 = vmul.f32 %v799, %v809
        %v841 = vmul.f32 %v804, %v809
        %842 = vset.pattern.permute.xlu0 1
        %843 = vperm.xlu0 %842, %v613
        %v844 = vpop.permute.xlu0 %843
        %846 = vset.pattern.permute.xlu0 1
        %847 = vperm.xlu0 %846, %v614
        %v848 = vpop.permute.xlu0 %847
        %850 = vset.pattern.permute.xlu0 1
        %851 = vperm.xlu0 %850, %v615
        %v852 = vpop.permute.xlu0 %851
        %854 = vset.pattern.permute.xlu0 1
        %855 = vperm.xlu0 %854, %v616
        %v856 = vpop.permute.xlu0 %855
        %858 = vset.pattern.permute.xlu0 1
        %859 = vperm.xlu0 %858, %v617
        %v860 = vpop.permute.xlu0 %859
        %862 = vset.pattern.permute.xlu0 1
        %863 = vperm.xlu0 %862, %v618
        %v864 = vpop.permute.xlu0 %863
        %866 = vset.pattern.permute.xlu0 1
        %867 = vperm.xlu0 %866, %v619
        %v868 = vpop.permute.xlu0 %867
        %870 = vset.pattern.permute.xlu0 1
        %871 = vperm.xlu0 %870, %v620
        %v872 = vpop.permute.xlu0 %871
        %874 = vset.pattern.permute.xlu0 1
        %875 = vperm.xlu0 %874, %v621
        %v876 = vpop.permute.xlu0 %875
        %878 = vset.pattern.permute.xlu0 1
        %879 = vperm.xlu0 %878, %v622
        %v880 = vpop.permute.xlu0 %879
        %882 = vset.pattern.permute.xlu0 1
        %883 = vperm.xlu0 %882, %v623
        %v884 = vpop.permute.xlu0 %883
        %886 = vset.pattern.permute.xlu0 1
        %887 = vperm.xlu0 %886, %v624
        %v888 = vpop.permute.xlu0 %887
        %890 = vset.pattern.permute.xlu0 1
        %891 = vperm.xlu0 %890, %v625
        %v892 = vpop.permute.xlu0 %891
        %894 = vset.pattern.permute.xlu0 1
        %895 = vperm.xlu0 %894, %v626
        %v896 = vpop.permute.xlu0 %895
        %898 = vset.pattern.permute.xlu0 1
        %899 = vperm.xlu0 %898, %v627
        %v900 = vpop.permute.xlu0 %899
        %902 = vset.pattern.permute.xlu0 1
        %903 = vperm.xlu0 %902, %v628
        %v904 = vpop.permute.xlu0 %903
        %906 = vset.pattern.permute.xlu0 1
        %907 = vperm.xlu0 %906, %v629
        %v908 = vpop.permute.xlu0 %907
        %910 = vset.pattern.permute.xlu0 1
        %911 = vperm.xlu0 %910, %v630
        %v912 = vpop.permute.xlu0 %911
        %914 = vset.pattern.permute.xlu0 1
        %915 = vperm.xlu0 %914, %v631
        %v916 = vpop.permute.xlu0 %915
        %918 = vset.pattern.permute.xlu0 1
        %919 = vperm.xlu0 %918, %v632
        %v920 = vpop.permute.xlu0 %919
        %922 = vset.pattern.permute.xlu0 1
        %923 = vperm.xlu0 %922, %v633
        %v924 = vpop.permute.xlu0 %923
        %926 = vset.pattern.permute.xlu0 1
        %927 = vperm.xlu0 %926, %v634
        %v928 = vpop.permute.xlu0 %927
        %930 = vset.pattern.permute.xlu0 1
        %931 = vperm.xlu0 %930, %v635
        %v932 = vpop.permute.xlu0 %931
        %934 = vset.pattern.permute.xlu0 1
        %935 = vperm.xlu0 %934, %v636
        %v936 = vpop.permute.xlu0 %935
        %938 = vset.pattern.permute.xlu0 1
        %939 = vperm.xlu0 %938, %v637
        %v940 = vpop.permute.xlu0 %939
        %942 = vset.pattern.permute.xlu0 1
        %943 = vperm.xlu0 %942, %v638
        %v944 = vpop.permute.xlu0 %943
        %946 = vset.pattern.permute.xlu0 1
        %947 = vperm.xlu0 %946, %v639
        %v948 = vpop.permute.xlu0 %947
        %950 = vset.pattern.permute.xlu0 1
        %951 = vperm.xlu0 %950, %v640
        %v952 = vpop.permute.xlu0 %951
        %954 = vset.pattern.permute.xlu0 1
        %955 = vperm.xlu0 %954, %v641
        %v956 = vpop.permute.xlu0 %955
        %958 = vset.pattern.permute.xlu0 1
        %959 = vperm.xlu0 %958, %v642
        %v960 = vpop.permute.xlu0 %959
        %962 = vset.pattern.permute.xlu0 1
        %963 = vperm.xlu0 %962, %v643
        %v964 = vpop.permute.xlu0 %963
        %966 = vset.pattern.permute.xlu0 1
        %967 = vperm.xlu0 %966, %v644
        %v968 = vpop.permute.xlu0 %967
        %v970 = vlaneseq
        %v971 = vshrl.u32 %v970, 7
        %v972 = vsub.s32 1, %v971
        %v973 = vrot.slane %v645, %v972
        %v974 = vmul.f32 %v844, %v973
        %v975 = vmul.f32 %v848, %v973
        %v976 = vmul.f32 %v852, %v973
        %v977 = vmul.f32 %v856, %v973
        %v978 = vmul.f32 %v860, %v973
        %v979 = vmul.f32 %v864, %v973
        %v980 = vmul.f32 %v868, %v973
        %v981 = vmul.f32 %v872, %v973
        %v982 = vmul.f32 %v876, %v973
        %v983 = vmul.f32 %v880, %v973
        %v984 = vmul.f32 %v884, %v973
        %v985 = vmul.f32 %v888, %v973
        %v986 = vmul.f32 %v892, %v973
        %v987 = vmul.f32 %v896, %v973
        %v988 = vmul.f32 %v900, %v973
        %v989 = vmul.f32 %v904, %v973
        %v990 = vmul.f32 %v908, %v973
        %v991 = vmul.f32 %v912, %v973
        %v992 = vmul.f32 %v916, %v973
        %v993 = vmul.f32 %v920, %v973
        %v994 = vmul.f32 %v924, %v973
        %v995 = vmul.f32 %v928, %v973
        %v996 = vmul.f32 %v932, %v973
        %v997 = vmul.f32 %v936, %v973
        %v998 = vmul.f32 %v940, %v973
        %v999 = vmul.f32 %v944, %v973
        %v1000 = vmul.f32 %v948, %v973
        %v1001 = vmul.f32 %v952, %v973
        %v1002 = vmul.f32 %v956, %v973
        %v1003 = vmul.f32 %v960, %v973
        %v1004 = vmul.f32 %v964, %v973
        %v1005 = vmul.f32 %v968, %v973
        %v1006 = vadd.f32 %v810, %v974
        %v1007 = vadd.f32 %v811, %v975
        %v1008 = vadd.f32 %v812, %v976
        %v1009 = vadd.f32 %v813, %v977
        %v1010 = vadd.f32 %v814, %v978
        %v1011 = vadd.f32 %v815, %v979
        %v1012 = vadd.f32 %v816, %v980
        %v1013 = vadd.f32 %v817, %v981
        %v1014 = vadd.f32 %v818, %v982
        %v1015 = vadd.f32 %v819, %v983
        %v1016 = vadd.f32 %v820, %v984
        %v1017 = vadd.f32 %v821, %v985
        %v1018 = vadd.f32 %v822, %v986
        %v1019 = vadd.f32 %v823, %v987
        %v1020 = vadd.f32 %v824, %v988
        %v1021 = vadd.f32 %v825, %v989
        %v1022 = vadd.f32 %v826, %v990
        %v1023 = vadd.f32 %v827, %v991
        %v1024 = vadd.f32 %v828, %v992
        %v1025 = vadd.f32 %v829, %v993
        %v1026 = vadd.f32 %v830, %v994
        %v1027 = vadd.f32 %v831, %v995
        %v1028 = vadd.f32 %v832, %v996
        %v1029 = vadd.f32 %v833, %v997
        %v1030 = vadd.f32 %v834, %v998
        %v1031 = vadd.f32 %v835, %v999
        %v1032 = vadd.f32 %v836, %v1000
        %v1033 = vadd.f32 %v837, %v1001
        %v1034 = vadd.f32 %v838, %v1002
        %v1035 = vadd.f32 %v839, %v1003
        %v1036 = vadd.f32 %v840, %v1004
        %v1037 = vadd.f32 %v841, %v1005
        %1038 = vset.pattern.permute.xlu0 2
        %1039 = vperm.xlu0 %1038, %v613
        %v1040 = vpop.permute.xlu0 %1039
        %1042 = vset.pattern.permute.xlu0 2
        %1043 = vperm.xlu0 %1042, %v614
        %v1044 = vpop.permute.xlu0 %1043
        %1046 = vset.pattern.permute.xlu0 2
        %1047 = vperm.xlu0 %1046, %v615
        %v1048 = vpop.permute.xlu0 %1047
        %1050 = vset.pattern.permute.xlu0 2
        %1051 = vperm.xlu0 %1050, %v616
        %v1052 = vpop.permute.xlu0 %1051
        %1054 = vset.pattern.permute.xlu0 2
        %1055 = vperm.xlu0 %1054, %v617
        %v1056 = vpop.permute.xlu0 %1055
        %1058 = vset.pattern.permute.xlu0 2
        %1059 = vperm.xlu0 %1058, %v618
        %v1060 = vpop.permute.xlu0 %1059
        %1062 = vset.pattern.permute.xlu0 2
        %1063 = vperm.xlu0 %1062, %v619
        %v1064 = vpop.permute.xlu0 %1063
        %1066 = vset.pattern.permute.xlu0 2
        %1067 = vperm.xlu0 %1066, %v620
        %v1068 = vpop.permute.xlu0 %1067
        %1070 = vset.pattern.permute.xlu0 2
        %1071 = vperm.xlu0 %1070, %v621
        %v1072 = vpop.permute.xlu0 %1071
        %1074 = vset.pattern.permute.xlu0 2
        %1075 = vperm.xlu0 %1074, %v622
        %v1076 = vpop.permute.xlu0 %1075
        %1078 = vset.pattern.permute.xlu0 2
        %1079 = vperm.xlu0 %1078, %v623
        %v1080 = vpop.permute.xlu0 %1079
        %1082 = vset.pattern.permute.xlu0 2
        %1083 = vperm.xlu0 %1082, %v624
        %v1084 = vpop.permute.xlu0 %1083
        %1086 = vset.pattern.permute.xlu0 2
        %1087 = vperm.xlu0 %1086, %v625
        %v1088 = vpop.permute.xlu0 %1087
        %1090 = vset.pattern.permute.xlu0 2
        %1091 = vperm.xlu0 %1090, %v626
        %v1092 = vpop.permute.xlu0 %1091
        %1094 = vset.pattern.permute.xlu0 2
        %1095 = vperm.xlu0 %1094, %v627
        %v1096 = vpop.permute.xlu0 %1095
        %1098 = vset.pattern.permute.xlu0 2
        %1099 = vperm.xlu0 %1098, %v628
        %v1100 = vpop.permute.xlu0 %1099
        %1102 = vset.pattern.permute.xlu0 2
        %1103 = vperm.xlu0 %1102, %v629
        %v1104 = vpop.permute.xlu0 %1103
        %1106 = vset.pattern.permute.xlu0 2
        %1107 = vperm.xlu0 %1106, %v630
        %v1108 = vpop.permute.xlu0 %1107
        %1110 = vset.pattern.permute.xlu0 2
        %1111 = vperm.xlu0 %1110, %v631
        %v1112 = vpop.permute.xlu0 %1111
        %1114 = vset.pattern.permute.xlu0 2
        %1115 = vperm.xlu0 %1114, %v632
        %v1116 = vpop.permute.xlu0 %1115
        %1118 = vset.pattern.permute.xlu0 2
        %1119 = vperm.xlu0 %1118, %v633
        %v1120 = vpop.permute.xlu0 %1119
        %1122 = vset.pattern.permute.xlu0 2
        %1123 = vperm.xlu0 %1122, %v634
        %v1124 = vpop.permute.xlu0 %1123
        %1126 = vset.pattern.permute.xlu0 2
        %1127 = vperm.xlu0 %1126, %v635
        %v1128 = vpop.permute.xlu0 %1127
        %1130 = vset.pattern.permute.xlu0 2
        %1131 = vperm.xlu0 %1130, %v636
        %v1132 = vpop.permute.xlu0 %1131
        %1134 = vset.pattern.permute.xlu0 2
        %1135 = vperm.xlu0 %1134, %v637
        %v1136 = vpop.permute.xlu0 %1135
        %1138 = vset.pattern.permute.xlu0 2
        %1139 = vperm.xlu0 %1138, %v638
        %v1140 = vpop.permute.xlu0 %1139
        %1142 = vset.pattern.permute.xlu0 2
        %1143 = vperm.xlu0 %1142, %v639
        %v1144 = vpop.permute.xlu0 %1143
        %1146 = vset.pattern.permute.xlu0 2
        %1147 = vperm.xlu0 %1146, %v640
        %v1148 = vpop.permute.xlu0 %1147
        %1150 = vset.pattern.permute.xlu0 2
        %1151 = vperm.xlu0 %1150, %v641
        %v1152 = vpop.permute.xlu0 %1151
        %1154 = vset.pattern.permute.xlu0 2
        %1155 = vperm.xlu0 %1154, %v642
        %v1156 = vpop.permute.xlu0 %1155
        %1158 = vset.pattern.permute.xlu0 2
        %1159 = vperm.xlu0 %1158, %v643
        %v1160 = vpop.permute.xlu0 %1159
        %1162 = vset.pattern.permute.xlu0 2
        %1163 = vperm.xlu0 %1162, %v644
        %v1164 = vpop.permute.xlu0 %1163
        %v1166 = vlaneseq
        %v1167 = vshrl.u32 %v1166, 7
        %v1168 = vsub.s32 2, %v1167
        %v1169 = vrot.slane %v645, %v1168
        %v1170 = vmul.f32 %v1040, %v1169
        %v1171 = vmul.f32 %v1044, %v1169
        %v1172 = vmul.f32 %v1048, %v1169
        %v1173 = vmul.f32 %v1052, %v1169
        %v1174 = vmul.f32 %v1056, %v1169
        %v1175 = vmul.f32 %v1060, %v1169
        %v1176 = vmul.f32 %v1064, %v1169
        %v1177 = vmul.f32 %v1068, %v1169
        %v1178 = vmul.f32 %v1072, %v1169
        %v1179 = vmul.f32 %v1076, %v1169
        %v1180 = vmul.f32 %v1080, %v1169
        %v1181 = vmul.f32 %v1084, %v1169
        %v1182 = vmul.f32 %v1088, %v1169
        %v1183 = vmul.f32 %v1092, %v1169
        %v1184 = vmul.f32 %v1096, %v1169
        %v1185 = vmul.f32 %v1100, %v1169
        %v1186 = vmul.f32 %v1104, %v1169
        %v1187 = vmul.f32 %v1108, %v1169
        %v1188 = vmul.f32 %v1112, %v1169
        %v1189 = vmul.f32 %v1116, %v1169
        %v1190 = vmul.f32 %v1120, %v1169
        %v1191 = vmul.f32 %v1124, %v1169
        %v1192 = vmul.f32 %v1128, %v1169
        %v1193 = vmul.f32 %v1132, %v1169
        %v1194 = vmul.f32 %v1136, %v1169
        %v1195 = vmul.f32 %v1140, %v1169
        %v1196 = vmul.f32 %v1144, %v1169
        %v1197 = vmul.f32 %v1148, %v1169
        %v1198 = vmul.f32 %v1152, %v1169
        %v1199 = vmul.f32 %v1156, %v1169
        %v1200 = vmul.f32 %v1160, %v1169
        %v1201 = vmul.f32 %v1164, %v1169
        %v1202 = vadd.f32 %v1006, %v1170
        %v1203 = vadd.f32 %v1007, %v1171
        %v1204 = vadd.f32 %v1008, %v1172
        %v1205 = vadd.f32 %v1009, %v1173
        %v1206 = vadd.f32 %v1010, %v1174
        %v1207 = vadd.f32 %v1011, %v1175
        %v1208 = vadd.f32 %v1012, %v1176
        %v1209 = vadd.f32 %v1013, %v1177
        %v1210 = vadd.f32 %v1014, %v1178
        %v1211 = vadd.f32 %v1015, %v1179
        %v1212 = vadd.f32 %v1016, %v1180
        %v1213 = vadd.f32 %v1017, %v1181
        %v1214 = vadd.f32 %v1018, %v1182
        %v1215 = vadd.f32 %v1019, %v1183
        %v1216 = vadd.f32 %v1020, %v1184
        %v1217 = vadd.f32 %v1021, %v1185
        %v1218 = vadd.f32 %v1022, %v1186
        %v1219 = vadd.f32 %v1023, %v1187
        %v1220 = vadd.f32 %v1024, %v1188
        %v1221 = vadd.f32 %v1025, %v1189
        %v1222 = vadd.f32 %v1026, %v1190
        %v1223 = vadd.f32 %v1027, %v1191
        %v1224 = vadd.f32 %v1028, %v1192
        %v1225 = vadd.f32 %v1029, %v1193
        %v1226 = vadd.f32 %v1030, %v1194
        %v1227 = vadd.f32 %v1031, %v1195
        %v1228 = vadd.f32 %v1032, %v1196
        %v1229 = vadd.f32 %v1033, %v1197
        %v1230 = vadd.f32 %v1034, %v1198
        %v1231 = vadd.f32 %v1035, %v1199
        %v1232 = vadd.f32 %v1036, %v1200
        %v1233 = vadd.f32 %v1037, %v1201
        %v1234 = vld [vmem:[#allocation6] sm:$0x1]
        %v1236 = vlaneseq
        %v1237 = vshrl.u32 %v1236, 7
        %v1238 = vsub.s32 0, %v1237
        %v1239 = vrot.slane %v1234, %v1238
        %v1241 = vadd.f32 %v1202, %v1239
        %v1242 = vadd.f32 %v1203, %v1239
        %v1243 = vadd.f32 %v1204, %v1239
        %v1244 = vadd.f32 %v1205, %v1239
        %v1245 = vadd.f32 %v1206, %v1239
        %v1246 = vadd.f32 %v1207, %v1239
        %v1247 = vadd.f32 %v1208, %v1239
        %v1248 = vadd.f32 %v1209, %v1239
        %v1249 = vadd.f32 %v1210, %v1239
        %v1250 = vadd.f32 %v1211, %v1239
        %v1251 = vadd.f32 %v1212, %v1239
        %v1252 = vadd.f32 %v1213, %v1239
        %v1253 = vadd.f32 %v1214, %v1239
        %v1254 = vadd.f32 %v1215, %v1239
        %v1255 = vadd.f32 %v1216, %v1239
        %v1256 = vadd.f32 %v1217, %v1239
        %v1257 = vadd.f32 %v1218, %v1239
        %v1258 = vadd.f32 %v1219, %v1239
        %v1259 = vadd.f32 %v1220, %v1239
        %v1260 = vadd.f32 %v1221, %v1239
        %v1261 = vadd.f32 %v1222, %v1239
        %v1262 = vadd.f32 %v1223, %v1239
        %v1263 = vadd.f32 %v1224, %v1239
        %v1264 = vadd.f32 %v1225, %v1239
        %v1265 = vadd.f32 %v1226, %v1239
        %v1266 = vadd.f32 %v1227, %v1239
        %v1267 = vadd.f32 %v1228, %v1239
        %v1268 = vadd.f32 %v1229, %v1239
        %v1269 = vadd.f32 %v1230, %v1239
        %v1270 = vadd.f32 %v1231, %v1239
        %v1271 = vadd.f32 %v1232, %v1239
        %v1272 = vadd.f32 %v1233, %v1239
        %v1273 = vmax.f32 %v1241, 0.0
        %v1274 = vmax.f32 %v1242, 0.0
        %v1275 = vmax.f32 %v1243, 0.0
        %v1276 = vmax.f32 %v1244, 0.0
        %v1277 = vmax.f32 %v1245, 0.0
        %v1278 = vmax.f32 %v1246, 0.0
        %v1279 = vmax.f32 %v1247, 0.0
        %v1280 = vmax.f32 %v1248, 0.0
        %v1281 = vmax.f32 %v1249, 0.0
        %v1282 = vmax.f32 %v1250, 0.0
        %v1283 = vmax.f32 %v1251, 0.0
        %v1284 = vmax.f32 %v1252, 0.0
        %v1285 = vmax.f32 %v1253, 0.0
        %v1286 = vmax.f32 %v1254, 0.0
        %v1287 = vmax.f32 %v1255, 0.0
        %v1288 = vmax.f32 %v1256, 0.0
        %v1289 = vmax.f32 %v1257, 0.0
        %v1290 = vmax.f32 %v1258, 0.0
        %v1291 = vmax.f32 %v1259, 0.0
        %v1292 = vmax.f32 %v1260, 0.0
        %v1293 = vmax.f32 %v1261, 0.0
        %v1294 = vmax.f32 %v1262, 0.0
        %v1295 = vmax.f32 %v1263, 0.0
        %v1296 = vmax.f32 %v1264, 0.0
        %v1297 = vmax.f32 %v1265, 0.0
        %v1298 = vmax.f32 %v1266, 0.0
        %v1299 = vmax.f32 %v1267, 0.0
        %v1300 = vmax.f32 %v1268, 0.0
        %v1301 = vmax.f32 %v1269, 0.0
        %v1302 = vmax.f32 %v1270, 0.0
        %v1303 = vmax.f32 %v1271, 0.0
        %v1304 = vmax.f32 %v1272, 0.0
        %v1305 = vpack.c.bf16 %v1274, %v1273
        %v1306 = vpack.c.bf16 %v1276, %v1275
        %v1307 = vpack.c.bf16 %v1278, %v1277
        %v1308 = vpack.c.bf16 %v1280, %v1279
        %v1309 = vpack.c.bf16 %v1282, %v1281
        %v1310 = vpack.c.bf16 %v1284, %v1283
        %v1311 = vpack.c.bf16 %v1286, %v1285
        %v1312 = vpack.c.bf16 %v1288, %v1287
        %v1313 = vpack.c.bf16 %v1290, %v1289
        %v1314 = vpack.c.bf16 %v1292, %v1291
        %v1315 = vpack.c.bf16 %v1294, %v1293
        %v1316 = vpack.c.bf16 %v1296, %v1295
        %v1317 = vpack.c.bf16 %v1298, %v1297
        %v1318 = vpack.c.bf16 %v1300, %v1299
        %v1319 = vpack.c.bf16 %v1302, %v1301
        %v1320 = vpack.c.bf16 %v1304, %v1303
        %v1321 = vld [vmem:[%s3] sm:$0xff]
        %v1322 = vld [vmem:[%s3 + $0x8] sm:$0xff]
        %v1323 = vld [vmem:[%s3 + $0x10] sm:$0xff]
        %v1324 = vld [vmem:[%s3 + $0x18] sm:$0xff]
        %v1325 = vld [vmem:[%s3 + $0x20] sm:$0xff]
        %v1326 = vld [vmem:[%s3 + $0x28] sm:$0xff]
        %v1327 = vld [vmem:[%s3 + $0x30] sm:$0xff]
        %v1328 = vld [vmem:[%s3 + $0x38] sm:$0xff]
        %v1329 = vld [vmem:[#allocation8] sm:$0x3]
        %v1331 = vlaneseq
        %v1332 = vshrl.u32 %v1331, 7
        %v1333 = vsub.s32 0, %v1332
        %v1334 = vrot.slane %v1329, %v1333
        %v1335 = vlaneseq
        %v1336 = vshrl.u32 %v1335, 7
        %v1337 = vsub.s32 1, %v1336
        %v1338 = vrot.slane %v1329, %v1337
        %v1349 = vunpack.c.l.b16 %v1321
        %v1350 = vunpack.c.h.b16 %v1321
        %v1351 = vunpack.c.l.b16 %v1322
        %v1352 = vunpack.c.h.b16 %v1322
        %v1353 = vunpack.c.l.b16 %v1323
        %v1354 = vunpack.c.h.b16 %v1323
        %v1355 = vunpack.c.l.b16 %v1324
        %v1356 = vunpack.c.h.b16 %v1324
        %v1357 = vunpack.c.l.b16 %v1325
        %v1358 = vunpack.c.h.b16 %v1325
        %v1359 = vunpack.c.l.b16 %v1326
        %v1360 = vunpack.c.h.b16 %v1326
        %v1361 = vunpack.c.l.b16 %v1327
        %v1362 = vunpack.c.h.b16 %v1327
        %v1363 = vunpack.c.l.b16 %v1328
        %v1364 = vunpack.c.h.b16 %v1328
        %v1365 = vpack.c.b16 %v1351, %v1349
        %v1366 = vpack.c.b16 %v1352, %v1350
        %v1367 = vpack.c.b16 %v1355, %v1353
        %v1368 = vpack.c.b16 %v1356, %v1354
        %v1369 = vpack.c.b16 %v1359, %v1357
        %v1370 = vpack.c.b16 %v1360, %v1358
        %v1371 = vpack.c.b16 %v1363, %v1361
        %v1372 = vpack.c.b16 %v1364, %v1362
        %vm1381 = vcmask 523264
        %v1383 = vsel %vm1381, %v1305, 0
        %v1386 = vsel %vm1381, %v1306, 0
        %v1389 = vsel %vm1381, %v1307, 0
        %v1392 = vsel %vm1381, %v1308, 0
        %v1395 = vsel %vm1381, %v1309, 0
        %v1398 = vsel %vm1381, %v1310, 0
        %v1401 = vsel %vm1381, %v1311, 0
        %v1404 = vsel %vm1381, %v1312, 0
        %v1407 = vsel %vm1381, %v1313, 0
        %v1410 = vsel %vm1381, %v1314, 0
        %v1413 = vsel %vm1381, %v1315, 0
        %v1416 = vsel %vm1381, %v1316, 0
        %v1419 = vsel %vm1381, %v1317, 0
        %v1422 = vsel %vm1381, %v1318, 0
        %v1425 = vsel %vm1381, %v1319, 0
        %v1428 = vsel %vm1381, %v1320, 0
        %1430 = vmatprep.subr.bf16.mxu0 0
        %1431 = vmatpush1.bf16.msra.mxu0 0
        %1432 = vmatprep.subr.bf16.mxu0 0
        %1433 = vmatpush1.bf16.msra.mxu0 0
        %1434 = vmatprep.subr.bf16.mxu0 0
        %1435 = vmatpush1.bf16.msra.mxu0 0
        %1436 = vmatprep.subr.bf16.mxu0 0
        %1437 = vmatpush1.bf16.msra.mxu0 0
        %1438 = vmatprep.subr.bf16.mxu0 %v1372
        %1439 = vmatpush1.bf16.msra.mxu0 %v1371
        %1440 = vmatprep.subr.bf16.mxu0 %v1370
        %1441 = vmatpush1.bf16.msra.mxu0 %v1369
        %1442 = vmatprep.subr.bf16.mxu0 %v1368
        %1443 = vmatpush1.bf16.msra.mxu0 %v1367
        %1444 = vmatprep.subr.bf16.mxu0 %v1366
        %1445 = vmatpush1.bf16.msra.mxu0 %v1365
        %1446 = vmatprep.subr.bf16.mxu0 0
        %1447 = vmatpush2.bf16.msra.mxu0 0
        %1448 = vmatprep.subr.bf16.mxu0 0
        %1449 = vmatpush2.bf16.msra.mxu0 0
        %1450 = vmatprep.subr.bf16.mxu0 0
        %1451 = vmatpush2.bf16.msra.mxu0 0
        %1452 = vmatprep.subr.bf16.mxu0 0
        %1453 = vmatpush2.bf16.msra.mxu0 0
        %1454 = vmatprep.subr.bf16.mxu0 0
        %1455 = vmatpush2.bf16.msra.mxu0 0
        %1456 = vmatprep.subr.bf16.mxu0 0
        %1457 = vmatpush2.bf16.msra.mxu0 0
        %1458 = vmatprep.subr.bf16.mxu0 0
        %1459 = vmatpush2.bf16.msra.mxu0 0
        %1460 = vmatprep.subr.bf16.mxu0 0
        %1461 = vmatpush2.bf16.msra.mxu0 0
        %1462 = vmatprep.mubr.bf16.mxu0 0
        %1463 = vmatmul.mubr.bf16.gmra.mxu0 %v1383
        %v1464 = vpop.f32.mrf.mxu0
        %v1465 = vadd.f32 %v1334, %v1464
        %v1466 = vpop.f32.mrf.mxu0
        %v1467 = vadd.f32 %v1338, %v1466
        %v1468 = vpop.f32.mrf.mxu0
        %v1469 = vadd.f32 %v1334, %v1468
        %v1470 = vpop.f32.mrf.mxu0
        %v1471 = vadd.f32 %v1338, %v1470
        %1472 = vmatprep.mubr.bf16.mxu0 0
        %1473 = vmatmul.mubr.bf16.gmra.mxu0 %v1386
        %v1474 = vpop.f32.mrf.mxu0
        %v1475 = vadd.f32 %v1334, %v1474
        %v1476 = vpop.f32.mrf.mxu0
        %v1477 = vadd.f32 %v1338, %v1476
        %v1478 = vpop.f32.mrf.mxu0
        %v1479 = vadd.f32 %v1334, %v1478
        %v1480 = vpop.f32.mrf.mxu0
        %v1481 = vadd.f32 %v1338, %v1480
        %1482 = vmatprep.mubr.bf16.mxu0 0
        %1483 = vmatmul.mubr.bf16.gmra.mxu0 %v1389
        %v1484 = vpop.f32.mrf.mxu0
        %v1485 = vadd.f32 %v1334, %v1484
        %v1486 = vpop.f32.mrf.mxu0
        %v1487 = vadd.f32 %v1338, %v1486
        %v1488 = vpop.f32.mrf.mxu0
        %v1489 = vadd.f32 %v1334, %v1488
        %v1490 = vpop.f32.mrf.mxu0
        %v1491 = vadd.f32 %v1338, %v1490
        %1492 = vmatprep.mubr.bf16.mxu0 0
        %1493 = vmatmul.mubr.bf16.gmra.mxu0 %v1392
        %v1494 = vpop.f32.mrf.mxu0
        %v1495 = vadd.f32 %v1334, %v1494
        %v1496 = vpop.f32.mrf.mxu0
        %v1497 = vadd.f32 %v1338, %v1496
        %v1498 = vpop.f32.mrf.mxu0
        %v1499 = vadd.f32 %v1334, %v1498
        %v1500 = vpop.f32.mrf.mxu0
        %v1501 = vadd.f32 %v1338, %v1500
        %1502 = vmatprep.mubr.bf16.mxu0 0
        %1503 = vmatmul.mubr.bf16.gmra.mxu0 %v1395
        %v1504 = vpop.f32.mrf.mxu0
        %v1505 = vadd.f32 %v1334, %v1504
        %v1506 = vpop.f32.mrf.mxu0
        %v1507 = vadd.f32 %v1338, %v1506
        %v1508 = vpop.f32.mrf.mxu0
        %v1509 = vadd.f32 %v1334, %v1508
        %v1510 = vpop.f32.mrf.mxu0
        %v1511 = vadd.f32 %v1338, %v1510
        %1512 = vmatprep.mubr.bf16.mxu0 0
        %1513 = vmatmul.mubr.bf16.gmra.mxu0 %v1398
        %v1514 = vpop.f32.mrf.mxu0
        %v1515 = vadd.f32 %v1334, %v1514
        %v1516 = vpop.f32.mrf.mxu0
        %v1517 = vadd.f32 %v1338, %v1516
        %v1518 = vpop.f32.mrf.mxu0
        %v1519 = vadd.f32 %v1334, %v1518
        %v1520 = vpop.f32.mrf.mxu0
        %v1521 = vadd.f32 %v1338, %v1520
        %1522 = vmatprep.mubr.bf16.mxu0 0
        %1523 = vmatmul.mubr.bf16.gmra.mxu0 %v1401
        %v1524 = vpop.f32.mrf.mxu0
        %v1525 = vadd.f32 %v1334, %v1524
        %v1526 = vpop.f32.mrf.mxu0
        %v1527 = vadd.f32 %v1338, %v1526
        %v1528 = vpop.f32.mrf.mxu0
        %v1529 = vadd.f32 %v1334, %v1528
        %v1530 = vpop.f32.mrf.mxu0
        %v1531 = vadd.f32 %v1338, %v1530
        %1532 = vmatprep.mubr.bf16.mxu0 0
        %1533 = vmatmul.mubr.bf16.gmra.mxu0 %v1404
        %v1534 = vpop.f32.mrf.mxu0
        %v1535 = vadd.f32 %v1334, %v1534
        %v1536 = vpop.f32.mrf.mxu0
        %v1537 = vadd.f32 %v1338, %v1536
        %v1538 = vpop.f32.mrf.mxu0
        %v1539 = vadd.f32 %v1334, %v1538
        %v1540 = vpop.f32.mrf.mxu0
        %v1541 = vadd.f32 %v1338, %v1540
        %1542 = vmatprep.mubr.bf16.mxu0 0
        %1543 = vmatmul.mubr.bf16.gmra.mxu0 %v1407
        %v1544 = vpop.f32.mrf.mxu0
        %v1545 = vadd.f32 %v1334, %v1544
        %v1546 = vpop.f32.mrf.mxu0
        %v1547 = vadd.f32 %v1338, %v1546
        %v1548 = vpop.f32.mrf.mxu0
        %v1549 = vadd.f32 %v1334, %v1548
        %v1550 = vpop.f32.mrf.mxu0
        %v1551 = vadd.f32 %v1338, %v1550
        %1552 = vmatprep.mubr.bf16.mxu0 0
        %1553 = vmatmul.mubr.bf16.gmra.mxu0 %v1410
        %v1554 = vpop.f32.mrf.mxu0
        %v1555 = vadd.f32 %v1334, %v1554
        %v1556 = vpop.f32.mrf.mxu0
        %v1557 = vadd.f32 %v1338, %v1556
        %v1558 = vpop.f32.mrf.mxu0
        %v1559 = vadd.f32 %v1334, %v1558
        %v1560 = vpop.f32.mrf.mxu0
        %v1561 = vadd.f32 %v1338, %v1560
        %1562 = vmatprep.mubr.bf16.mxu0 0
        %1563 = vmatmul.mubr.bf16.gmra.mxu0 %v1413
        %v1564 = vpop.f32.mrf.mxu0
        %v1565 = vadd.f32 %v1334, %v1564
        %v1566 = vpop.f32.mrf.mxu0
        %v1567 = vadd.f32 %v1338, %v1566
        %v1568 = vpop.f32.mrf.mxu0
        %v1569 = vadd.f32 %v1334, %v1568
        %v1570 = vpop.f32.mrf.mxu0
        %v1571 = vadd.f32 %v1338, %v1570
        %1572 = vmatprep.mubr.bf16.mxu0 0
        %1573 = vmatmul.mubr.bf16.gmra.mxu0 %v1416
        %v1574 = vpop.f32.mrf.mxu0
        %v1575 = vadd.f32 %v1334, %v1574
        %v1576 = vpop.f32.mrf.mxu0
        %v1577 = vadd.f32 %v1338, %v1576
        %v1578 = vpop.f32.mrf.mxu0
        %v1579 = vadd.f32 %v1334, %v1578
        %v1580 = vpop.f32.mrf.mxu0
        %v1581 = vadd.f32 %v1338, %v1580
        %1582 = vmatprep.mubr.bf16.mxu0 0
        %1583 = vmatmul.mubr.bf16.gmra.mxu0 %v1419
        %v1584 = vpop.f32.mrf.mxu0
        %v1585 = vadd.f32 %v1334, %v1584
        %v1586 = vpop.f32.mrf.mxu0
        %v1587 = vadd.f32 %v1338, %v1586
        %v1588 = vpop.f32.mrf.mxu0
        %v1589 = vadd.f32 %v1334, %v1588
        %v1590 = vpop.f32.mrf.mxu0
        %v1591 = vadd.f32 %v1338, %v1590
        %1592 = vmatprep.mubr.bf16.mxu0 0
        %1593 = vmatmul.mubr.bf16.gmra.mxu0 %v1422
        %v1594 = vpop.f32.mrf.mxu0
        %v1595 = vadd.f32 %v1334, %v1594
        %v1596 = vpop.f32.mrf.mxu0
        %v1597 = vadd.f32 %v1338, %v1596
        %v1598 = vpop.f32.mrf.mxu0
        %v1599 = vadd.f32 %v1334, %v1598
        %v1600 = vpop.f32.mrf.mxu0
        %v1601 = vadd.f32 %v1338, %v1600
        %1602 = vmatprep.mubr.bf16.mxu0 0
        %1603 = vmatmul.mubr.bf16.gmra.mxu0 %v1425
        %v1604 = vpop.f32.mrf.mxu0
        %v1605 = vadd.f32 %v1334, %v1604
        %v1606 = vpop.f32.mrf.mxu0
        %v1607 = vadd.f32 %v1338, %v1606
        %v1608 = vpop.f32.mrf.mxu0
        %v1609 = vadd.f32 %v1334, %v1608
        %v1610 = vpop.f32.mrf.mxu0
        %v1611 = vadd.f32 %v1338, %v1610
        %1612 = vmatprep.mubr.bf16.mxu0 0
        %1613 = vmatmul.mubr.bf16.gmra.mxu0 %v1428
        %v1614 = vpop.f32.mrf.mxu0
        %v1615 = vadd.f32 %v1334, %v1614
        %v1616 = vpop.f32.mrf.mxu0
        %v1617 = vadd.f32 %v1338, %v1616
        %v1618 = vpop.f32.mrf.mxu0
        %v1619 = vadd.f32 %v1334, %v1618
        %v1620 = vpop.f32.mrf.mxu0
        %v1621 = vadd.f32 %v1338, %v1620
        %1622 = vdwg.mxu0
        %v1623 = vmax.f32 %v1465, 0.0
        %v1624 = vmax.f32 %v1467, 0.0
        %v1625 = vmax.f32 %v1469, 0.0
        %v1626 = vmax.f32 %v1471, 0.0
        %v1627 = vmax.f32 %v1475, 0.0
        %v1628 = vmax.f32 %v1477, 0.0
        %v1629 = vmax.f32 %v1479, 0.0
        %v1630 = vmax.f32 %v1481, 0.0
        %v1631 = vmax.f32 %v1485, 0.0
        %v1632 = vmax.f32 %v1487, 0.0
        %v1633 = vmax.f32 %v1489, 0.0
        %v1634 = vmax.f32 %v1491, 0.0
        %v1635 = vmax.f32 %v1495, 0.0
        %v1636 = vmax.f32 %v1497, 0.0
        %v1637 = vmax.f32 %v1499, 0.0
        %v1638 = vmax.f32 %v1501, 0.0
        %v1639 = vmax.f32 %v1505, 0.0
        %v1640 = vmax.f32 %v1507, 0.0
        %v1641 = vmax.f32 %v1509, 0.0
        %v1642 = vmax.f32 %v1511, 0.0
        %v1643 = vmax.f32 %v1515, 0.0
        %v1644 = vmax.f32 %v1517, 0.0
        %v1645 = vmax.f32 %v1519, 0.0
        %v1646 = vmax.f32 %v1521, 0.0
        %v1647 = vmax.f32 %v1525, 0.0
        %v1648 = vmax.f32 %v1527, 0.0
        %v1649 = vmax.f32 %v1529, 0.0
        %v1650 = vmax.f32 %v1531, 0.0
        %v1651 = vmax.f32 %v1535, 0.0
        %v1652 = vmax.f32 %v1537, 0.0
        %v1653 = vmax.f32 %v1539, 0.0
        %v1654 = vmax.f32 %v1541, 0.0
        %v1655 = vmax.f32 %v1545, 0.0
        %v1656 = vmax.f32 %v1547, 0.0
        %v1657 = vmax.f32 %v1549, 0.0
        %v1658 = vmax.f32 %v1551, 0.0
        %v1659 = vmax.f32 %v1555, 0.0
        %v1660 = vmax.f32 %v1557, 0.0
        %v1661 = vmax.f32 %v1559, 0.0
        %v1662 = vmax.f32 %v1561, 0.0
        %v1663 = vmax.f32 %v1565, 0.0
        %v1664 = vmax.f32 %v1567, 0.0
        %v1665 = vmax.f32 %v1569, 0.0
        %v1666 = vmax.f32 %v1571, 0.0
        %v1667 = vmax.f32 %v1575, 0.0
        %v1668 = vmax.f32 %v1577, 0.0
        %v1669 = vmax.f32 %v1579, 0.0
        %v1670 = vmax.f32 %v1581, 0.0
        %v1671 = vmax.f32 %v1585, 0.0
        %v1672 = vmax.f32 %v1587, 0.0
        %v1673 = vmax.f32 %v1589, 0.0
        %v1674 = vmax.f32 %v1591, 0.0
        %v1675 = vmax.f32 %v1595, 0.0
        %v1676 = vmax.f32 %v1597, 0.0
        %v1677 = vmax.f32 %v1599, 0.0
        %v1678 = vmax.f32 %v1601, 0.0
        %v1679 = vmax.f32 %v1605, 0.0
        %v1680 = vmax.f32 %v1607, 0.0
        %v1681 = vmax.f32 %v1609, 0.0
        %v1682 = vmax.f32 %v1611, 0.0
        %v1683 = vmax.f32 %v1615, 0.0
        %v1684 = vmax.f32 %v1617, 0.0
        %v1685 = vmax.f32 %v1619, 0.0
        %v1686 = vmax.f32 %v1621, 0.0
        %v1687 = vpack.c.bf16 %v1625, %v1623
        %v1688 = vpack.c.bf16 %v1626, %v1624
        %v1689 = vpack.c.bf16 %v1629, %v1627
        %v1690 = vpack.c.bf16 %v1630, %v1628
        %v1691 = vpack.c.bf16 %v1633, %v1631
        %v1692 = vpack.c.bf16 %v1634, %v1632
        %v1693 = vpack.c.bf16 %v1637, %v1635
        %v1694 = vpack.c.bf16 %v1638, %v1636
        %v1695 = vpack.c.bf16 %v1641, %v1639
        %v1696 = vpack.c.bf16 %v1642, %v1640
        %v1697 = vpack.c.bf16 %v1645, %v1643
        %v1698 = vpack.c.bf16 %v1646, %v1644
        %v1699 = vpack.c.bf16 %v1649, %v1647
        %v1700 = vpack.c.bf16 %v1650, %v1648
        %v1701 = vpack.c.bf16 %v1653, %v1651
        %v1702 = vpack.c.bf16 %v1654, %v1652
        %v1703 = vpack.c.bf16 %v1657, %v1655
        %v1704 = vpack.c.bf16 %v1658, %v1656
        %v1705 = vpack.c.bf16 %v1661, %v1659
        %v1706 = vpack.c.bf16 %v1662, %v1660
        %v1707 = vpack.c.bf16 %v1665, %v1663
        %v1708 = vpack.c.bf16 %v1666, %v1664
        %v1709 = vpack.c.bf16 %v1669, %v1667
        %v1710 = vpack.c.bf16 %v1670, %v1668
        %v1711 = vpack.c.bf16 %v1673, %v1671
        %v1712 = vpack.c.bf16 %v1674, %v1672
        %v1713 = vpack.c.bf16 %v1677, %v1675
        %v1714 = vpack.c.bf16 %v1678, %v1676
        %v1715 = vpack.c.bf16 %v1681, %v1679
        %v1716 = vpack.c.bf16 %v1682, %v1680
        %v1717 = vpack.c.bf16 %v1685, %v1683
        %v1718 = vpack.c.bf16 %v1686, %v1684
        %v1719 = vld [vmem:[#allocation9] sm:$0xff]
        %v1720 = vld [vmem:[#allocation9 + $0x8] sm:$0xff]
        %v1721 = vld [vmem:[#allocation9 + $0x10] sm:$0xff]
        %v1722 = vld [vmem:[#allocation9 + $0x18] sm:$0xff]
        %v1723 = vld [vmem:[#allocation9 + $0x20] sm:$0xff]
        %v1724 = vld [vmem:[#allocation9 + $0x28] sm:$0xff]
        %v1725 = vld [vmem:[#allocation9 + $0x30] sm:$0xff]
        %v1726 = vld [vmem:[#allocation9 + $0x38] sm:$0xff]
        %v1727 = vld [vmem:[#allocation9 + $0x40] sm:$0xff]
        %v1728 = vld [vmem:[#allocation9 + $0x48] sm:$0xff]
        %v1729 = vld [vmem:[#allocation9 + $0x50] sm:$0xff]
        %v1730 = vld [vmem:[#allocation9 + $0x58] sm:$0xff]
        %v1731 = vld [vmem:[#allocation9 + $0x60] sm:$0xff]
        %v1732 = vld [vmem:[#allocation9 + $0x68] sm:$0xff]
        %v1733 = vld [vmem:[#allocation9 + $0x70] sm:$0xff]
        %v1734 = vld [vmem:[#allocation9 + $0x78] sm:$0xff]
        %v1735 = vld [vmem:[#allocation9 + $0x80] sm:$0xff]
        %v1736 = vld [vmem:[#allocation9 + $0x88] sm:$0xff]
        %v1737 = vld [vmem:[#allocation9 + $0x90] sm:$0xff]
        %v1738 = vld [vmem:[#allocation9 + $0x98] sm:$0xff]
        %v1739 = vld [vmem:[#allocation9 + $0xa0] sm:$0xff]
        %v1740 = vld [vmem:[#allocation9 + $0xa8] sm:$0xff]
        %v1741 = vld [vmem:[#allocation9 + $0xb0] sm:$0xff]
        %v1742 = vld [vmem:[#allocation9 + $0xb8] sm:$0xff]
        %v1743 = vld [vmem:[#allocation9 + $0xc0] sm:$0xff]
        %v1744 = vld [vmem:[#allocation9 + $0xc8] sm:$0xff]
        %v1745 = vld [vmem:[#allocation9 + $0xd0] sm:$0xff]
        %v1746 = vld [vmem:[#allocation9 + $0xd8] sm:$0xff]
        %v1747 = vld [vmem:[#allocation9 + $0xe0] sm:$0xff]
        %v1748 = vld [vmem:[#allocation9 + $0xe8] sm:$0xff]
        %v1749 = vld [vmem:[#allocation9 + $0xf0] sm:$0xff]
        %v1750 = vld [vmem:[#allocation9 + $0xf8] sm:$0xff]
        %v1751 = vld [vmem:[#allocation9 + $0x100] sm:$0xff]
        %v1752 = vld [vmem:[#allocation9 + $0x108] sm:$0xff]
        %v1753 = vld [vmem:[#allocation9 + $0x110] sm:$0xff]
        %v1754 = vld [vmem:[#allocation9 + $0x118] sm:$0xff]
        %v1755 = vld [vmem:[#allocation9 + $0x120] sm:$0xff]
        %v1756 = vld [vmem:[#allocation9 + $0x128] sm:$0xff]
        %v1757 = vld [vmem:[#allocation9 + $0x130] sm:$0xff]
        %v1758 = vld [vmem:[#allocation9 + $0x138] sm:$0xff]
        %v1759 = vld [vmem:[#allocation9 + $0x140] sm:$0xff]
        %v1760 = vld [vmem:[#allocation9 + $0x148] sm:$0xff]
        %v1761 = vld [vmem:[#allocation9 + $0x150] sm:$0xff]
        %v1762 = vld [vmem:[#allocation9 + $0x158] sm:$0xff]
        %v1763 = vld [vmem:[#allocation9 + $0x160] sm:$0xff]
        %v1764 = vld [vmem:[#allocation9 + $0x168] sm:$0xff]
        %v1765 = vld [vmem:[#allocation9 + $0x170] sm:$0xff]
        %v1766 = vld [vmem:[#allocation9 + $0x178] sm:$0xff]
        %v1767 = vld [vmem:[#allocation9 + $0x180] sm:$0xff]
        %v1768 = vld [vmem:[#allocation9 + $0x188] sm:$0xff]
        %v1769 = vld [vmem:[#allocation9 + $0x190] sm:$0xff]
        %v1770 = vld [vmem:[#allocation9 + $0x198] sm:$0xff]
        %v1771 = vld [vmem:[#allocation9 + $0x1a0] sm:$0xff]
        %v1772 = vld [vmem:[#allocation9 + $0x1a8] sm:$0xff]
        %v1773 = vld [vmem:[#allocation9 + $0x1b0] sm:$0xff]
        %v1774 = vld [vmem:[#allocation9 + $0x1b8] sm:$0xff]
        %v1775 = vld [vmem:[#allocation9 + $0x1c0] sm:$0xff]
        %v1776 = vld [vmem:[#allocation9 + $0x1c8] sm:$0xff]
        %v1777 = vld [vmem:[#allocation9 + $0x1d0] sm:$0xff]
        %v1778 = vld [vmem:[#allocation9 + $0x1d8] sm:$0xff]
        %v1779 = vld [vmem:[#allocation9 + $0x1e0] sm:$0xff]
        %v1780 = vld [vmem:[#allocation9 + $0x1e8] sm:$0xff]
        %v1781 = vld [vmem:[#allocation9 + $0x1f0] sm:$0xff]
        %v1782 = vld [vmem:[#allocation9 + $0x1f8] sm:$0xff]
        %v1783 = vld [vmem:[#allocation9 + $0x200] sm:$0xff]
        %v1784 = vld [vmem:[#allocation9 + $0x208] sm:$0xff]
        %v1785 = vld [vmem:[#allocation9 + $0x210] sm:$0xff]
        %v1786 = vld [vmem:[#allocation9 + $0x218] sm:$0xff]
        %v1787 = vld [vmem:[#allocation9 + $0x220] sm:$0xff]
        %v1788 = vld [vmem:[#allocation9 + $0x228] sm:$0xff]
        %v1789 = vld [vmem:[#allocation9 + $0x230] sm:$0xff]
        %v1790 = vld [vmem:[#allocation9 + $0x238] sm:$0xff]
        %v1791 = vld [vmem:[#allocation9 + $0x240] sm:$0xff]
        %v1792 = vld [vmem:[#allocation9 + $0x248] sm:$0xff]
        %v1793 = vld [vmem:[#allocation9 + $0x250] sm:$0xff]
        %v1794 = vld [vmem:[#allocation9 + $0x258] sm:$0xff]
        %v1795 = vld [vmem:[#allocation9 + $0x260] sm:$0xff]
        %v1796 = vld [vmem:[#allocation9 + $0x268] sm:$0xff]
        %v1797 = vld [vmem:[#allocation9 + $0x270] sm:$0xff]
        %v1798 = vld [vmem:[#allocation9 + $0x278] sm:$0xff]
        %v1799 = vld [vmem:[#allocation9 + $0x280] sm:$0xff]
        %v1800 = vld [vmem:[#allocation9 + $0x288] sm:$0xff]
        %v1801 = vld [vmem:[#allocation9 + $0x290] sm:$0xff]
        %v1802 = vld [vmem:[#allocation9 + $0x298] sm:$0xff]
        %v1803 = vld [vmem:[#allocation9 + $0x2a0] sm:$0xff]
        %v1804 = vld [vmem:[#allocation9 + $0x2a8] sm:$0xff]
        %v1805 = vld [vmem:[#allocation9 + $0x2b0] sm:$0xff]
        %v1806 = vld [vmem:[#allocation9 + $0x2b8] sm:$0xff]
        %v1807 = vld [vmem:[#allocation9 + $0x2c0] sm:$0xff]
        %v1808 = vld [vmem:[#allocation9 + $0x2c8] sm:$0xff]
        %v1809 = vld [vmem:[#allocation9 + $0x2d0] sm:$0xff]
        %v1810 = vld [vmem:[#allocation9 + $0x2d8] sm:$0xff]
        %v1811 = vld [vmem:[#allocation9 + $0x2e0] sm:$0xff]
        %v1812 = vld [vmem:[#allocation9 + $0x2e8] sm:$0xff]
        %v1813 = vld [vmem:[#allocation9 + $0x2f0] sm:$0xff]
        %v1814 = vld [vmem:[#allocation9 + $0x2f8] sm:$0xff]
        %v1815 = vld [vmem:[#allocation9 + $0x300] sm:$0xff]
        %v1816 = vld [vmem:[#allocation9 + $0x308] sm:$0xff]
        %v1817 = vld [vmem:[#allocation9 + $0x310] sm:$0xff]
        %v1818 = vld [vmem:[#allocation9 + $0x318] sm:$0xff]
        %v1819 = vld [vmem:[#allocation9 + $0x320] sm:$0xff]
        %v1820 = vld [vmem:[#allocation9 + $0x328] sm:$0xff]
        %v1821 = vld [vmem:[#allocation9 + $0x330] sm:$0xff]
        %v1822 = vld [vmem:[#allocation9 + $0x338] sm:$0xff]
        %v1823 = vld [vmem:[#allocation9 + $0x340] sm:$0xff]
        %v1824 = vld [vmem:[#allocation9 + $0x348] sm:$0xff]
        %v1825 = vld [vmem:[#allocation9 + $0x350] sm:$0xff]
        %v1826 = vld [vmem:[#allocation9 + $0x358] sm:$0xff]
        %v1827 = vld [vmem:[#allocation9 + $0x360] sm:$0xff]
        %v1828 = vld [vmem:[#allocation9 + $0x368] sm:$0xff]
        %v1829 = vld [vmem:[#allocation9 + $0x370] sm:$0xff]
        %v1830 = vld [vmem:[#allocation9 + $0x378] sm:$0xff]
        %v1831 = vld [vmem:[#allocation9 + $0x380] sm:$0xff]
        %v1832 = vld [vmem:[#allocation9 + $0x388] sm:$0xff]
        %v1833 = vld [vmem:[#allocation9 + $0x390] sm:$0xff]
        %v1834 = vld [vmem:[#allocation9 + $0x398] sm:$0xff]
        %v1835 = vld [vmem:[#allocation9 + $0x3a0] sm:$0xff]
        %v1836 = vld [vmem:[#allocation9 + $0x3a8] sm:$0xff]
        %v1837 = vld [vmem:[#allocation9 + $0x3b0] sm:$0xff]
        %v1838 = vld [vmem:[#allocation9 + $0x3b8] sm:$0xff]
        %v1839 = vld [vmem:[#allocation9 + $0x3c0] sm:$0xff]
        %v1840 = vld [vmem:[#allocation9 + $0x3c8] sm:$0xff]
        %v1841 = vld [vmem:[#allocation9 + $0x3d0] sm:$0xff]
        %v1842 = vld [vmem:[#allocation9 + $0x3d8] sm:$0xff]
        %v1843 = vld [vmem:[#allocation9 + $0x3e0] sm:$0xff]
        %v1844 = vld [vmem:[#allocation9 + $0x3e8] sm:$0xff]
        %v1845 = vld [vmem:[#allocation9 + $0x3f0] sm:$0xff]
        %v1846 = vld [vmem:[#allocation9 + $0x3f8] sm:$0xff]
        %v1847 = vld [vmem:[#allocation11] sm:$0xff]
        %v1849 = vlaneseq
        %v1850 = vshrl.u32 %v1849, 7
        %v1851 = vsub.s32 0, %v1850
        %v1852 = vrot.slane %v1847, %v1851
        %v1853 = vlaneseq
        %v1854 = vshrl.u32 %v1853, 7
        %v1855 = vsub.s32 1, %v1854
        %v1856 = vrot.slane %v1847, %v1855
        %v1857 = vlaneseq
        %v1858 = vshrl.u32 %v1857, 7
        %v1859 = vsub.s32 2, %v1858
        %v1860 = vrot.slane %v1847, %v1859
        %v1861 = vlaneseq
        %v1862 = vshrl.u32 %v1861, 7
        %v1863 = vsub.s32 3, %v1862
        %v1864 = vrot.slane %v1847, %v1863
        %v1865 = vlaneseq
        %v1866 = vshrl.u32 %v1865, 7
        %v1867 = vsub.s32 4, %v1866
        %v1868 = vrot.slane %v1847, %v1867
        %v1869 = vlaneseq
        %v1870 = vshrl.u32 %v1869, 7
        %v1871 = vsub.s32 5, %v1870
        %v1872 = vrot.slane %v1847, %v1871
        %v1873 = vlaneseq
        %v1874 = vshrl.u32 %v1873, 7
        %v1875 = vsub.s32 6, %v1874
        %v1876 = vrot.slane %v1847, %v1875
        %v1877 = vlaneseq
        %v1878 = vshrl.u32 %v1877, 7
        %v1879 = vsub.s32 7, %v1878
        %v1880 = vrot.slane %v1847, %v1879
        %v2017 = vunpack.c.l.b16 %v1719
        %v2018 = vunpack.c.h.b16 %v1719
        %v2019 = vunpack.c.l.b16 %v1720
        %v2020 = vunpack.c.h.b16 %v1720
        %v2021 = vunpack.c.l.b16 %v1721
        %v2022 = vunpack.c.h.b16 %v1721
        %v2023 = vunpack.c.l.b16 %v1722
        %v2024 = vunpack.c.h.b16 %v1722
        %v2025 = vunpack.c.l.b16 %v1723
        %v2026 = vunpack.c.h.b16 %v1723
        %v2027 = vunpack.c.l.b16 %v1724
        %v2028 = vunpack.c.h.b16 %v1724
        %v2029 = vunpack.c.l.b16 %v1725
        %v2030 = vunpack.c.h.b16 %v1725
        %v2031 = vunpack.c.l.b16 %v1726
        %v2032 = vunpack.c.h.b16 %v1726
        %v2033 = vunpack.c.l.b16 %v1727
        %v2034 = vunpack.c.h.b16 %v1727
        %v2035 = vunpack.c.l.b16 %v1728
        %v2036 = vunpack.c.h.b16 %v1728
        %v2037 = vunpack.c.l.b16 %v1729
        %v2038 = vunpack.c.h.b16 %v1729
        %v2039 = vunpack.c.l.b16 %v1730
        %v2040 = vunpack.c.h.b16 %v1730
        %v2041 = vunpack.c.l.b16 %v1731
        %v2042 = vunpack.c.h.b16 %v1731
        %v2043 = vunpack.c.l.b16 %v1732
        %v2044 = vunpack.c.h.b16 %v1732
        %v2045 = vunpack.c.l.b16 %v1733
        %v2046 = vunpack.c.h.b16 %v1733
        %v2047 = vunpack.c.l.b16 %v1734
        %v2048 = vunpack.c.h.b16 %v1734
        %v2049 = vunpack.c.l.b16 %v1735
        %v2050 = vunpack.c.h.b16 %v1735
        %v2051 = vunpack.c.l.b16 %v1736
        %v2052 = vunpack.c.h.b16 %v1736
        %v2053 = vunpack.c.l.b16 %v1737
        %v2054 = vunpack.c.h.b16 %v1737
        %v2055 = vunpack.c.l.b16 %v1738
        %v2056 = vunpack.c.h.b16 %v1738
        %v2057 = vunpack.c.l.b16 %v1739
        %v2058 = vunpack.c.h.b16 %v1739
        %v2059 = vunpack.c.l.b16 %v1740
        %v2060 = vunpack.c.h.b16 %v1740
        %v2061 = vunpack.c.l.b16 %v1741
        %v2062 = vunpack.c.h.b16 %v1741
        %v2063 = vunpack.c.l.b16 %v1742
        %v2064 = vunpack.c.h.b16 %v1742
        %v2065 = vunpack.c.l.b16 %v1743
        %v2066 = vunpack.c.h.b16 %v1743
        %v2067 = vunpack.c.l.b16 %v1744
        %v2068 = vunpack.c.h.b16 %v1744
        %v2069 = vunpack.c.l.b16 %v1745
        %v2070 = vunpack.c.h.b16 %v1745
        %v2071 = vunpack.c.l.b16 %v1746
        %v2072 = vunpack.c.h.b16 %v1746
        %v2073 = vunpack.c.l.b16 %v1747
        %v2074 = vunpack.c.h.b16 %v1747
        %v2075 = vunpack.c.l.b16 %v1748
        %v2076 = vunpack.c.h.b16 %v1748
        %v2077 = vunpack.c.l.b16 %v1749
        %v2078 = vunpack.c.h.b16 %v1749
        %v2079 = vunpack.c.l.b16 %v1750
        %v2080 = vunpack.c.h.b16 %v1750
        %v2081 = vunpack.c.l.b16 %v1751
        %v2082 = vunpack.c.h.b16 %v1751
        %v2083 = vunpack.c.l.b16 %v1752
        %v2084 = vunpack.c.h.b16 %v1752
        %v2085 = vunpack.c.l.b16 %v1753
        %v2086 = vunpack.c.h.b16 %v1753
        %v2087 = vunpack.c.l.b16 %v1754
        %v2088 = vunpack.c.h.b16 %v1754
        %v2089 = vunpack.c.l.b16 %v1755
        %v2090 = vunpack.c.h.b16 %v1755
        %v2091 = vunpack.c.l.b16 %v1756
        %v2092 = vunpack.c.h.b16 %v1756
        %v2093 = vunpack.c.l.b16 %v1757
        %v2094 = vunpack.c.h.b16 %v1757
        %v2095 = vunpack.c.l.b16 %v1758
        %v2096 = vunpack.c.h.b16 %v1758
        %v2097 = vunpack.c.l.b16 %v1759
        %v2098 = vunpack.c.h.b16 %v1759
        %v2099 = vunpack.c.l.b16 %v1760
        %v2100 = vunpack.c.h.b16 %v1760
        %v2101 = vunpack.c.l.b16 %v1761
        %v2102 = vunpack.c.h.b16 %v1761
        %v2103 = vunpack.c.l.b16 %v1762
        %v2104 = vunpack.c.h.b16 %v1762
        %v2105 = vunpack.c.l.b16 %v1763
        %v2106 = vunpack.c.h.b16 %v1763
        %v2107 = vunpack.c.l.b16 %v1764
        %v2108 = vunpack.c.h.b16 %v1764
        %v2109 = vunpack.c.l.b16 %v1765
        %v2110 = vunpack.c.h.b16 %v1765
        %v2111 = vunpack.c.l.b16 %v1766
        %v2112 = vunpack.c.h.b16 %v1766
        %v2113 = vunpack.c.l.b16 %v1767
        %v2114 = vunpack.c.h.b16 %v1767
        %v2115 = vunpack.c.l.b16 %v1768
        %v2116 = vunpack.c.h.b16 %v1768
        %v2117 = vunpack.c.l.b16 %v1769
        %v2118 = vunpack.c.h.b16 %v1769
        %v2119 = vunpack.c.l.b16 %v1770
        %v2120 = vunpack.c.h.b16 %v1770
        %v2121 = vunpack.c.l.b16 %v1771
        %v2122 = vunpack.c.h.b16 %v1771
        %v2123 = vunpack.c.l.b16 %v1772
        %v2124 = vunpack.c.h.b16 %v1772
        %v2125 = vunpack.c.l.b16 %v1773
        %v2126 = vunpack.c.h.b16 %v1773
        %v2127 = vunpack.c.l.b16 %v1774
        %v2128 = vunpack.c.h.b16 %v1774
        %v2129 = vunpack.c.l.b16 %v1775
        %v2130 = vunpack.c.h.b16 %v1775
        %v2131 = vunpack.c.l.b16 %v1776
        %v2132 = vunpack.c.h.b16 %v1776
        %v2133 = vunpack.c.l.b16 %v1777
        %v2134 = vunpack.c.h.b16 %v1777
        %v2135 = vunpack.c.l.b16 %v1778
        %v2136 = vunpack.c.h.b16 %v1778
        %v2137 = vunpack.c.l.b16 %v1779
        %v2138 = vunpack.c.h.b16 %v1779
        %v2139 = vunpack.c.l.b16 %v1780
        %v2140 = vunpack.c.h.b16 %v1780
        %v2141 = vunpack.c.l.b16 %v1781
        %v2142 = vunpack.c.h.b16 %v1781
        %v2143 = vunpack.c.l.b16 %v1782
        %v2144 = vunpack.c.h.b16 %v1782
        %v2145 = vunpack.c.l.b16 %v1783
        %v2146 = vunpack.c.h.b16 %v1783
        %v2147 = vunpack.c.l.b16 %v1784
        %v2148 = vunpack.c.h.b16 %v1784
        %v2149 = vunpack.c.l.b16 %v1785
        %v2150 = vunpack.c.h.b16 %v1785
        %v2151 = vunpack.c.l.b16 %v1786
        %v2152 = vunpack.c.h.b16 %v1786
        %v2153 = vunpack.c.l.b16 %v1787
        %v2154 = vunpack.c.h.b16 %v1787
        %v2155 = vunpack.c.l.b16 %v1788
        %v2156 = vunpack.c.h.b16 %v1788
        %v2157 = vunpack.c.l.b16 %v1789
        %v2158 = vunpack.c.h.b16 %v1789
        %v2159 = vunpack.c.l.b16 %v1790
        %v2160 = vunpack.c.h.b16 %v1790
        %v2161 = vunpack.c.l.b16 %v1791
        %v2162 = vunpack.c.h.b16 %v1791
        %v2163 = vunpack.c.l.b16 %v1792
        %v2164 = vunpack.c.h.b16 %v1792
        %v2165 = vunpack.c.l.b16 %v1793
        %v2166 = vunpack.c.h.b16 %v1793
        %v2167 = vunpack.c.l.b16 %v1794
        %v2168 = vunpack.c.h.b16 %v1794
        %v2169 = vunpack.c.l.b16 %v1795
        %v2170 = vunpack.c.h.b16 %v1795
        %v2171 = vunpack.c.l.b16 %v1796
        %v2172 = vunpack.c.h.b16 %v1796
        %v2173 = vunpack.c.l.b16 %v1797
        %v2174 = vunpack.c.h.b16 %v1797
        %v2175 = vunpack.c.l.b16 %v1798
        %v2176 = vunpack.c.h.b16 %v1798
        %v2177 = vunpack.c.l.b16 %v1799
        %v2178 = vunpack.c.h.b16 %v1799
        %v2179 = vunpack.c.l.b16 %v1800
        %v2180 = vunpack.c.h.b16 %v1800
        %v2181 = vunpack.c.l.b16 %v1801
        %v2182 = vunpack.c.h.b16 %v1801
        %v2183 = vunpack.c.l.b16 %v1802
        %v2184 = vunpack.c.h.b16 %v1802
        %v2185 = vunpack.c.l.b16 %v1803
        %v2186 = vunpack.c.h.b16 %v1803
        %v2187 = vunpack.c.l.b16 %v1804
        %v2188 = vunpack.c.h.b16 %v1804
        %v2189 = vunpack.c.l.b16 %v1805
        %v2190 = vunpack.c.h.b16 %v1805
        %v2191 = vunpack.c.l.b16 %v1806
        %v2192 = vunpack.c.h.b16 %v1806
        %v2193 = vunpack.c.l.b16 %v1807
        %v2194 = vunpack.c.h.b16 %v1807
        %v2195 = vunpack.c.l.b16 %v1808
        %v2196 = vunpack.c.h.b16 %v1808
        %v2197 = vunpack.c.l.b16 %v1809
        %v2198 = vunpack.c.h.b16 %v1809
        %v2199 = vunpack.c.l.b16 %v1810
        %v2200 = vunpack.c.h.b16 %v1810
        %v2201 = vunpack.c.l.b16 %v1811
        %v2202 = vunpack.c.h.b16 %v1811
        %v2203 = vunpack.c.l.b16 %v1812
        %v2204 = vunpack.c.h.b16 %v1812
        %v2205 = vunpack.c.l.b16 %v1813
        %v2206 = vunpack.c.h.b16 %v1813
        %v2207 = vunpack.c.l.b16 %v1814
        %v2208 = vunpack.c.h.b16 %v1814
        %v2209 = vunpack.c.l.b16 %v1815
        %v2210 = vunpack.c.h.b16 %v1815
        %v2211 = vunpack.c.l.b16 %v1816
        %v2212 = vunpack.c.h.b16 %v1816
        %v2213 = vunpack.c.l.b16 %v1817
        %v2214 = vunpack.c.h.b16 %v1817
        %v2215 = vunpack.c.l.b16 %v1818
        %v2216 = vunpack.c.h.b16 %v1818
        %v2217 = vunpack.c.l.b16 %v1819
        %v2218 = vunpack.c.h.b16 %v1819
        %v2219 = vunpack.c.l.b16 %v1820
        %v2220 = vunpack.c.h.b16 %v1820
        %v2221 = vunpack.c.l.b16 %v1821
        %v2222 = vunpack.c.h.b16 %v1821
        %v2223 = vunpack.c.l.b16 %v1822
        %v2224 = vunpack.c.h.b16 %v1822
        %v2225 = vunpack.c.l.b16 %v1823
        %v2226 = vunpack.c.h.b16 %v1823
        %v2227 = vunpack.c.l.b16 %v1824
        %v2228 = vunpack.c.h.b16 %v1824
        %v2229 = vunpack.c.l.b16 %v1825
        %v2230 = vunpack.c.h.b16 %v1825
        %v2231 = vunpack.c.l.b16 %v1826
        %v2232 = vunpack.c.h.b16 %v1826
        %v2233 = vunpack.c.l.b16 %v1827
        %v2234 = vunpack.c.h.b16 %v1827
        %v2235 = vunpack.c.l.b16 %v1828
        %v2236 = vunpack.c.h.b16 %v1828
        %v2237 = vunpack.c.l.b16 %v1829
        %v2238 = vunpack.c.h.b16 %v1829
        %v2239 = vunpack.c.l.b16 %v1830
        %v2240 = vunpack.c.h.b16 %v1830
        %v2241 = vunpack.c.l.b16 %v1831
        %v2242 = vunpack.c.h.b16 %v1831
        %v2243 = vunpack.c.l.b16 %v1832
        %v2244 = vunpack.c.h.b16 %v1832
        %v2245 = vunpack.c.l.b16 %v1833
        %v2246 = vunpack.c.h.b16 %v1833
        %v2247 = vunpack.c.l.b16 %v1834
        %v2248 = vunpack.c.h.b16 %v1834
        %v2249 = vunpack.c.l.b16 %v1835
        %v2250 = vunpack.c.h.b16 %v1835
        %v2251 = vunpack.c.l.b16 %v1836
        %v2252 = vunpack.c.h.b16 %v1836
        %v2253 = vunpack.c.l.b16 %v1837
        %v2254 = vunpack.c.h.b16 %v1837
        %v2255 = vunpack.c.l.b16 %v1838
        %v2256 = vunpack.c.h.b16 %v1838
        %v2257 = vunpack.c.l.b16 %v1839
        %v2258 = vunpack.c.h.b16 %v1839
        %v2259 = vunpack.c.l.b16 %v1840
        %v2260 = vunpack.c.h.b16 %v1840
        %v2261 = vunpack.c.l.b16 %v1841
        %v2262 = vunpack.c.h.b16 %v1841
        %v2263 = vunpack.c.l.b16 %v1842
        %v2264 = vunpack.c.h.b16 %v1842
        %v2265 = vunpack.c.l.b16 %v1843
        %v2266 = vunpack.c.h.b16 %v1843
        %v2267 = vunpack.c.l.b16 %v1844
        %v2268 = vunpack.c.h.b16 %v1844
        %v2269 = vunpack.c.l.b16 %v1845
        %v2270 = vunpack.c.h.b16 %v1845
        %v2271 = vunpack.c.l.b16 %v1846
        %v2272 = vunpack.c.h.b16 %v1846
        %v2273 = vpack.c.b16 %v2025, %v2017
        %v2274 = vpack.c.b16 %v2026, %v2018
        %v2275 = vpack.c.b16 %v2027, %v2019
        %v2276 = vpack.c.b16 %v2028, %v2020
        %v2277 = vpack.c.b16 %v2029, %v2021
        %v2278 = vpack.c.b16 %v2030, %v2022
        %v2279 = vpack.c.b16 %v2031, %v2023
        %v2280 = vpack.c.b16 %v2032, %v2024
        %v2281 = vpack.c.b16 %v2041, %v2033
        %v2282 = vpack.c.b16 %v2042, %v2034
        %v2283 = vpack.c.b16 %v2043, %v2035
        %v2284 = vpack.c.b16 %v2044, %v2036
        %v2285 = vpack.c.b16 %v2045, %v2037
        %v2286 = vpack.c.b16 %v2046, %v2038
        %v2287 = vpack.c.b16 %v2047, %v2039
        %v2288 = vpack.c.b16 %v2048, %v2040
        %v2289 = vpack.c.b16 %v2057, %v2049
        %v2290 = vpack.c.b16 %v2058, %v2050
        %v2291 = vpack.c.b16 %v2059, %v2051
        %v2292 = vpack.c.b16 %v2060, %v2052
        %v2293 = vpack.c.b16 %v2061, %v2053
        %v2294 = vpack.c.b16 %v2062, %v2054
        %v2295 = vpack.c.b16 %v2063, %v2055
        %v2296 = vpack.c.b16 %v2064, %v2056
        %v2297 = vpack.c.b16 %v2073, %v2065
        %v2298 = vpack.c.b16 %v2074, %v2066
        %v2299 = vpack.c.b16 %v2075, %v2067
        %v2300 = vpack.c.b16 %v2076, %v2068
        %v2301 = vpack.c.b16 %v2077, %v2069
        %v2302 = vpack.c.b16 %v2078, %v2070
        %v2303 = vpack.c.b16 %v2079, %v2071
        %v2304 = vpack.c.b16 %v2080, %v2072
        %v2305 = vpack.c.b16 %v2089, %v2081
        %v2306 = vpack.c.b16 %v2090, %v2082
        %v2307 = vpack.c.b16 %v2091, %v2083
        %v2308 = vpack.c.b16 %v2092, %v2084
        %v2309 = vpack.c.b16 %v2093, %v2085
        %v2310 = vpack.c.b16 %v2094, %v2086
        %v2311 = vpack.c.b16 %v2095, %v2087
        %v2312 = vpack.c.b16 %v2096, %v2088
        %v2313 = vpack.c.b16 %v2105, %v2097
        %v2314 = vpack.c.b16 %v2106, %v2098
        %v2315 = vpack.c.b16 %v2107, %v2099
        %v2316 = vpack.c.b16 %v2108, %v2100
        %v2317 = vpack.c.b16 %v2109, %v2101
        %v2318 = vpack.c.b16 %v2110, %v2102
        %v2319 = vpack.c.b16 %v2111, %v2103
        %v2320 = vpack.c.b16 %v2112, %v2104
        %v2321 = vpack.c.b16 %v2121, %v2113
        %v2322 = vpack.c.b16 %v2122, %v2114
        %v2323 = vpack.c.b16 %v2123, %v2115
        %v2324 = vpack.c.b16 %v2124, %v2116
        %v2325 = vpack.c.b16 %v2125, %v2117
        %v2326 = vpack.c.b16 %v2126, %v2118
        %v2327 = vpack.c.b16 %v2127, %v2119
        %v2328 = vpack.c.b16 %v2128, %v2120
        %v2329 = vpack.c.b16 %v2137, %v2129
        %v2330 = vpack.c.b16 %v2138, %v2130
        %v2331 = vpack.c.b16 %v2139, %v2131
        %v2332 = vpack.c.b16 %v2140, %v2132
        %v2333 = vpack.c.b16 %v2141, %v2133
        %v2334 = vpack.c.b16 %v2142, %v2134
        %v2335 = vpack.c.b16 %v2143, %v2135
        %v2336 = vpack.c.b16 %v2144, %v2136
        %v2337 = vpack.c.b16 %v2153, %v2145
        %v2338 = vpack.c.b16 %v2154, %v2146
        %v2339 = vpack.c.b16 %v2155, %v2147
        %v2340 = vpack.c.b16 %v2156, %v2148
        %v2341 = vpack.c.b16 %v2157, %v2149
        %v2342 = vpack.c.b16 %v2158, %v2150
        %v2343 = vpack.c.b16 %v2159, %v2151
        %v2344 = vpack.c.b16 %v2160, %v2152
        %v2345 = vpack.c.b16 %v2169, %v2161
        %v2346 = vpack.c.b16 %v2170, %v2162
        %v2347 = vpack.c.b16 %v2171, %v2163
        %v2348 = vpack.c.b16 %v2172, %v2164
        %v2349 = vpack.c.b16 %v2173, %v2165
        %v2350 = vpack.c.b16 %v2174, %v2166
        %v2351 = vpack.c.b16 %v2175, %v2167
        %v2352 = vpack.c.b16 %v2176, %v2168
        %v2353 = vpack.c.b16 %v2185, %v2177
        %v2354 = vpack.c.b16 %v2186, %v2178
        %v2355 = vpack.c.b16 %v2187, %v2179
        %v2356 = vpack.c.b16 %v2188, %v2180
        %v2357 = vpack.c.b16 %v2189, %v2181
        %v2358 = vpack.c.b16 %v2190, %v2182
        %v2359 = vpack.c.b16 %v2191, %v2183
        %v2360 = vpack.c.b16 %v2192, %v2184
        %v2361 = vpack.c.b16 %v2201, %v2193
        %v2362 = vpack.c.b16 %v2202, %v2194
        %v2363 = vpack.c.b16 %v2203, %v2195
        %v2364 = vpack.c.b16 %v2204, %v2196
        %v2365 = vpack.c.b16 %v2205, %v2197
        %v2366 = vpack.c.b16 %v2206, %v2198
        %v2367 = vpack.c.b16 %v2207, %v2199
        %v2368 = vpack.c.b16 %v2208, %v2200
        %v2369 = vpack.c.b16 %v2217, %v2209
        %v2370 = vpack.c.b16 %v2218, %v2210
        %v2371 = vpack.c.b16 %v2219, %v2211
        %v2372 = vpack.c.b16 %v2220, %v2212
        %v2373 = vpack.c.b16 %v2221, %v2213
        %v2374 = vpack.c.b16 %v2222, %v2214
        %v2375 = vpack.c.b16 %v2223, %v2215
        %v2376 = vpack.c.b16 %v2224, %v2216
        %v2377 = vpack.c.b16 %v2233, %v2225
        %v2378 = vpack.c.b16 %v2234, %v2226
        %v2379 = vpack.c.b16 %v2235, %v2227
        %v2380 = vpack.c.b16 %v2236, %v2228
        %v2381 = vpack.c.b16 %v2237, %v2229
        %v2382 = vpack.c.b16 %v2238, %v2230
        %v2383 = vpack.c.b16 %v2239, %v2231
        %v2384 = vpack.c.b16 %v2240, %v2232
        %v2385 = vpack.c.b16 %v2249, %v2241
        %v2386 = vpack.c.b16 %v2250, %v2242
        %v2387 = vpack.c.b16 %v2251, %v2243
        %v2388 = vpack.c.b16 %v2252, %v2244
        %v2389 = vpack.c.b16 %v2253, %v2245
        %v2390 = vpack.c.b16 %v2254, %v2246
        %v2391 = vpack.c.b16 %v2255, %v2247
        %v2392 = vpack.c.b16 %v2256, %v2248
        %v2393 = vpack.c.b16 %v2265, %v2257
        %v2394 = vpack.c.b16 %v2266, %v2258
        %v2395 = vpack.c.b16 %v2267, %v2259
        %v2396 = vpack.c.b16 %v2268, %v2260
        %v2397 = vpack.c.b16 %v2269, %v2261
        %v2398 = vpack.c.b16 %v2270, %v2262
        %v2399 = vpack.c.b16 %v2271, %v2263
        %v2400 = vpack.c.b16 %v2272, %v2264
        %2529 = vmatprep.subr.bf16.mxu0 %v2330
        %2530 = vmatpush1.bf16.msra.mxu0 %v2329
        %2531 = vmatprep.subr.bf16.mxu0 %v2322
        %2532 = vmatpush1.bf16.msra.mxu0 %v2321
        %2533 = vmatprep.subr.bf16.mxu0 %v2314
        %2534 = vmatpush1.bf16.msra.mxu0 %v2313
        %2535 = vmatprep.subr.bf16.mxu0 %v2306
        %2536 = vmatpush1.bf16.msra.mxu0 %v2305
        %2537 = vmatprep.subr.bf16.mxu0 %v2298
        %2538 = vmatpush1.bf16.msra.mxu0 %v2297
        %2539 = vmatprep.subr.bf16.mxu0 %v2290
        %2540 = vmatpush1.bf16.msra.mxu0 %v2289
        %2541 = vmatprep.subr.bf16.mxu0 %v2282
        %2542 = vmatpush1.bf16.msra.mxu0 %v2281
        %2543 = vmatprep.subr.bf16.mxu0 %v2274
        %2544 = vmatpush1.bf16.msra.mxu0 %v2273
        %2545 = vmatprep.subr.bf16.mxu0 %v2394
        %2546 = vmatpush2.bf16.msra.mxu0 %v2393
        %2547 = vmatprep.subr.bf16.mxu0 %v2386
        %2548 = vmatpush2.bf16.msra.mxu0 %v2385
        %2549 = vmatprep.subr.bf16.mxu0 %v2378
        %2550 = vmatpush2.bf16.msra.mxu0 %v2377
        %2551 = vmatprep.subr.bf16.mxu0 %v2370
        %2552 = vmatpush2.bf16.msra.mxu0 %v2369
        %2553 = vmatprep.subr.bf16.mxu0 %v2362
        %2554 = vmatpush2.bf16.msra.mxu0 %v2361
        %2555 = vmatprep.subr.bf16.mxu0 %v2354
        %2556 = vmatpush2.bf16.msra.mxu0 %v2353
        %2557 = vmatprep.subr.bf16.mxu0 %v2346
        %2558 = vmatpush2.bf16.msra.mxu0 %v2345
        %2559 = vmatprep.subr.bf16.mxu0 %v2338
        %2560 = vmatpush2.bf16.msra.mxu0 %v2337
        %2561 = vmatprep.mubr.bf16.mxu0 %v1688
        %2562 = vmatmul.mubr.bf16.gmra.mxu0 %v1687
        %v2563 = vpop.f32.mrf.mxu0
        %v2564 = vadd.f32 %v1852, %v2563
        %v2565 = vpop.f32.mrf.mxu0
        %v2566 = vadd.f32 %v1856, %v2565
        %v2567 = vpop.f32.mrf.mxu0
        %v2568 = vadd.f32 %v1852, %v2567
        %v2569 = vpop.f32.mrf.mxu0
        %v2570 = vadd.f32 %v1856, %v2569
        %2571 = vmatprep.mubr.bf16.mxu0 %v1690
        %2572 = vmatmul.mubr.bf16.gmra.mxu0 %v1689
        %v2573 = vpop.f32.mrf.mxu0
        %v2574 = vadd.f32 %v1852, %v2573
        %v2575 = vpop.f32.mrf.mxu0
        %v2576 = vadd.f32 %v1856, %v2575
        %v2577 = vpop.f32.mrf.mxu0
        %v2578 = vadd.f32 %v1852, %v2577
        %v2579 = vpop.f32.mrf.mxu0
        %v2580 = vadd.f32 %v1856, %v2579
        %2581 = vmatprep.mubr.bf16.mxu0 %v1692
        %2582 = vmatmul.mubr.bf16.gmra.mxu0 %v1691
        %v2583 = vpop.f32.mrf.mxu0
        %v2584 = vadd.f32 %v1852, %v2583
        %v2585 = vpop.f32.mrf.mxu0
        %v2586 = vadd.f32 %v1856, %v2585
        %v2587 = vpop.f32.mrf.mxu0
        %v2588 = vadd.f32 %v1852, %v2587
        %v2589 = vpop.f32.mrf.mxu0
        %v2590 = vadd.f32 %v1856, %v2589
        %2591 = vmatprep.mubr.bf16.mxu0 %v1694
        %2592 = vmatmul.mubr.bf16.gmra.mxu0 %v1693
        %v2593 = vpop.f32.mrf.mxu0
        %v2594 = vadd.f32 %v1852, %v2593
        %v2595 = vpop.f32.mrf.mxu0
        %v2596 = vadd.f32 %v1856, %v2595
        %v2597 = vpop.f32.mrf.mxu0
        %v2598 = vadd.f32 %v1852, %v2597
        %v2599 = vpop.f32.mrf.mxu0
        %v2600 = vadd.f32 %v1856, %v2599
        %2601 = vmatprep.mubr.bf16.mxu0 %v1696
        %2602 = vmatmul.mubr.bf16.gmra.mxu0 %v1695
        %v2603 = vpop.f32.mrf.mxu0
        %v2604 = vadd.f32 %v1852, %v2603
        %v2605 = vpop.f32.mrf.mxu0
        %v2606 = vadd.f32 %v1856, %v2605
        %v2607 = vpop.f32.mrf.mxu0
        %v2608 = vadd.f32 %v1852, %v2607
        %v2609 = vpop.f32.mrf.mxu0
        %v2610 = vadd.f32 %v1856, %v2609
        %2611 = vmatprep.mubr.bf16.mxu0 %v1698
        %2612 = vmatmul.mubr.bf16.gmra.mxu0 %v1697
        %v2613 = vpop.f32.mrf.mxu0
        %v2614 = vadd.f32 %v1852, %v2613
        %v2615 = vpop.f32.mrf.mxu0
        %v2616 = vadd.f32 %v1856, %v2615
        %v2617 = vpop.f32.mrf.mxu0
        %v2618 = vadd.f32 %v1852, %v2617
        %v2619 = vpop.f32.mrf.mxu0
        %v2620 = vadd.f32 %v1856, %v2619
        %2621 = vmatprep.mubr.bf16.mxu0 %v1700
        %2622 = vmatmul.mubr.bf16.gmra.mxu0 %v1699
        %v2623 = vpop.f32.mrf.mxu0
        %v2624 = vadd.f32 %v1852, %v2623
        %v2625 = vpop.f32.mrf.mxu0
        %v2626 = vadd.f32 %v1856, %v2625
        %v2627 = vpop.f32.mrf.mxu0
        %v2628 = vadd.f32 %v1852, %v2627
        %v2629 = vpop.f32.mrf.mxu0
        %v2630 = vadd.f32 %v1856, %v2629
        %2631 = vmatprep.mubr.bf16.mxu0 %v1702
        %2632 = vmatmul.mubr.bf16.gmra.mxu0 %v1701
        %v2633 = vpop.f32.mrf.mxu0
        %v2634 = vadd.f32 %v1852, %v2633
        %v2635 = vpop.f32.mrf.mxu0
        %v2636 = vadd.f32 %v1856, %v2635
        %v2637 = vpop.f32.mrf.mxu0
        %v2638 = vadd.f32 %v1852, %v2637
        %v2639 = vpop.f32.mrf.mxu0
        %v2640 = vadd.f32 %v1856, %v2639
        %2641 = vmatprep.mubr.bf16.mxu0 %v1704
        %2642 = vmatmul.mubr.bf16.gmra.mxu0 %v1703
        %v2643 = vpop.f32.mrf.mxu0
        %v2644 = vadd.f32 %v1852, %v2643
        %v2645 = vpop.f32.mrf.mxu0
        %v2646 = vadd.f32 %v1856, %v2645
        %v2647 = vpop.f32.mrf.mxu0
        %v2648 = vadd.f32 %v1852, %v2647
        %v2649 = vpop.f32.mrf.mxu0
        %v2650 = vadd.f32 %v1856, %v2649
        %2651 = vmatprep.mubr.bf16.mxu0 %v1706
        %2652 = vmatmul.mubr.bf16.gmra.mxu0 %v1705
        %v2653 = vpop.f32.mrf.mxu0
        %v2654 = vadd.f32 %v1852, %v2653
        %v2655 = vpop.f32.mrf.mxu0
        %v2656 = vadd.f32 %v1856, %v2655
        %v2657 = vpop.f32.mrf.mxu0
        %v2658 = vadd.f32 %v1852, %v2657
        %v2659 = vpop.f32.mrf.mxu0
        %v2660 = vadd.f32 %v1856, %v2659
        %2661 = vmatprep.mubr.bf16.mxu0 %v1708
        %2662 = vmatmul.mubr.bf16.gmra.mxu0 %v1707
        %v2663 = vpop.f32.mrf.mxu0
        %v2664 = vadd.f32 %v1852, %v2663
        %v2665 = vpop.f32.mrf.mxu0
        %v2666 = vadd.f32 %v1856, %v2665
        %v2667 = vpop.f32.mrf.mxu0
        %v2668 = vadd.f32 %v1852, %v2667
        %v2669 = vpop.f32.mrf.mxu0
        %v2670 = vadd.f32 %v1856, %v2669
        %2671 = vmatprep.mubr.bf16.mxu0 %v1710
        %2672 = vmatmul.mubr.bf16.gmra.mxu0 %v1709
        %v2673 = vpop.f32.mrf.mxu0
        %v2674 = vadd.f32 %v1852, %v2673
        %v2675 = vpop.f32.mrf.mxu0
        %v2676 = vadd.f32 %v1856, %v2675
        %v2677 = vpop.f32.mrf.mxu0
        %v2678 = vadd.f32 %v1852, %v2677
        %v2679 = vpop.f32.mrf.mxu0
        %v2680 = vadd.f32 %v1856, %v2679
        %2681 = vmatprep.mubr.bf16.mxu0 %v1712
        %2682 = vmatmul.mubr.bf16.gmra.mxu0 %v1711
        %v2683 = vpop.f32.mrf.mxu0
        %v2684 = vadd.f32 %v1852, %v2683
        %v2685 = vpop.f32.mrf.mxu0
        %v2686 = vadd.f32 %v1856, %v2685
        %v2687 = vpop.f32.mrf.mxu0
        %v2688 = vadd.f32 %v1852, %v2687
        %v2689 = vpop.f32.mrf.mxu0
        %v2690 = vadd.f32 %v1856, %v2689
        %2691 = vmatprep.mubr.bf16.mxu0 %v1714
        %2692 = vmatmul.mubr.bf16.gmra.mxu0 %v1713
        %v2693 = vpop.f32.mrf.mxu0
        %v2694 = vadd.f32 %v1852, %v2693
        %v2695 = vpop.f32.mrf.mxu0
        %v2696 = vadd.f32 %v1856, %v2695
        %v2697 = vpop.f32.mrf.mxu0
        %v2698 = vadd.f32 %v1852, %v2697
        %v2699 = vpop.f32.mrf.mxu0
        %v2700 = vadd.f32 %v1856, %v2699
        %2701 = vmatprep.mubr.bf16.mxu0 %v1716
        %2702 = vmatmul.mubr.bf16.gmra.mxu0 %v1715
        %v2703 = vpop.f32.mrf.mxu0
        %v2704 = vadd.f32 %v1852, %v2703
        %v2705 = vpop.f32.mrf.mxu0
        %v2706 = vadd.f32 %v1856, %v2705
        %v2707 = vpop.f32.mrf.mxu0
        %v2708 = vadd.f32 %v1852, %v2707
        %v2709 = vpop.f32.mrf.mxu0
        %v2710 = vadd.f32 %v1856, %v2709
        %2711 = vmatprep.mubr.bf16.mxu0 %v1718
        %2712 = vmatmul.mubr.bf16.gmra.mxu0 %v1717
        %v2713 = vpop.f32.mrf.mxu0
        %v2714 = vadd.f32 %v1852, %v2713
        %v2715 = vpop.f32.mrf.mxu0
        %v2716 = vadd.f32 %v1856, %v2715
        %v2717 = vpop.f32.mrf.mxu0
        %v2718 = vadd.f32 %v1852, %v2717
        %v2719 = vpop.f32.mrf.mxu0
        %v2720 = vadd.f32 %v1856, %v2719
        %2721 = vdwg.mxu0
        %2722 = vmatprep.subr.bf16.mxu0 %v2332
        %2723 = vmatpush1.bf16.msra.mxu0 %v2331
        %2724 = vmatprep.subr.bf16.mxu0 %v2324
        %2725 = vmatpush1.bf16.msra.mxu0 %v2323
        %2726 = vmatprep.subr.bf16.mxu0 %v2316
        %2727 = vmatpush1.bf16.msra.mxu0 %v2315
        %2728 = vmatprep.subr.bf16.mxu0 %v2308
        %2729 = vmatpush1.bf16.msra.mxu0 %v2307
        %2730 = vmatprep.subr.bf16.mxu0 %v2300
        %2731 = vmatpush1.bf16.msra.mxu0 %v2299
        %2732 = vmatprep.subr.bf16.mxu0 %v2292
        %2733 = vmatpush1.bf16.msra.mxu0 %v2291
        %2734 = vmatprep.subr.bf16.mxu0 %v2284
        %2735 = vmatpush1.bf16.msra.mxu0 %v2283
        %2736 = vmatprep.subr.bf16.mxu0 %v2276
        %2737 = vmatpush1.bf16.msra.mxu0 %v2275
        %2738 = vmatprep.subr.bf16.mxu0 %v2396
        %2739 = vmatpush2.bf16.msra.mxu0 %v2395
        %2740 = vmatprep.subr.bf16.mxu0 %v2388
        %2741 = vmatpush2.bf16.msra.mxu0 %v2387
        %2742 = vmatprep.subr.bf16.mxu0 %v2380
        %2743 = vmatpush2.bf16.msra.mxu0 %v2379
        %2744 = vmatprep.subr.bf16.mxu0 %v2372
        %2745 = vmatpush2.bf16.msra.mxu0 %v2371
        %2746 = vmatprep.subr.bf16.mxu0 %v2364
        %2747 = vmatpush2.bf16.msra.mxu0 %v2363
        %2748 = vmatprep.subr.bf16.mxu0 %v2356
        %2749 = vmatpush2.bf16.msra.mxu0 %v2355
        %2750 = vmatprep.subr.bf16.mxu0 %v2348
        %2751 = vmatpush2.bf16.msra.mxu0 %v2347
        %2752 = vmatprep.subr.bf16.mxu0 %v2340
        %2753 = vmatpush2.bf16.msra.mxu0 %v2339
        %2754 = vmatprep.mubr.bf16.mxu0 %v1688
        %2755 = vmatmul.mubr.bf16.gmra.mxu0 %v1687
        %v2756 = vpop.f32.mrf.mxu0
        %v2757 = vadd.f32 %v1860, %v2756
        %v2758 = vpop.f32.mrf.mxu0
        %v2759 = vadd.f32 %v1864, %v2758
        %v2760 = vpop.f32.mrf.mxu0
        %v2761 = vadd.f32 %v1860, %v2760
        %v2762 = vpop.f32.mrf.mxu0
        %v2763 = vadd.f32 %v1864, %v2762
        %2764 = vmatprep.mubr.bf16.mxu0 %v1690
        %2765 = vmatmul.mubr.bf16.gmra.mxu0 %v1689
        %v2766 = vpop.f32.mrf.mxu0
        %v2767 = vadd.f32 %v1860, %v2766
        %v2768 = vpop.f32.mrf.mxu0
        %v2769 = vadd.f32 %v1864, %v2768
        %v2770 = vpop.f32.mrf.mxu0
        %v2771 = vadd.f32 %v1860, %v2770
        %v2772 = vpop.f32.mrf.mxu0
        %v2773 = vadd.f32 %v1864, %v2772
        %2774 = vmatprep.mubr.bf16.mxu0 %v1692
        %2775 = vmatmul.mubr.bf16.gmra.mxu0 %v1691
        %v2776 = vpop.f32.mrf.mxu0
        %v2777 = vadd.f32 %v1860, %v2776
        %v2778 = vpop.f32.mrf.mxu0
        %v2779 = vadd.f32 %v1864, %v2778
        %v2780 = vpop.f32.mrf.mxu0
        %v2781 = vadd.f32 %v1860, %v2780
        %v2782 = vpop.f32.mrf.mxu0
        %v2783 = vadd.f32 %v1864, %v2782
        %2784 = vmatprep.mubr.bf16.mxu0 %v1694
        %2785 = vmatmul.mubr.bf16.gmra.mxu0 %v1693
        %v2786 = vpop.f32.mrf.mxu0
        %v2787 = vadd.f32 %v1860, %v2786
        %v2788 = vpop.f32.mrf.mxu0
        %v2789 = vadd.f32 %v1864, %v2788
        %v2790 = vpop.f32.mrf.mxu0
        %v2791 = vadd.f32 %v1860, %v2790
        %v2792 = vpop.f32.mrf.mxu0
        %v2793 = vadd.f32 %v1864, %v2792
        %2794 = vmatprep.mubr.bf16.mxu0 %v1696
        %2795 = vmatmul.mubr.bf16.gmra.mxu0 %v1695
        %v2796 = vpop.f32.mrf.mxu0
        %v2797 = vadd.f32 %v1860, %v2796
        %v2798 = vpop.f32.mrf.mxu0
        %v2799 = vadd.f32 %v1864, %v2798
        %v2800 = vpop.f32.mrf.mxu0
        %v2801 = vadd.f32 %v1860, %v2800
        %v2802 = vpop.f32.mrf.mxu0
        %v2803 = vadd.f32 %v1864, %v2802
        %2804 = vmatprep.mubr.bf16.mxu0 %v1698
        %2805 = vmatmul.mubr.bf16.gmra.mxu0 %v1697
        %v2806 = vpop.f32.mrf.mxu0
        %v2807 = vadd.f32 %v1860, %v2806
        %v2808 = vpop.f32.mrf.mxu0
        %v2809 = vadd.f32 %v1864, %v2808
        %v2810 = vpop.f32.mrf.mxu0
        %v2811 = vadd.f32 %v1860, %v2810
        %v2812 = vpop.f32.mrf.mxu0
        %v2813 = vadd.f32 %v1864, %v2812
        %2814 = vmatprep.mubr.bf16.mxu0 %v1700
        %2815 = vmatmul.mubr.bf16.gmra.mxu0 %v1699
        %v2816 = vpop.f32.mrf.mxu0
        %v2817 = vadd.f32 %v1860, %v2816
        %v2818 = vpop.f32.mrf.mxu0
        %v2819 = vadd.f32 %v1864, %v2818
        %v2820 = vpop.f32.mrf.mxu0
        %v2821 = vadd.f32 %v1860, %v2820
        %v2822 = vpop.f32.mrf.mxu0
        %v2823 = vadd.f32 %v1864, %v2822
        %2824 = vmatprep.mubr.bf16.mxu0 %v1702
        %2825 = vmatmul.mubr.bf16.gmra.mxu0 %v1701
        %v2826 = vpop.f32.mrf.mxu0
        %v2827 = vadd.f32 %v1860, %v2826
        %v2828 = vpop.f32.mrf.mxu0
        %v2829 = vadd.f32 %v1864, %v2828
        %v2830 = vpop.f32.mrf.mxu0
        %v2831 = vadd.f32 %v1860, %v2830
        %v2832 = vpop.f32.mrf.mxu0
        %v2833 = vadd.f32 %v1864, %v2832
        %2834 = vmatprep.mubr.bf16.mxu0 %v1704
        %2835 = vmatmul.mubr.bf16.gmra.mxu0 %v1703
        %v2836 = vpop.f32.mrf.mxu0
        %v2837 = vadd.f32 %v1860, %v2836
        %v2838 = vpop.f32.mrf.mxu0
        %v2839 = vadd.f32 %v1864, %v2838
        %v2840 = vpop.f32.mrf.mxu0
        %v2841 = vadd.f32 %v1860, %v2840
        %v2842 = vpop.f32.mrf.mxu0
        %v2843 = vadd.f32 %v1864, %v2842
        %2844 = vmatprep.mubr.bf16.mxu0 %v1706
        %2845 = vmatmul.mubr.bf16.gmra.mxu0 %v1705
        %v2846 = vpop.f32.mrf.mxu0
        %v2847 = vadd.f32 %v1860, %v2846
        %v2848 = vpop.f32.mrf.mxu0
        %v2849 = vadd.f32 %v1864, %v2848
        %v2850 = vpop.f32.mrf.mxu0
        %v2851 = vadd.f32 %v1860, %v2850
        %v2852 = vpop.f32.mrf.mxu0
        %v2853 = vadd.f32 %v1864, %v2852
        %2854 = vmatprep.mubr.bf16.mxu0 %v1708
        %2855 = vmatmul.mubr.bf16.gmra.mxu0 %v1707
        %v2856 = vpop.f32.mrf.mxu0
        %v2857 = vadd.f32 %v1860, %v2856
        %v2858 = vpop.f32.mrf.mxu0
        %v2859 = vadd.f32 %v1864, %v2858
        %v2860 = vpop.f32.mrf.mxu0
        %v2861 = vadd.f32 %v1860, %v2860
        %v2862 = vpop.f32.mrf.mxu0
        %v2863 = vadd.f32 %v1864, %v2862
        %2864 = vmatprep.mubr.bf16.mxu0 %v1710
        %2865 = vmatmul.mubr.bf16.gmra.mxu0 %v1709
        %v2866 = vpop.f32.mrf.mxu0
        %v2867 = vadd.f32 %v1860, %v2866
        %v2868 = vpop.f32.mrf.mxu0
        %v2869 = vadd.f32 %v1864, %v2868
        %v2870 = vpop.f32.mrf.mxu0
        %v2871 = vadd.f32 %v1860, %v2870
        %v2872 = vpop.f32.mrf.mxu0
        %v2873 = vadd.f32 %v1864, %v2872
        %2874 = vmatprep.mubr.bf16.mxu0 %v1712
        %2875 = vmatmul.mubr.bf16.gmra.mxu0 %v1711
        %v2876 = vpop.f32.mrf.mxu0
        %v2877 = vadd.f32 %v1860, %v2876
        %v2878 = vpop.f32.mrf.mxu0
        %v2879 = vadd.f32 %v1864, %v2878
        %v2880 = vpop.f32.mrf.mxu0
        %v2881 = vadd.f32 %v1860, %v2880
        %v2882 = vpop.f32.mrf.mxu0
        %v2883 = vadd.f32 %v1864, %v2882
        %2884 = vmatprep.mubr.bf16.mxu0 %v1714
        %2885 = vmatmul.mubr.bf16.gmra.mxu0 %v1713
        %v2886 = vpop.f32.mrf.mxu0
        %v2887 = vadd.f32 %v1860, %v2886
        %v2888 = vpop.f32.mrf.mxu0
        %v2889 = vadd.f32 %v1864, %v2888
        %v2890 = vpop.f32.mrf.mxu0
        %v2891 = vadd.f32 %v1860, %v2890
        %v2892 = vpop.f32.mrf.mxu0
        %v2893 = vadd.f32 %v1864, %v2892
        %2894 = vmatprep.mubr.bf16.mxu0 %v1716
        %2895 = vmatmul.mubr.bf16.gmra.mxu0 %v1715
        %v2896 = vpop.f32.mrf.mxu0
        %v2897 = vadd.f32 %v1860, %v2896
        %v2898 = vpop.f32.mrf.mxu0
        %v2899 = vadd.f32 %v1864, %v2898
        %v2900 = vpop.f32.mrf.mxu0
        %v2901 = vadd.f32 %v1860, %v2900
        %v2902 = vpop.f32.mrf.mxu0
        %v2903 = vadd.f32 %v1864, %v2902
        %2904 = vmatprep.mubr.bf16.mxu0 %v1718
        %2905 = vmatmul.mubr.bf16.gmra.mxu0 %v1717
        %v2906 = vpop.f32.mrf.mxu0
        %v2907 = vadd.f32 %v1860, %v2906
        %v2908 = vpop.f32.mrf.mxu0
        %v2909 = vadd.f32 %v1864, %v2908
        %v2910 = vpop.f32.mrf.mxu0
        %v2911 = vadd.f32 %v1860, %v2910
        %v2912 = vpop.f32.mrf.mxu0
        %v2913 = vadd.f32 %v1864, %v2912
        %2914 = vdwg.mxu0
        %2915 = vmatprep.subr.bf16.mxu0 %v2334
        %2916 = vmatpush1.bf16.msra.mxu0 %v2333
        %2917 = vmatprep.subr.bf16.mxu0 %v2326
        %2918 = vmatpush1.bf16.msra.mxu0 %v2325
        %2919 = vmatprep.subr.bf16.mxu0 %v2318
        %2920 = vmatpush1.bf16.msra.mxu0 %v2317
        %2921 = vmatprep.subr.bf16.mxu0 %v2310
        %2922 = vmatpush1.bf16.msra.mxu0 %v2309
        %2923 = vmatprep.subr.bf16.mxu0 %v2302
        %2924 = vmatpush1.bf16.msra.mxu0 %v2301
        %2925 = vmatprep.subr.bf16.mxu0 %v2294
        %2926 = vmatpush1.bf16.msra.mxu0 %v2293
        %2927 = vmatprep.subr.bf16.mxu0 %v2286
        %2928 = vmatpush1.bf16.msra.mxu0 %v2285
        %2929 = vmatprep.subr.bf16.mxu0 %v2278
        %2930 = vmatpush1.bf16.msra.mxu0 %v2277
        %2931 = vmatprep.subr.bf16.mxu0 %v2398
        %2932 = vmatpush2.bf16.msra.mxu0 %v2397
        %2933 = vmatprep.subr.bf16.mxu0 %v2390
        %2934 = vmatpush2.bf16.msra.mxu0 %v2389
        %2935 = vmatprep.subr.bf16.mxu0 %v2382
        %2936 = vmatpush2.bf16.msra.mxu0 %v2381
        %2937 = vmatprep.subr.bf16.mxu0 %v2374
        %2938 = vmatpush2.bf16.msra.mxu0 %v2373
        %2939 = vmatprep.subr.bf16.mxu0 %v2366
        %2940 = vmatpush2.bf16.msra.mxu0 %v2365
        %2941 = vmatprep.subr.bf16.mxu0 %v2358
        %2942 = vmatpush2.bf16.msra.mxu0 %v2357
        %2943 = vmatprep.subr.bf16.mxu0 %v2350
        %2944 = vmatpush2.bf16.msra.mxu0 %v2349
        %2945 = vmatprep.subr.bf16.mxu0 %v2342
        %2946 = vmatpush2.bf16.msra.mxu0 %v2341
        %2947 = vmatprep.mubr.bf16.mxu0 %v1688
        %2948 = vmatmul.mubr.bf16.gmra.mxu0 %v1687
        %v2949 = vpop.f32.mrf.mxu0
        %v2950 = vadd.f32 %v1868, %v2949
        %v2951 = vpop.f32.mrf.mxu0
        %v2952 = vadd.f32 %v1872, %v2951
        %v2953 = vpop.f32.mrf.mxu0
        %v2954 = vadd.f32 %v1868, %v2953
        %v2955 = vpop.f32.mrf.mxu0
        %v2956 = vadd.f32 %v1872, %v2955
        %2957 = vmatprep.mubr.bf16.mxu0 %v1690
        %2958 = vmatmul.mubr.bf16.gmra.mxu0 %v1689
        %v2959 = vpop.f32.mrf.mxu0
        %v2960 = vadd.f32 %v1868, %v2959
        %v2961 = vpop.f32.mrf.mxu0
        %v2962 = vadd.f32 %v1872, %v2961
        %v2963 = vpop.f32.mrf.mxu0
        %v2964 = vadd.f32 %v1868, %v2963
        %v2965 = vpop.f32.mrf.mxu0
        %v2966 = vadd.f32 %v1872, %v2965
        %2967 = vmatprep.mubr.bf16.mxu0 %v1692
        %2968 = vmatmul.mubr.bf16.gmra.mxu0 %v1691
        %v2969 = vpop.f32.mrf.mxu0
        %v2970 = vadd.f32 %v1868, %v2969
        %v2971 = vpop.f32.mrf.mxu0
        %v2972 = vadd.f32 %v1872, %v2971
        %v2973 = vpop.f32.mrf.mxu0
        %v2974 = vadd.f32 %v1868, %v2973
        %v2975 = vpop.f32.mrf.mxu0
        %v2976 = vadd.f32 %v1872, %v2975
        %2977 = vmatprep.mubr.bf16.mxu0 %v1694
        %2978 = vmatmul.mubr.bf16.gmra.mxu0 %v1693
        %v2979 = vpop.f32.mrf.mxu0
        %v2980 = vadd.f32 %v1868, %v2979
        %v2981 = vpop.f32.mrf.mxu0
        %v2982 = vadd.f32 %v1872, %v2981
        %v2983 = vpop.f32.mrf.mxu0
        %v2984 = vadd.f32 %v1868, %v2983
        %v2985 = vpop.f32.mrf.mxu0
        %v2986 = vadd.f32 %v1872, %v2985
        %2987 = vmatprep.mubr.bf16.mxu0 %v1696
        %2988 = vmatmul.mubr.bf16.gmra.mxu0 %v1695
        %v2989 = vpop.f32.mrf.mxu0
        %v2990 = vadd.f32 %v1868, %v2989
        %v2991 = vpop.f32.mrf.mxu0
        %v2992 = vadd.f32 %v1872, %v2991
        %v2993 = vpop.f32.mrf.mxu0
        %v2994 = vadd.f32 %v1868, %v2993
        %v2995 = vpop.f32.mrf.mxu0
        %v2996 = vadd.f32 %v1872, %v2995
        %2997 = vmatprep.mubr.bf16.mxu0 %v1698
        %2998 = vmatmul.mubr.bf16.gmra.mxu0 %v1697
        %v2999 = vpop.f32.mrf.mxu0
        %v3000 = vadd.f32 %v1868, %v2999
        %v3001 = vpop.f32.mrf.mxu0
        %v3002 = vadd.f32 %v1872, %v3001
        %v3003 = vpop.f32.mrf.mxu0
        %v3004 = vadd.f32 %v1868, %v3003
        %v3005 = vpop.f32.mrf.mxu0
        %v3006 = vadd.f32 %v1872, %v3005
        %3007 = vmatprep.mubr.bf16.mxu0 %v1700
        %3008 = vmatmul.mubr.bf16.gmra.mxu0 %v1699
        %v3009 = vpop.f32.mrf.mxu0
        %v3010 = vadd.f32 %v1868, %v3009
        %v3011 = vpop.f32.mrf.mxu0
        %v3012 = vadd.f32 %v1872, %v3011
        %v3013 = vpop.f32.mrf.mxu0
        %v3014 = vadd.f32 %v1868, %v3013
        %v3015 = vpop.f32.mrf.mxu0
        %v3016 = vadd.f32 %v1872, %v3015
        %3017 = vmatprep.mubr.bf16.mxu0 %v1702
        %3018 = vmatmul.mubr.bf16.gmra.mxu0 %v1701
        %v3019 = vpop.f32.mrf.mxu0
        %v3020 = vadd.f32 %v1868, %v3019
        %v3021 = vpop.f32.mrf.mxu0
        %v3022 = vadd.f32 %v1872, %v3021
        %v3023 = vpop.f32.mrf.mxu0
        %v3024 = vadd.f32 %v1868, %v3023
        %v3025 = vpop.f32.mrf.mxu0
        %v3026 = vadd.f32 %v1872, %v3025
        %3027 = vmatprep.mubr.bf16.mxu0 %v1704
        %3028 = vmatmul.mubr.bf16.gmra.mxu0 %v1703
        %v3029 = vpop.f32.mrf.mxu0
        %v3030 = vadd.f32 %v1868, %v3029
        %v3031 = vpop.f32.mrf.mxu0
        %v3032 = vadd.f32 %v1872, %v3031
        %v3033 = vpop.f32.mrf.mxu0
        %v3034 = vadd.f32 %v1868, %v3033
        %v3035 = vpop.f32.mrf.mxu0
        %v3036 = vadd.f32 %v1872, %v3035
        %3037 = vmatprep.mubr.bf16.mxu0 %v1706
        %3038 = vmatmul.mubr.bf16.gmra.mxu0 %v1705
        %v3039 = vpop.f32.mrf.mxu0
        %v3040 = vadd.f32 %v1868, %v3039
        %v3041 = vpop.f32.mrf.mxu0
        %v3042 = vadd.f32 %v1872, %v3041
        %v3043 = vpop.f32.mrf.mxu0
        %v3044 = vadd.f32 %v1868, %v3043
        %v3045 = vpop.f32.mrf.mxu0
        %v3046 = vadd.f32 %v1872, %v3045
        %3047 = vmatprep.mubr.bf16.mxu0 %v1708
        %3048 = vmatmul.mubr.bf16.gmra.mxu0 %v1707
        %v3049 = vpop.f32.mrf.mxu0
        %v3050 = vadd.f32 %v1868, %v3049
        %v3051 = vpop.f32.mrf.mxu0
        %v3052 = vadd.f32 %v1872, %v3051
        %v3053 = vpop.f32.mrf.mxu0
        %v3054 = vadd.f32 %v1868, %v3053
        %v3055 = vpop.f32.mrf.mxu0
        %v3056 = vadd.f32 %v1872, %v3055
        %3057 = vmatprep.mubr.bf16.mxu0 %v1710
        %3058 = vmatmul.mubr.bf16.gmra.mxu0 %v1709
        %v3059 = vpop.f32.mrf.mxu0
        %v3060 = vadd.f32 %v1868, %v3059
        %v3061 = vpop.f32.mrf.mxu0
        %v3062 = vadd.f32 %v1872, %v3061
        %v3063 = vpop.f32.mrf.mxu0
        %v3064 = vadd.f32 %v1868, %v3063
        %v3065 = vpop.f32.mrf.mxu0
        %v3066 = vadd.f32 %v1872, %v3065
        %3067 = vmatprep.mubr.bf16.mxu0 %v1712
        %3068 = vmatmul.mubr.bf16.gmra.mxu0 %v1711
        %v3069 = vpop.f32.mrf.mxu0
        %v3070 = vadd.f32 %v1868, %v3069
        %v3071 = vpop.f32.mrf.mxu0
        %v3072 = vadd.f32 %v1872, %v3071
        %v3073 = vpop.f32.mrf.mxu0
        %v3074 = vadd.f32 %v1868, %v3073
        %v3075 = vpop.f32.mrf.mxu0
        %v3076 = vadd.f32 %v1872, %v3075
        %3077 = vmatprep.mubr.bf16.mxu0 %v1714
        %3078 = vmatmul.mubr.bf16.gmra.mxu0 %v1713
        %v3079 = vpop.f32.mrf.mxu0
        %v3080 = vadd.f32 %v1868, %v3079
        %v3081 = vpop.f32.mrf.mxu0
        %v3082 = vadd.f32 %v1872, %v3081
        %v3083 = vpop.f32.mrf.mxu0
        %v3084 = vadd.f32 %v1868, %v3083
        %v3085 = vpop.f32.mrf.mxu0
        %v3086 = vadd.f32 %v1872, %v3085
        %3087 = vmatprep.mubr.bf16.mxu0 %v1716
        %3088 = vmatmul.mubr.bf16.gmra.mxu0 %v1715
        %v3089 = vpop.f32.mrf.mxu0
        %v3090 = vadd.f32 %v1868, %v3089
        %v3091 = vpop.f32.mrf.mxu0
        %v3092 = vadd.f32 %v1872, %v3091
        %v3093 = vpop.f32.mrf.mxu0
        %v3094 = vadd.f32 %v1868, %v3093
        %v3095 = vpop.f32.mrf.mxu0
        %v3096 = vadd.f32 %v1872, %v3095
        %3097 = vmatprep.mubr.bf16.mxu0 %v1718
        %3098 = vmatmul.mubr.bf16.gmra.mxu0 %v1717
        %v3099 = vpop.f32.mrf.mxu0
        %v3100 = vadd.f32 %v1868, %v3099
        %v3101 = vpop.f32.mrf.mxu0
        %v3102 = vadd.f32 %v1872, %v3101
        %v3103 = vpop.f32.mrf.mxu0
        %v3104 = vadd.f32 %v1868, %v3103
        %v3105 = vpop.f32.mrf.mxu0
        %v3106 = vadd.f32 %v1872, %v3105
        %3107 = vdwg.mxu0
        %3108 = vmatprep.subr.bf16.mxu0 %v2336
        %3109 = vmatpush1.bf16.msra.mxu0 %v2335
        %3110 = vmatprep.subr.bf16.mxu0 %v2328
        %3111 = vmatpush1.bf16.msra.mxu0 %v2327
        %3112 = vmatprep.subr.bf16.mxu0 %v2320
        %3113 = vmatpush1.bf16.msra.mxu0 %v2319
        %3114 = vmatprep.subr.bf16.mxu0 %v2312
        %3115 = vmatpush1.bf16.msra.mxu0 %v2311
        %3116 = vmatprep.subr.bf16.mxu0 %v2304
        %3117 = vmatpush1.bf16.msra.mxu0 %v2303
        %3118 = vmatprep.subr.bf16.mxu0 %v2296
        %3119 = vmatpush1.bf16.msra.mxu0 %v2295
        %3120 = vmatprep.subr.bf16.mxu0 %v2288
        %3121 = vmatpush1.bf16.msra.mxu0 %v2287
        %3122 = vmatprep.subr.bf16.mxu0 %v2280
        %3123 = vmatpush1.bf16.msra.mxu0 %v2279
        %3124 = vmatprep.subr.bf16.mxu0 %v2400
        %3125 = vmatpush2.bf16.msra.mxu0 %v2399
        %3126 = vmatprep.subr.bf16.mxu0 %v2392
        %3127 = vmatpush2.bf16.msra.mxu0 %v2391
        %3128 = vmatprep.subr.bf16.mxu0 %v2384
        %3129 = vmatpush2.bf16.msra.mxu0 %v2383
        %3130 = vmatprep.subr.bf16.mxu0 %v2376
        %3131 = vmatpush2.bf16.msra.mxu0 %v2375
        %3132 = vmatprep.subr.bf16.mxu0 %v2368
        %3133 = vmatpush2.bf16.msra.mxu0 %v2367
        %3134 = vmatprep.subr.bf16.mxu0 %v2360
        %3135 = vmatpush2.bf16.msra.mxu0 %v2359
        %3136 = vmatprep.subr.bf16.mxu0 %v2352
        %3137 = vmatpush2.bf16.msra.mxu0 %v2351
        %3138 = vmatprep.subr.bf16.mxu0 %v2344
        %3139 = vmatpush2.bf16.msra.mxu0 %v2343
        %3140 = vmatprep.mubr.bf16.mxu0 %v1688
        %3141 = vmatmul.mubr.bf16.gmra.mxu0 %v1687
        %v3142 = vpop.f32.mrf.mxu0
        %v3143 = vadd.f32 %v1876, %v3142
        %v3144 = vpop.f32.mrf.mxu0
        %v3145 = vadd.f32 %v1880, %v3144
        %v3146 = vpop.f32.mrf.mxu0
        %v3147 = vadd.f32 %v1876, %v3146
        %v3148 = vpop.f32.mrf.mxu0
        %v3149 = vadd.f32 %v1880, %v3148
        %3150 = vmatprep.mubr.bf16.mxu0 %v1690
        %3151 = vmatmul.mubr.bf16.gmra.mxu0 %v1689
        %v3152 = vpop.f32.mrf.mxu0
        %v3153 = vadd.f32 %v1876, %v3152
        %v3154 = vpop.f32.mrf.mxu0
        %v3155 = vadd.f32 %v1880, %v3154
        %v3156 = vpop.f32.mrf.mxu0
        %v3157 = vadd.f32 %v1876, %v3156
        %v3158 = vpop.f32.mrf.mxu0
        %v3159 = vadd.f32 %v1880, %v3158
        %3160 = vmatprep.mubr.bf16.mxu0 %v1692
        %3161 = vmatmul.mubr.bf16.gmra.mxu0 %v1691
        %v3162 = vpop.f32.mrf.mxu0
        %v3163 = vadd.f32 %v1876, %v3162
        %v3164 = vpop.f32.mrf.mxu0
        %v3165 = vadd.f32 %v1880, %v3164
        %v3166 = vpop.f32.mrf.mxu0
        %v3167 = vadd.f32 %v1876, %v3166
        %v3168 = vpop.f32.mrf.mxu0
        %v3169 = vadd.f32 %v1880, %v3168
        %3170 = vmatprep.mubr.bf16.mxu0 %v1694
        %3171 = vmatmul.mubr.bf16.gmra.mxu0 %v1693
        %v3172 = vpop.f32.mrf.mxu0
        %v3173 = vadd.f32 %v1876, %v3172
        %v3174 = vpop.f32.mrf.mxu0
        %v3175 = vadd.f32 %v1880, %v3174
        %v3176 = vpop.f32.mrf.mxu0
        %v3177 = vadd.f32 %v1876, %v3176
        %v3178 = vpop.f32.mrf.mxu0
        %v3179 = vadd.f32 %v1880, %v3178
        %3180 = vmatprep.mubr.bf16.mxu0 %v1696
        %3181 = vmatmul.mubr.bf16.gmra.mxu0 %v1695
        %v3182 = vpop.f32.mrf.mxu0
        %v3183 = vadd.f32 %v1876, %v3182
        %v3184 = vpop.f32.mrf.mxu0
        %v3185 = vadd.f32 %v1880, %v3184
        %v3186 = vpop.f32.mrf.mxu0
        %v3187 = vadd.f32 %v1876, %v3186
        %v3188 = vpop.f32.mrf.mxu0
        %v3189 = vadd.f32 %v1880, %v3188
        %3190 = vmatprep.mubr.bf16.mxu0 %v1698
        %3191 = vmatmul.mubr.bf16.gmra.mxu0 %v1697
        %v3192 = vpop.f32.mrf.mxu0
        %v3193 = vadd.f32 %v1876, %v3192
        %v3194 = vpop.f32.mrf.mxu0
        %v3195 = vadd.f32 %v1880, %v3194
        %v3196 = vpop.f32.mrf.mxu0
        %v3197 = vadd.f32 %v1876, %v3196
        %v3198 = vpop.f32.mrf.mxu0
        %v3199 = vadd.f32 %v1880, %v3198
        %3200 = vmatprep.mubr.bf16.mxu0 %v1700
        %3201 = vmatmul.mubr.bf16.gmra.mxu0 %v1699
        %v3202 = vpop.f32.mrf.mxu0
        %v3203 = vadd.f32 %v1876, %v3202
        %v3204 = vpop.f32.mrf.mxu0
        %v3205 = vadd.f32 %v1880, %v3204
        %v3206 = vpop.f32.mrf.mxu0
        %v3207 = vadd.f32 %v1876, %v3206
        %v3208 = vpop.f32.mrf.mxu0
        %v3209 = vadd.f32 %v1880, %v3208
        %3210 = vmatprep.mubr.bf16.mxu0 %v1702
        %3211 = vmatmul.mubr.bf16.gmra.mxu0 %v1701
        %v3212 = vpop.f32.mrf.mxu0
        %v3213 = vadd.f32 %v1876, %v3212
        %v3214 = vpop.f32.mrf.mxu0
        %v3215 = vadd.f32 %v1880, %v3214
        %v3216 = vpop.f32.mrf.mxu0
        %v3217 = vadd.f32 %v1876, %v3216
        %v3218 = vpop.f32.mrf.mxu0
        %v3219 = vadd.f32 %v1880, %v3218
        %3220 = vmatprep.mubr.bf16.mxu0 %v1704
        %3221 = vmatmul.mubr.bf16.gmra.mxu0 %v1703
        %v3222 = vpop.f32.mrf.mxu0
        %v3223 = vadd.f32 %v1876, %v3222
        %v3224 = vpop.f32.mrf.mxu0
        %v3225 = vadd.f32 %v1880, %v3224
        %v3226 = vpop.f32.mrf.mxu0
        %v3227 = vadd.f32 %v1876, %v3226
        %v3228 = vpop.f32.mrf.mxu0
        %v3229 = vadd.f32 %v1880, %v3228
        %3230 = vmatprep.mubr.bf16.mxu0 %v1706
        %3231 = vmatmul.mubr.bf16.gmra.mxu0 %v1705
        %v3232 = vpop.f32.mrf.mxu0
        %v3233 = vadd.f32 %v1876, %v3232
        %v3234 = vpop.f32.mrf.mxu0
        %v3235 = vadd.f32 %v1880, %v3234
        %v3236 = vpop.f32.mrf.mxu0
        %v3237 = vadd.f32 %v1876, %v3236
        %v3238 = vpop.f32.mrf.mxu0
        %v3239 = vadd.f32 %v1880, %v3238
        %3240 = vmatprep.mubr.bf16.mxu0 %v1708
        %3241 = vmatmul.mubr.bf16.gmra.mxu0 %v1707
        %v3242 = vpop.f32.mrf.mxu0
        %v3243 = vadd.f32 %v1876, %v3242
        %v3244 = vpop.f32.mrf.mxu0
        %v3245 = vadd.f32 %v1880, %v3244
        %v3246 = vpop.f32.mrf.mxu0
        %v3247 = vadd.f32 %v1876, %v3246
        %v3248 = vpop.f32.mrf.mxu0
        %v3249 = vadd.f32 %v1880, %v3248
        %3250 = vmatprep.mubr.bf16.mxu0 %v1710
        %3251 = vmatmul.mubr.bf16.gmra.mxu0 %v1709
        %v3252 = vpop.f32.mrf.mxu0
        %v3253 = vadd.f32 %v1876, %v3252
        %v3254 = vpop.f32.mrf.mxu0
        %v3255 = vadd.f32 %v1880, %v3254
        %v3256 = vpop.f32.mrf.mxu0
        %v3257 = vadd.f32 %v1876, %v3256
        %v3258 = vpop.f32.mrf.mxu0
        %v3259 = vadd.f32 %v1880, %v3258
        %3260 = vmatprep.mubr.bf16.mxu0 %v1712
        %3261 = vmatmul.mubr.bf16.gmra.mxu0 %v1711
        %v3262 = vpop.f32.mrf.mxu0
        %v3263 = vadd.f32 %v1876, %v3262
        %v3264 = vpop.f32.mrf.mxu0
        %v3265 = vadd.f32 %v1880, %v3264
        %v3266 = vpop.f32.mrf.mxu0
        %v3267 = vadd.f32 %v1876, %v3266
        %v3268 = vpop.f32.mrf.mxu0
        %v3269 = vadd.f32 %v1880, %v3268
        %3270 = vmatprep.mubr.bf16.mxu0 %v1714
        %3271 = vmatmul.mubr.bf16.gmra.mxu0 %v1713
        %v3272 = vpop.f32.mrf.mxu0
        %v3273 = vadd.f32 %v1876, %v3272
        %v3274 = vpop.f32.mrf.mxu0
        %v3275 = vadd.f32 %v1880, %v3274
        %v3276 = vpop.f32.mrf.mxu0
        %v3277 = vadd.f32 %v1876, %v3276
        %v3278 = vpop.f32.mrf.mxu0
        %v3279 = vadd.f32 %v1880, %v3278
        %3280 = vmatprep.mubr.bf16.mxu0 %v1716
        %3281 = vmatmul.mubr.bf16.gmra.mxu0 %v1715
        %v3282 = vpop.f32.mrf.mxu0
        %v3283 = vadd.f32 %v1876, %v3282
        %v3284 = vpop.f32.mrf.mxu0
        %v3285 = vadd.f32 %v1880, %v3284
        %v3286 = vpop.f32.mrf.mxu0
        %v3287 = vadd.f32 %v1876, %v3286
        %v3288 = vpop.f32.mrf.mxu0
        %v3289 = vadd.f32 %v1880, %v3288
        %3290 = vmatprep.mubr.bf16.mxu0 %v1718
        %3291 = vmatmul.mubr.bf16.gmra.mxu0 %v1717
        %v3292 = vpop.f32.mrf.mxu0
        %v3293 = vadd.f32 %v1876, %v3292
        %v3294 = vpop.f32.mrf.mxu0
        %v3295 = vadd.f32 %v1880, %v3294
        %v3296 = vpop.f32.mrf.mxu0
        %v3297 = vadd.f32 %v1876, %v3296
        %v3298 = vpop.f32.mrf.mxu0
        %v3299 = vadd.f32 %v1880, %v3298
        %3300 = vdwg.mxu0
        %v3301 = vmax.f32 %v2564, %v2568
        %v3302 = vrot.slane %v3301, 4
        %v3303 = vmax.f32 %v3301, %v3302
        %v3304 = vrot.slane %v3303, 2
        %v3305 = vmax.f32 %v3303, %v3304
        %v3306 = vrot.slane %v3305, 1
        %v3307 = vmax.f32 %v3305, %v3306
        %v3308 = vmax.f32 %v2566, %v2570
        %v3309 = vrot.slane %v3308, 4
        %v3310 = vmax.f32 %v3308, %v3309
        %v3311 = vrot.slane %v3310, 2
        %v3312 = vmax.f32 %v3310, %v3311
        %v3313 = vrot.slane %v3312, 1
        %v3314 = vmax.f32 %v3312, %v3313
        %v3315 = vmax.f32 %v2757, %v2761
        %v3316 = vrot.slane %v3315, 4
        %v3317 = vmax.f32 %v3315, %v3316
        %v3318 = vrot.slane %v3317, 2
        %v3319 = vmax.f32 %v3317, %v3318
        %v3320 = vrot.slane %v3319, 1
        %v3321 = vmax.f32 %v3319, %v3320
        %v3322 = vmax.f32 %v2759, %v2763
        %v3323 = vrot.slane %v3322, 4
        %v3324 = vmax.f32 %v3322, %v3323
        %v3325 = vrot.slane %v3324, 2
        %v3326 = vmax.f32 %v3324, %v3325
        %v3327 = vrot.slane %v3326, 1
        %v3328 = vmax.f32 %v3326, %v3327
        %v3329 = vmax.f32 %v2950, %v2954
        %v3330 = vrot.slane %v3329, 4
        %v3331 = vmax.f32 %v3329, %v3330
        %v3332 = vrot.slane %v3331, 2
        %v3333 = vmax.f32 %v3331, %v3332
        %v3334 = vrot.slane %v3333, 1
        %v3335 = vmax.f32 %v3333, %v3334
        %v3336 = vmax.f32 %v2952, %v2956
        %v3337 = vrot.slane %v3336, 4
        %v3338 = vmax.f32 %v3336, %v3337
        %v3339 = vrot.slane %v3338, 2
        %v3340 = vmax.f32 %v3338, %v3339
        %v3341 = vrot.slane %v3340, 1
        %v3342 = vmax.f32 %v3340, %v3341
        %v3343 = vmax.f32 %v3143, %v3147
        %v3344 = vrot.slane %v3343, 4
        %v3345 = vmax.f32 %v3343, %v3344
        %v3346 = vrot.slane %v3345, 2
        %v3347 = vmax.f32 %v3345, %v3346
        %v3348 = vrot.slane %v3347, 1
        %v3349 = vmax.f32 %v3347, %v3348
        %v3350 = vmax.f32 %v3145, %v3149
        %v3351 = vrot.slane %v3350, 4
        %v3352 = vmax.f32 %v3350, %v3351
        %v3353 = vrot.slane %v3352, 2
        %v3354 = vmax.f32 %v3352, %v3353
        %v3355 = vrot.slane %v3354, 1
        %v3356 = vmax.f32 %v3354, %v3355
        %v3357 = vmax.f32 %v2574, %v2578
        %v3358 = vrot.slane %v3357, 4
        %v3359 = vmax.f32 %v3357, %v3358
        %v3360 = vrot.slane %v3359, 2
        %v3361 = vmax.f32 %v3359, %v3360
        %v3362 = vrot.slane %v3361, 1
        %v3363 = vmax.f32 %v3361, %v3362
        %v3364 = vmax.f32 %v2576, %v2580
        %v3365 = vrot.slane %v3364, 4
        %v3366 = vmax.f32 %v3364, %v3365
        %v3367 = vrot.slane %v3366, 2
        %v3368 = vmax.f32 %v3366, %v3367
        %v3369 = vrot.slane %v3368, 1
        %v3370 = vmax.f32 %v3368, %v3369
        %v3371 = vmax.f32 %v2767, %v2771
        %v3372 = vrot.slane %v3371, 4
        %v3373 = vmax.f32 %v3371, %v3372
        %v3374 = vrot.slane %v3373, 2
        %v3375 = vmax.f32 %v3373, %v3374
        %v3376 = vrot.slane %v3375, 1
        %v3377 = vmax.f32 %v3375, %v3376
        %v3378 = vmax.f32 %v2769, %v2773
        %v3379 = vrot.slane %v3378, 4
        %v3380 = vmax.f32 %v3378, %v3379
        %v3381 = vrot.slane %v3380, 2
        %v3382 = vmax.f32 %v3380, %v3381
        %v3383 = vrot.slane %v3382, 1
        %v3384 = vmax.f32 %v3382, %v3383
        %v3385 = vmax.f32 %v2960, %v2964
        %v3386 = vrot.slane %v3385, 4
        %v3387 = vmax.f32 %v3385, %v3386
        %v3388 = vrot.slane %v3387, 2
        %v3389 = vmax.f32 %v3387, %v3388
        %v3390 = vrot.slane %v3389, 1
        %v3391 = vmax.f32 %v3389, %v3390
        %v3392 = vmax.f32 %v2962, %v2966
        %v3393 = vrot.slane %v3392, 4
        %v3394 = vmax.f32 %v3392, %v3393
        %v3395 = vrot.slane %v3394, 2
        %v3396 = vmax.f32 %v3394, %v3395
        %v3397 = vrot.slane %v3396, 1
        %v3398 = vmax.f32 %v3396, %v3397
        %v3399 = vmax.f32 %v3153, %v3157
        %v3400 = vrot.slane %v3399, 4
        %v3401 = vmax.f32 %v3399, %v3400
        %v3402 = vrot.slane %v3401, 2
        %v3403 = vmax.f32 %v3401, %v3402
        %v3404 = vrot.slane %v3403, 1
        %v3405 = vmax.f32 %v3403, %v3404
        %v3406 = vmax.f32 %v3155, %v3159
        %v3407 = vrot.slane %v3406, 4
        %v3408 = vmax.f32 %v3406, %v3407
        %v3409 = vrot.slane %v3408, 2
        %v3410 = vmax.f32 %v3408, %v3409
        %v3411 = vrot.slane %v3410, 1
        %v3412 = vmax.f32 %v3410, %v3411
        %v3413 = vmax.f32 %v2584, %v2588
        %v3414 = vrot.slane %v3413, 4
        %v3415 = vmax.f32 %v3413, %v3414
        %v3416 = vrot.slane %v3415, 2
        %v3417 = vmax.f32 %v3415, %v3416
        %v3418 = vrot.slane %v3417, 1
        %v3419 = vmax.f32 %v3417, %v3418
        %v3420 = vmax.f32 %v2586, %v2590
        %v3421 = vrot.slane %v3420, 4
        %v3422 = vmax.f32 %v3420, %v3421
        %v3423 = vrot.slane %v3422, 2
        %v3424 = vmax.f32 %v3422, %v3423
        %v3425 = vrot.slane %v3424, 1
        %v3426 = vmax.f32 %v3424, %v3425
        %v3427 = vmax.f32 %v2777, %v2781
        %v3428 = vrot.slane %v3427, 4
        %v3429 = vmax.f32 %v3427, %v3428
        %v3430 = vrot.slane %v3429, 2
        %v3431 = vmax.f32 %v3429, %v3430
        %v3432 = vrot.slane %v3431, 1
        %v3433 = vmax.f32 %v3431, %v3432
        %v3434 = vmax.f32 %v2779, %v2783
        %v3435 = vrot.slane %v3434, 4
        %v3436 = vmax.f32 %v3434, %v3435
        %v3437 = vrot.slane %v3436, 2
        %v3438 = vmax.f32 %v3436, %v3437
        %v3439 = vrot.slane %v3438, 1
        %v3440 = vmax.f32 %v3438, %v3439
        %v3441 = vmax.f32 %v2970, %v2974
        %v3442 = vrot.slane %v3441, 4
        %v3443 = vmax.f32 %v3441, %v3442
        %v3444 = vrot.slane %v3443, 2
        %v3445 = vmax.f32 %v3443, %v3444
        %v3446 = vrot.slane %v3445, 1
        %v3447 = vmax.f32 %v3445, %v3446
        %v3448 = vmax.f32 %v2972, %v2976
        %v3449 = vrot.slane %v3448, 4
        %v3450 = vmax.f32 %v3448, %v3449
        %v3451 = vrot.slane %v3450, 2
        %v3452 = vmax.f32 %v3450, %v3451
        %v3453 = vrot.slane %v3452, 1
        %v3454 = vmax.f32 %v3452, %v3453
        %v3455 = vmax.f32 %v3163, %v3167
        %v3456 = vrot.slane %v3455, 4
        %v3457 = vmax.f32 %v3455, %v3456
        %v3458 = vrot.slane %v3457, 2
        %v3459 = vmax.f32 %v3457, %v3458
        %v3460 = vrot.slane %v3459, 1
        %v3461 = vmax.f32 %v3459, %v3460
        %v3462 = vmax.f32 %v3165, %v3169
        %v3463 = vrot.slane %v3462, 4
        %v3464 = vmax.f32 %v3462, %v3463
        %v3465 = vrot.slane %v3464, 2
        %v3466 = vmax.f32 %v3464, %v3465
        %v3467 = vrot.slane %v3466, 1
        %v3468 = vmax.f32 %v3466, %v3467
        %v3469 = vmax.f32 %v2594, %v2598
        %v3470 = vrot.slane %v3469, 4
        %v3471 = vmax.f32 %v3469, %v3470
        %v3472 = vrot.slane %v3471, 2
        %v3473 = vmax.f32 %v3471, %v3472
        %v3474 = vrot.slane %v3473, 1
        %v3475 = vmax.f32 %v3473, %v3474
        %v3476 = vmax.f32 %v2596, %v2600
        %v3477 = vrot.slane %v3476, 4
        %v3478 = vmax.f32 %v3476, %v3477
        %v3479 = vrot.slane %v3478, 2
        %v3480 = vmax.f32 %v3478, %v3479
        %v3481 = vrot.slane %v3480, 1
        %v3482 = vmax.f32 %v3480, %v3481
        %v3483 = vmax.f32 %v2787, %v2791
        %v3484 = vrot.slane %v3483, 4
        %v3485 = vmax.f32 %v3483, %v3484
        %v3486 = vrot.slane %v3485, 2
        %v3487 = vmax.f32 %v3485, %v3486
        %v3488 = vrot.slane %v3487, 1
        %v3489 = vmax.f32 %v3487, %v3488
        %v3490 = vmax.f32 %v2789, %v2793
        %v3491 = vrot.slane %v3490, 4
        %v3492 = vmax.f32 %v3490, %v3491
        %v3493 = vrot.slane %v3492, 2
        %v3494 = vmax.f32 %v3492, %v3493
        %v3495 = vrot.slane %v3494, 1
        %v3496 = vmax.f32 %v3494, %v3495
        %v3497 = vmax.f32 %v2980, %v2984
        %v3498 = vrot.slane %v3497, 4
        %v3499 = vmax.f32 %v3497, %v3498
        %v3500 = vrot.slane %v3499, 2
        %v3501 = vmax.f32 %v3499, %v3500
        %v3502 = vrot.slane %v3501, 1
        %v3503 = vmax.f32 %v3501, %v3502
        %v3504 = vmax.f32 %v2982, %v2986
        %v3505 = vrot.slane %v3504, 4
        %v3506 = vmax.f32 %v3504, %v3505
        %v3507 = vrot.slane %v3506, 2
        %v3508 = vmax.f32 %v3506, %v3507
        %v3509 = vrot.slane %v3508, 1
        %v3510 = vmax.f32 %v3508, %v3509
        %v3511 = vmax.f32 %v3173, %v3177
        %v3512 = vrot.slane %v3511, 4
        %v3513 = vmax.f32 %v3511, %v3512
        %v3514 = vrot.slane %v3513, 2
        %v3515 = vmax.f32 %v3513, %v3514
        %v3516 = vrot.slane %v3515, 1
        %v3517 = vmax.f32 %v3515, %v3516
        %v3518 = vmax.f32 %v3175, %v3179
        %v3519 = vrot.slane %v3518, 4
        %v3520 = vmax.f32 %v3518, %v3519
        %v3521 = vrot.slane %v3520, 2
        %v3522 = vmax.f32 %v3520, %v3521
        %v3523 = vrot.slane %v3522, 1
        %v3524 = vmax.f32 %v3522, %v3523
        %v3525 = vmax.f32 %v2604, %v2608
        %v3526 = vrot.slane %v3525, 4
        %v3527 = vmax.f32 %v3525, %v3526
        %v3528 = vrot.slane %v3527, 2
        %v3529 = vmax.f32 %v3527, %v3528
        %v3530 = vrot.slane %v3529, 1
        %v3531 = vmax.f32 %v3529, %v3530
        %v3532 = vmax.f32 %v2606, %v2610
        %v3533 = vrot.slane %v3532, 4
        %v3534 = vmax.f32 %v3532, %v3533
        %v3535 = vrot.slane %v3534, 2
        %v3536 = vmax.f32 %v3534, %v3535
        %v3537 = vrot.slane %v3536, 1
        %v3538 = vmax.f32 %v3536, %v3537
        %v3539 = vmax.f32 %v2797, %v2801
        %v3540 = vrot.slane %v3539, 4
        %v3541 = vmax.f32 %v3539, %v3540
        %v3542 = vrot.slane %v3541, 2
        %v3543 = vmax.f32 %v3541, %v3542
        %v3544 = vrot.slane %v3543, 1
        %v3545 = vmax.f32 %v3543, %v3544
        %v3546 = vmax.f32 %v2799, %v2803
        %v3547 = vrot.slane %v3546, 4
        %v3548 = vmax.f32 %v3546, %v3547
        %v3549 = vrot.slane %v3548, 2
        %v3550 = vmax.f32 %v3548, %v3549
        %v3551 = vrot.slane %v3550, 1
        %v3552 = vmax.f32 %v3550, %v3551
        %v3553 = vmax.f32 %v2990, %v2994
        %v3554 = vrot.slane %v3553, 4
        %v3555 = vmax.f32 %v3553, %v3554
        %v3556 = vrot.slane %v3555, 2
        %v3557 = vmax.f32 %v3555, %v3556
        %v3558 = vrot.slane %v3557, 1
        %v3559 = vmax.f32 %v3557, %v3558
        %v3560 = vmax.f32 %v2992, %v2996
        %v3561 = vrot.slane %v3560, 4
        %v3562 = vmax.f32 %v3560, %v3561
        %v3563 = vrot.slane %v3562, 2
        %v3564 = vmax.f32 %v3562, %v3563
        %v3565 = vrot.slane %v3564, 1
        %v3566 = vmax.f32 %v3564, %v3565
        %v3567 = vmax.f32 %v3183, %v3187
        %v3568 = vrot.slane %v3567, 4
        %v3569 = vmax.f32 %v3567, %v3568
        %v3570 = vrot.slane %v3569, 2
        %v3571 = vmax.f32 %v3569, %v3570
        %v3572 = vrot.slane %v3571, 1
        %v3573 = vmax.f32 %v3571, %v3572
        %v3574 = vmax.f32 %v3185, %v3189
        %v3575 = vrot.slane %v3574, 4
        %v3576 = vmax.f32 %v3574, %v3575
        %v3577 = vrot.slane %v3576, 2
        %v3578 = vmax.f32 %v3576, %v3577
        %v3579 = vrot.slane %v3578, 1
        %v3580 = vmax.f32 %v3578, %v3579
        %v3581 = vmax.f32 %v2614, %v2618
        %v3582 = vrot.slane %v3581, 4
        %v3583 = vmax.f32 %v3581, %v3582
        %v3584 = vrot.slane %v3583, 2
        %v3585 = vmax.f32 %v3583, %v3584
        %v3586 = vrot.slane %v3585, 1
        %v3587 = vmax.f32 %v3585, %v3586
        %v3588 = vmax.f32 %v2616, %v2620
        %v3589 = vrot.slane %v3588, 4
        %v3590 = vmax.f32 %v3588, %v3589
        %v3591 = vrot.slane %v3590, 2
        %v3592 = vmax.f32 %v3590, %v3591
        %v3593 = vrot.slane %v3592, 1
        %v3594 = vmax.f32 %v3592, %v3593
        %v3595 = vmax.f32 %v2807, %v2811
        %v3596 = vrot.slane %v3595, 4
        %v3597 = vmax.f32 %v3595, %v3596
        %v3598 = vrot.slane %v3597, 2
        %v3599 = vmax.f32 %v3597, %v3598
        %v3600 = vrot.slane %v3599, 1
        %v3601 = vmax.f32 %v3599, %v3600
        %v3602 = vmax.f32 %v2809, %v2813
        %v3603 = vrot.slane %v3602, 4
        %v3604 = vmax.f32 %v3602, %v3603
        %v3605 = vrot.slane %v3604, 2
        %v3606 = vmax.f32 %v3604, %v3605
        %v3607 = vrot.slane %v3606, 1
        %v3608 = vmax.f32 %v3606, %v3607
        %v3609 = vmax.f32 %v3000, %v3004
        %v3610 = vrot.slane %v3609, 4
        %v3611 = vmax.f32 %v3609, %v3610
        %v3612 = vrot.slane %v3611, 2
        %v3613 = vmax.f32 %v3611, %v3612
        %v3614 = vrot.slane %v3613, 1
        %v3615 = vmax.f32 %v3613, %v3614
        %v3616 = vmax.f32 %v3002, %v3006
        %v3617 = vrot.slane %v3616, 4
        %v3618 = vmax.f32 %v3616, %v3617
        %v3619 = vrot.slane %v3618, 2
        %v3620 = vmax.f32 %v3618, %v3619
        %v3621 = vrot.slane %v3620, 1
        %v3622 = vmax.f32 %v3620, %v3621
        %v3623 = vmax.f32 %v3193, %v3197
        %v3624 = vrot.slane %v3623, 4
        %v3625 = vmax.f32 %v3623, %v3624
        %v3626 = vrot.slane %v3625, 2
        %v3627 = vmax.f32 %v3625, %v3626
        %v3628 = vrot.slane %v3627, 1
        %v3629 = vmax.f32 %v3627, %v3628
        %v3630 = vmax.f32 %v3195, %v3199
        %v3631 = vrot.slane %v3630, 4
        %v3632 = vmax.f32 %v3630, %v3631
        %v3633 = vrot.slane %v3632, 2
        %v3634 = vmax.f32 %v3632, %v3633
        %v3635 = vrot.slane %v3634, 1
        %v3636 = vmax.f32 %v3634, %v3635
        %v3637 = vmax.f32 %v2624, %v2628
        %v3638 = vrot.slane %v3637, 4
        %v3639 = vmax.f32 %v3637, %v3638
        %v3640 = vrot.slane %v3639, 2
        %v3641 = vmax.f32 %v3639, %v3640
        %v3642 = vrot.slane %v3641, 1
        %v3643 = vmax.f32 %v3641, %v3642
        %v3644 = vmax.f32 %v2626, %v2630
        %v3645 = vrot.slane %v3644, 4
        %v3646 = vmax.f32 %v3644, %v3645
        %v3647 = vrot.slane %v3646, 2
        %v3648 = vmax.f32 %v3646, %v3647
        %v3649 = vrot.slane %v3648, 1
        %v3650 = vmax.f32 %v3648, %v3649
        %v3651 = vmax.f32 %v2817, %v2821
        %v3652 = vrot.slane %v3651, 4
        %v3653 = vmax.f32 %v3651, %v3652
        %v3654 = vrot.slane %v3653, 2
        %v3655 = vmax.f32 %v3653, %v3654
        %v3656 = vrot.slane %v3655, 1
        %v3657 = vmax.f32 %v3655, %v3656
        %v3658 = vmax.f32 %v2819, %v2823
        %v3659 = vrot.slane %v3658, 4
        %v3660 = vmax.f32 %v3658, %v3659
        %v3661 = vrot.slane %v3660, 2
        %v3662 = vmax.f32 %v3660, %v3661
        %v3663 = vrot.slane %v3662, 1
        %v3664 = vmax.f32 %v3662, %v3663
        %v3665 = vmax.f32 %v3010, %v3014
        %v3666 = vrot.slane %v3665, 4
        %v3667 = vmax.f32 %v3665, %v3666
        %v3668 = vrot.slane %v3667, 2
        %v3669 = vmax.f32 %v3667, %v3668
        %v3670 = vrot.slane %v3669, 1
        %v3671 = vmax.f32 %v3669, %v3670
        %v3672 = vmax.f32 %v3012, %v3016
        %v3673 = vrot.slane %v3672, 4
        %v3674 = vmax.f32 %v3672, %v3673
        %v3675 = vrot.slane %v3674, 2
        %v3676 = vmax.f32 %v3674, %v3675
        %v3677 = vrot.slane %v3676, 1
        %v3678 = vmax.f32 %v3676, %v3677
        %v3679 = vmax.f32 %v3203, %v3207
        %v3680 = vrot.slane %v3679, 4
        %v3681 = vmax.f32 %v3679, %v3680
        %v3682 = vrot.slane %v3681, 2
        %v3683 = vmax.f32 %v3681, %v3682
        %v3684 = vrot.slane %v3683, 1
        %v3685 = vmax.f32 %v3683, %v3684
        %v3686 = vmax.f32 %v3205, %v3209
        %v3687 = vrot.slane %v3686, 4
        %v3688 = vmax.f32 %v3686, %v3687
        %v3689 = vrot.slane %v3688, 2
        %v3690 = vmax.f32 %v3688, %v3689
        %v3691 = vrot.slane %v3690, 1
        %v3692 = vmax.f32 %v3690, %v3691
        %v3693 = vmax.f32 %v2634, %v2638
        %v3694 = vrot.slane %v3693, 4
        %v3695 = vmax.f32 %v3693, %v3694
        %v3696 = vrot.slane %v3695, 2
        %v3697 = vmax.f32 %v3695, %v3696
        %v3698 = vrot.slane %v3697, 1
        %v3699 = vmax.f32 %v3697, %v3698
        %v3700 = vmax.f32 %v2636, %v2640
        %v3701 = vrot.slane %v3700, 4
        %v3702 = vmax.f32 %v3700, %v3701
        %v3703 = vrot.slane %v3702, 2
        %v3704 = vmax.f32 %v3702, %v3703
        %v3705 = vrot.slane %v3704, 1
        %v3706 = vmax.f32 %v3704, %v3705
        %v3707 = vmax.f32 %v2827, %v2831
        %v3708 = vrot.slane %v3707, 4
        %v3709 = vmax.f32 %v3707, %v3708
        %v3710 = vrot.slane %v3709, 2
        %v3711 = vmax.f32 %v3709, %v3710
        %v3712 = vrot.slane %v3711, 1
        %v3713 = vmax.f32 %v3711, %v3712
        %v3714 = vmax.f32 %v2829, %v2833
        %v3715 = vrot.slane %v3714, 4
        %v3716 = vmax.f32 %v3714, %v3715
        %v3717 = vrot.slane %v3716, 2
        %v3718 = vmax.f32 %v3716, %v3717
        %v3719 = vrot.slane %v3718, 1
        %v3720 = vmax.f32 %v3718, %v3719
        %v3721 = vmax.f32 %v3020, %v3024
        %v3722 = vrot.slane %v3721, 4
        %v3723 = vmax.f32 %v3721, %v3722
        %v3724 = vrot.slane %v3723, 2
        %v3725 = vmax.f32 %v3723, %v3724
        %v3726 = vrot.slane %v3725, 1
        %v3727 = vmax.f32 %v3725, %v3726
        %v3728 = vmax.f32 %v3022, %v3026
        %v3729 = vrot.slane %v3728, 4
        %v3730 = vmax.f32 %v3728, %v3729
        %v3731 = vrot.slane %v3730, 2
        %v3732 = vmax.f32 %v3730, %v3731
        %v3733 = vrot.slane %v3732, 1
        %v3734 = vmax.f32 %v3732, %v3733
        %v3735 = vmax.f32 %v3213, %v3217
        %v3736 = vrot.slane %v3735, 4
        %v3737 = vmax.f32 %v3735, %v3736
        %v3738 = vrot.slane %v3737, 2
        %v3739 = vmax.f32 %v3737, %v3738
        %v3740 = vrot.slane %v3739, 1
        %v3741 = vmax.f32 %v3739, %v3740
        %v3742 = vmax.f32 %v3215, %v3219
        %v3743 = vrot.slane %v3742, 4
        %v3744 = vmax.f32 %v3742, %v3743
        %v3745 = vrot.slane %v3744, 2
        %v3746 = vmax.f32 %v3744, %v3745
        %v3747 = vrot.slane %v3746, 1
        %v3748 = vmax.f32 %v3746, %v3747
        %v3749 = vmax.f32 %v2644, %v2648
        %v3750 = vrot.slane %v3749, 4
        %v3751 = vmax.f32 %v3749, %v3750
        %v3752 = vrot.slane %v3751, 2
        %v3753 = vmax.f32 %v3751, %v3752
        %v3754 = vrot.slane %v3753, 1
        %v3755 = vmax.f32 %v3753, %v3754
        %v3756 = vmax.f32 %v2646, %v2650
        %v3757 = vrot.slane %v3756, 4
        %v3758 = vmax.f32 %v3756, %v3757
        %v3759 = vrot.slane %v3758, 2
        %v3760 = vmax.f32 %v3758, %v3759
        %v3761 = vrot.slane %v3760, 1
        %v3762 = vmax.f32 %v3760, %v3761
        %v3763 = vmax.f32 %v2837, %v2841
        %v3764 = vrot.slane %v3763, 4
        %v3765 = vmax.f32 %v3763, %v3764
        %v3766 = vrot.slane %v3765, 2
        %v3767 = vmax.f32 %v3765, %v3766
        %v3768 = vrot.slane %v3767, 1
        %v3769 = vmax.f32 %v3767, %v3768
        %v3770 = vmax.f32 %v2839, %v2843
        %v3771 = vrot.slane %v3770, 4
        %v3772 = vmax.f32 %v3770, %v3771
        %v3773 = vrot.slane %v3772, 2
        %v3774 = vmax.f32 %v3772, %v3773
        %v3775 = vrot.slane %v3774, 1
        %v3776 = vmax.f32 %v3774, %v3775
        %v3777 = vmax.f32 %v3030, %v3034
        %v3778 = vrot.slane %v3777, 4
        %v3779 = vmax.f32 %v3777, %v3778
        %v3780 = vrot.slane %v3779, 2
        %v3781 = vmax.f32 %v3779, %v3780
        %v3782 = vrot.slane %v3781, 1
        %v3783 = vmax.f32 %v3781, %v3782
        %v3784 = vmax.f32 %v3032, %v3036
        %v3785 = vrot.slane %v3784, 4
        %v3786 = vmax.f32 %v3784, %v3785
        %v3787 = vrot.slane %v3786, 2
        %v3788 = vmax.f32 %v3786, %v3787
        %v3789 = vrot.slane %v3788, 1
        %v3790 = vmax.f32 %v3788, %v3789
        %v3791 = vmax.f32 %v3223, %v3227
        %v3792 = vrot.slane %v3791, 4
        %v3793 = vmax.f32 %v3791, %v3792
        %v3794 = vrot.slane %v3793, 2
        %v3795 = vmax.f32 %v3793, %v3794
        %v3796 = vrot.slane %v3795, 1
        %v3797 = vmax.f32 %v3795, %v3796
        %v3798 = vmax.f32 %v3225, %v3229
        %v3799 = vrot.slane %v3798, 4
        %v3800 = vmax.f32 %v3798, %v3799
        %v3801 = vrot.slane %v3800, 2
        %v3802 = vmax.f32 %v3800, %v3801
        %v3803 = vrot.slane %v3802, 1
        %v3804 = vmax.f32 %v3802, %v3803
        %v3805 = vmax.f32 %v2654, %v2658
        %v3806 = vrot.slane %v3805, 4
        %v3807 = vmax.f32 %v3805, %v3806
        %v3808 = vrot.slane %v3807, 2
        %v3809 = vmax.f32 %v3807, %v3808
        %v3810 = vrot.slane %v3809, 1
        %v3811 = vmax.f32 %v3809, %v3810
        %v3812 = vmax.f32 %v2656, %v2660
        %v3813 = vrot.slane %v3812, 4
        %v3814 = vmax.f32 %v3812, %v3813
        %v3815 = vrot.slane %v3814, 2
        %v3816 = vmax.f32 %v3814, %v3815
        %v3817 = vrot.slane %v3816, 1
        %v3818 = vmax.f32 %v3816, %v3817
        %v3819 = vmax.f32 %v2847, %v2851
        %v3820 = vrot.slane %v3819, 4
        %v3821 = vmax.f32 %v3819, %v3820
        %v3822 = vrot.slane %v3821, 2
        %v3823 = vmax.f32 %v3821, %v3822
        %v3824 = vrot.slane %v3823, 1
        %v3825 = vmax.f32 %v3823, %v3824
        %v3826 = vmax.f32 %v2849, %v2853
        %v3827 = vrot.slane %v3826, 4
        %v3828 = vmax.f32 %v3826, %v3827
        %v3829 = vrot.slane %v3828, 2
        %v3830 = vmax.f32 %v3828, %v3829
        %v3831 = vrot.slane %v3830, 1
        %v3832 = vmax.f32 %v3830, %v3831
        %v3833 = vmax.f32 %v3040, %v3044
        %v3834 = vrot.slane %v3833, 4
        %v3835 = vmax.f32 %v3833, %v3834
        %v3836 = vrot.slane %v3835, 2
        %v3837 = vmax.f32 %v3835, %v3836
        %v3838 = vrot.slane %v3837, 1
        %v3839 = vmax.f32 %v3837, %v3838
        %v3840 = vmax.f32 %v3042, %v3046
        %v3841 = vrot.slane %v3840, 4
        %v3842 = vmax.f32 %v3840, %v3841
        %v3843 = vrot.slane %v3842, 2
        %v3844 = vmax.f32 %v3842, %v3843
        %v3845 = vrot.slane %v3844, 1
        %v3846 = vmax.f32 %v3844, %v3845
        %v3847 = vmax.f32 %v3233, %v3237
        %v3848 = vrot.slane %v3847, 4
        %v3849 = vmax.f32 %v3847, %v3848
        %v3850 = vrot.slane %v3849, 2
        %v3851 = vmax.f32 %v3849, %v3850
        %v3852 = vrot.slane %v3851, 1
        %v3853 = vmax.f32 %v3851, %v3852
        %v3854 = vmax.f32 %v3235, %v3239
        %v3855 = vrot.slane %v3854, 4
        %v3856 = vmax.f32 %v3854, %v3855
        %v3857 = vrot.slane %v3856, 2
        %v3858 = vmax.f32 %v3856, %v3857
        %v3859 = vrot.slane %v3858, 1
        %v3860 = vmax.f32 %v3858, %v3859
        %v3861 = vmax.f32 %v2664, %v2668
        %v3862 = vrot.slane %v3861, 4
        %v3863 = vmax.f32 %v3861, %v3862
        %v3864 = vrot.slane %v3863, 2
        %v3865 = vmax.f32 %v3863, %v3864
        %v3866 = vrot.slane %v3865, 1
        %v3867 = vmax.f32 %v3865, %v3866
        %v3868 = vmax.f32 %v2666, %v2670
        %v3869 = vrot.slane %v3868, 4
        %v3870 = vmax.f32 %v3868, %v3869
        %v3871 = vrot.slane %v3870, 2
        %v3872 = vmax.f32 %v3870, %v3871
        %v3873 = vrot.slane %v3872, 1
        %v3874 = vmax.f32 %v3872, %v3873
        %v3875 = vmax.f32 %v2857, %v2861
        %v3876 = vrot.slane %v3875, 4
        %v3877 = vmax.f32 %v3875, %v3876
        %v3878 = vrot.slane %v3877, 2
        %v3879 = vmax.f32 %v3877, %v3878
        %v3880 = vrot.slane %v3879, 1
        %v3881 = vmax.f32 %v3879, %v3880
        %v3882 = vmax.f32 %v2859, %v2863
        %v3883 = vrot.slane %v3882, 4
        %v3884 = vmax.f32 %v3882, %v3883
        %v3885 = vrot.slane %v3884, 2
        %v3886 = vmax.f32 %v3884, %v3885
        %v3887 = vrot.slane %v3886, 1
        %v3888 = vmax.f32 %v3886, %v3887
        %v3889 = vmax.f32 %v3050, %v3054
        %v3890 = vrot.slane %v3889, 4
        %v3891 = vmax.f32 %v3889, %v3890
        %v3892 = vrot.slane %v3891, 2
        %v3893 = vmax.f32 %v3891, %v3892
        %v3894 = vrot.slane %v3893, 1
        %v3895 = vmax.f32 %v3893, %v3894
        %v3896 = vmax.f32 %v3052, %v3056
        %v3897 = vrot.slane %v3896, 4
        %v3898 = vmax.f32 %v3896, %v3897
        %v3899 = vrot.slane %v3898, 2
        %v3900 = vmax.f32 %v3898, %v3899
        %v3901 = vrot.slane %v3900, 1
        %v3902 = vmax.f32 %v3900, %v3901
        %v3903 = vmax.f32 %v3243, %v3247
        %v3904 = vrot.slane %v3903, 4
        %v3905 = vmax.f32 %v3903, %v3904
        %v3906 = vrot.slane %v3905, 2
        %v3907 = vmax.f32 %v3905, %v3906
        %v3908 = vrot.slane %v3907, 1
        %v3909 = vmax.f32 %v3907, %v3908
        %v3910 = vmax.f32 %v3245, %v3249
        %v3911 = vrot.slane %v3910, 4
        %v3912 = vmax.f32 %v3910, %v3911
        %v3913 = vrot.slane %v3912, 2
        %v3914 = vmax.f32 %v3912, %v3913
        %v3915 = vrot.slane %v3914, 1
        %v3916 = vmax.f32 %v3914, %v3915
        %v3917 = vmax.f32 %v2674, %v2678
        %v3918 = vrot.slane %v3917, 4
        %v3919 = vmax.f32 %v3917, %v3918
        %v3920 = vrot.slane %v3919, 2
        %v3921 = vmax.f32 %v3919, %v3920
        %v3922 = vrot.slane %v3921, 1
        %v3923 = vmax.f32 %v3921, %v3922
        %v3924 = vmax.f32 %v2676, %v2680
        %v3925 = vrot.slane %v3924, 4
        %v3926 = vmax.f32 %v3924, %v3925
        %v3927 = vrot.slane %v3926, 2
        %v3928 = vmax.f32 %v3926, %v3927
        %v3929 = vrot.slane %v3928, 1
        %v3930 = vmax.f32 %v3928, %v3929
        %v3931 = vmax.f32 %v2867, %v2871
        %v3932 = vrot.slane %v3931, 4
        %v3933 = vmax.f32 %v3931, %v3932
        %v3934 = vrot.slane %v3933, 2
        %v3935 = vmax.f32 %v3933, %v3934
        %v3936 = vrot.slane %v3935, 1
        %v3937 = vmax.f32 %v3935, %v3936
        %v3938 = vmax.f32 %v2869, %v2873
        %v3939 = vrot.slane %v3938, 4
        %v3940 = vmax.f32 %v3938, %v3939
        %v3941 = vrot.slane %v3940, 2
        %v3942 = vmax.f32 %v3940, %v3941
        %v3943 = vrot.slane %v3942, 1
        %v3944 = vmax.f32 %v3942, %v3943
        %v3945 = vmax.f32 %v3060, %v3064
        %v3946 = vrot.slane %v3945, 4
        %v3947 = vmax.f32 %v3945, %v3946
        %v3948 = vrot.slane %v3947, 2
        %v3949 = vmax.f32 %v3947, %v3948
        %v3950 = vrot.slane %v3949, 1
        %v3951 = vmax.f32 %v3949, %v3950
        %v3952 = vmax.f32 %v3062, %v3066
        %v3953 = vrot.slane %v3952, 4
        %v3954 = vmax.f32 %v3952, %v3953
        %v3955 = vrot.slane %v3954, 2
        %v3956 = vmax.f32 %v3954, %v3955
        %v3957 = vrot.slane %v3956, 1
        %v3958 = vmax.f32 %v3956, %v3957
        %v3959 = vmax.f32 %v3253, %v3257
        %v3960 = vrot.slane %v3959, 4
        %v3961 = vmax.f32 %v3959, %v3960
        %v3962 = vrot.slane %v3961, 2
        %v3963 = vmax.f32 %v3961, %v3962
        %v3964 = vrot.slane %v3963, 1
        %v3965 = vmax.f32 %v3963, %v3964
        %v3966 = vmax.f32 %v3255, %v3259
        %v3967 = vrot.slane %v3966, 4
        %v3968 = vmax.f32 %v3966, %v3967
        %v3969 = vrot.slane %v3968, 2
        %v3970 = vmax.f32 %v3968, %v3969
        %v3971 = vrot.slane %v3970, 1
        %v3972 = vmax.f32 %v3970, %v3971
        %v3973 = vmax.f32 %v2684, %v2688
        %v3974 = vrot.slane %v3973, 4
        %v3975 = vmax.f32 %v3973, %v3974
        %v3976 = vrot.slane %v3975, 2
        %v3977 = vmax.f32 %v3975, %v3976
        %v3978 = vrot.slane %v3977, 1
        %v3979 = vmax.f32 %v3977, %v3978
        %v3980 = vmax.f32 %v2686, %v2690
        %v3981 = vrot.slane %v3980, 4
        %v3982 = vmax.f32 %v3980, %v3981
        %v3983 = vrot.slane %v3982, 2
        %v3984 = vmax.f32 %v3982, %v3983
        %v3985 = vrot.slane %v3984, 1
        %v3986 = vmax.f32 %v3984, %v3985
        %v3987 = vmax.f32 %v2877, %v2881
        %v3988 = vrot.slane %v3987, 4
        %v3989 = vmax.f32 %v3987, %v3988
        %v3990 = vrot.slane %v3989, 2
        %v3991 = vmax.f32 %v3989, %v3990
        %v3992 = vrot.slane %v3991, 1
        %v3993 = vmax.f32 %v3991, %v3992
        %v3994 = vmax.f32 %v2879, %v2883
        %v3995 = vrot.slane %v3994, 4
        %v3996 = vmax.f32 %v3994, %v3995
        %v3997 = vrot.slane %v3996, 2
        %v3998 = vmax.f32 %v3996, %v3997
        %v3999 = vrot.slane %v3998, 1
        %v4000 = vmax.f32 %v3998, %v3999
        %v4001 = vmax.f32 %v3070, %v3074
        %v4002 = vrot.slane %v4001, 4
        %v4003 = vmax.f32 %v4001, %v4002
        %v4004 = vrot.slane %v4003, 2
        %v4005 = vmax.f32 %v4003, %v4004
        %v4006 = vrot.slane %v4005, 1
        %v4007 = vmax.f32 %v4005, %v4006
        %v4008 = vmax.f32 %v3072, %v3076
        %v4009 = vrot.slane %v4008, 4
        %v4010 = vmax.f32 %v4008, %v4009
        %v4011 = vrot.slane %v4010, 2
        %v4012 = vmax.f32 %v4010, %v4011
        %v4013 = vrot.slane %v4012, 1
        %v4014 = vmax.f32 %v4012, %v4013
        %v4015 = vmax.f32 %v3263, %v3267
        %v4016 = vrot.slane %v4015, 4
        %v4017 = vmax.f32 %v4015, %v4016
        %v4018 = vrot.slane %v4017, 2
        %v4019 = vmax.f32 %v4017, %v4018
        %v4020 = vrot.slane %v4019, 1
        %v4021 = vmax.f32 %v4019, %v4020
        %v4022 = vmax.f32 %v3265, %v3269
        %v4023 = vrot.slane %v4022, 4
        %v4024 = vmax.f32 %v4022, %v4023
        %v4025 = vrot.slane %v4024, 2
        %v4026 = vmax.f32 %v4024, %v4025
        %v4027 = vrot.slane %v4026, 1
        %v4028 = vmax.f32 %v4026, %v4027
        %v4029 = vmax.f32 %v2694, %v2698
        %v4030 = vrot.slane %v4029, 4
        %v4031 = vmax.f32 %v4029, %v4030
        %v4032 = vrot.slane %v4031, 2
        %v4033 = vmax.f32 %v4031, %v4032
        %v4034 = vrot.slane %v4033, 1
        %v4035 = vmax.f32 %v4033, %v4034
        %v4036 = vmax.f32 %v2696, %v2700
        %v4037 = vrot.slane %v4036, 4
        %v4038 = vmax.f32 %v4036, %v4037
        %v4039 = vrot.slane %v4038, 2
        %v4040 = vmax.f32 %v4038, %v4039
        %v4041 = vrot.slane %v4040, 1
        %v4042 = vmax.f32 %v4040, %v4041
        %v4043 = vmax.f32 %v2887, %v2891
        %v4044 = vrot.slane %v4043, 4
        %v4045 = vmax.f32 %v4043, %v4044
        %v4046 = vrot.slane %v4045, 2
        %v4047 = vmax.f32 %v4045, %v4046
        %v4048 = vrot.slane %v4047, 1
        %v4049 = vmax.f32 %v4047, %v4048
        %v4050 = vmax.f32 %v2889, %v2893
        %v4051 = vrot.slane %v4050, 4
        %v4052 = vmax.f32 %v4050, %v4051
        %v4053 = vrot.slane %v4052, 2
        %v4054 = vmax.f32 %v4052, %v4053
        %v4055 = vrot.slane %v4054, 1
        %v4056 = vmax.f32 %v4054, %v4055
        %v4057 = vmax.f32 %v3080, %v3084
        %v4058 = vrot.slane %v4057, 4
        %v4059 = vmax.f32 %v4057, %v4058
        %v4060 = vrot.slane %v4059, 2
        %v4061 = vmax.f32 %v4059, %v4060
        %v4062 = vrot.slane %v4061, 1
        %v4063 = vmax.f32 %v4061, %v4062
        %v4064 = vmax.f32 %v3082, %v3086
        %v4065 = vrot.slane %v4064, 4
        %v4066 = vmax.f32 %v4064, %v4065
        %v4067 = vrot.slane %v4066, 2
        %v4068 = vmax.f32 %v4066, %v4067
        %v4069 = vrot.slane %v4068, 1
        %v4070 = vmax.f32 %v4068, %v4069
        %v4071 = vmax.f32 %v3273, %v3277
        %v4072 = vrot.slane %v4071, 4
        %v4073 = vmax.f32 %v4071, %v4072
        %v4074 = vrot.slane %v4073, 2
        %v4075 = vmax.f32 %v4073, %v4074
        %v4076 = vrot.slane %v4075, 1
        %v4077 = vmax.f32 %v4075, %v4076
        %v4078 = vmax.f32 %v3275, %v3279
        %v4079 = vrot.slane %v4078, 4
        %v4080 = vmax.f32 %v4078, %v4079
        %v4081 = vrot.slane %v4080, 2
        %v4082 = vmax.f32 %v4080, %v4081
        %v4083 = vrot.slane %v4082, 1
        %v4084 = vmax.f32 %v4082, %v4083
        %v4085 = vmax.f32 %v2704, %v2708
        %v4086 = vrot.slane %v4085, 4
        %v4087 = vmax.f32 %v4085, %v4086
        %v4088 = vrot.slane %v4087, 2
        %v4089 = vmax.f32 %v4087, %v4088
        %v4090 = vrot.slane %v4089, 1
        %v4091 = vmax.f32 %v4089, %v4090
        %v4092 = vmax.f32 %v2706, %v2710
        %v4093 = vrot.slane %v4092, 4
        %v4094 = vmax.f32 %v4092, %v4093
        %v4095 = vrot.slane %v4094, 2
        %v4096 = vmax.f32 %v4094, %v4095
        %v4097 = vrot.slane %v4096, 1
        %v4098 = vmax.f32 %v4096, %v4097
        %v4099 = vmax.f32 %v2897, %v2901
        %v4100 = vrot.slane %v4099, 4
        %v4101 = vmax.f32 %v4099, %v4100
        %v4102 = vrot.slane %v4101, 2
        %v4103 = vmax.f32 %v4101, %v4102
        %v4104 = vrot.slane %v4103, 1
        %v4105 = vmax.f32 %v4103, %v4104
        %v4106 = vmax.f32 %v2899, %v2903
        %v4107 = vrot.slane %v4106, 4
        %v4108 = vmax.f32 %v4106, %v4107
        %v4109 = vrot.slane %v4108, 2
        %v4110 = vmax.f32 %v4108, %v4109
        %v4111 = vrot.slane %v4110, 1
        %v4112 = vmax.f32 %v4110, %v4111
        %v4113 = vmax.f32 %v3090, %v3094
        %v4114 = vrot.slane %v4113, 4
        %v4115 = vmax.f32 %v4113, %v4114
        %v4116 = vrot.slane %v4115, 2
        %v4117 = vmax.f32 %v4115, %v4116
        %v4118 = vrot.slane %v4117, 1
        %v4119 = vmax.f32 %v4117, %v4118
        %v4120 = vmax.f32 %v3092, %v3096
        %v4121 = vrot.slane %v4120, 4
        %v4122 = vmax.f32 %v4120, %v4121
        %v4123 = vrot.slane %v4122, 2
        %v4124 = vmax.f32 %v4122, %v4123
        %v4125 = vrot.slane %v4124, 1
        %v4126 = vmax.f32 %v4124, %v4125
        %v4127 = vmax.f32 %v3283, %v3287
        %v4128 = vrot.slane %v4127, 4
        %v4129 = vmax.f32 %v4127, %v4128
        %v4130 = vrot.slane %v4129, 2
        %v4131 = vmax.f32 %v4129, %v4130
        %v4132 = vrot.slane %v4131, 1
        %v4133 = vmax.f32 %v4131, %v4132
        %v4134 = vmax.f32 %v3285, %v3289
        %v4135 = vrot.slane %v4134, 4
        %v4136 = vmax.f32 %v4134, %v4135
        %v4137 = vrot.slane %v4136, 2
        %v4138 = vmax.f32 %v4136, %v4137
        %v4139 = vrot.slane %v4138, 1
        %v4140 = vmax.f32 %v4138, %v4139
        %v4141 = vmax.f32 %v2714, %v2718
        %v4142 = vrot.slane %v4141, 4
        %v4143 = vmax.f32 %v4141, %v4142
        %v4144 = vrot.slane %v4143, 2
        %v4145 = vmax.f32 %v4143, %v4144
        %v4146 = vrot.slane %v4145, 1
        %v4147 = vmax.f32 %v4145, %v4146
        %v4148 = vmax.f32 %v2716, %v2720
        %v4149 = vrot.slane %v4148, 4
        %v4150 = vmax.f32 %v4148, %v4149
        %v4151 = vrot.slane %v4150, 2
        %v4152 = vmax.f32 %v4150, %v4151
        %v4153 = vrot.slane %v4152, 1
        %v4154 = vmax.f32 %v4152, %v4153
        %v4155 = vmax.f32 %v2907, %v2911
        %v4156 = vrot.slane %v4155, 4
        %v4157 = vmax.f32 %v4155, %v4156
        %v4158 = vrot.slane %v4157, 2
        %v4159 = vmax.f32 %v4157, %v4158
        %v4160 = vrot.slane %v4159, 1
        %v4161 = vmax.f32 %v4159, %v4160
        %v4162 = vmax.f32 %v2909, %v2913
        %v4163 = vrot.slane %v4162, 4
        %v4164 = vmax.f32 %v4162, %v4163
        %v4165 = vrot.slane %v4164, 2
        %v4166 = vmax.f32 %v4164, %v4165
        %v4167 = vrot.slane %v4166, 1
        %v4168 = vmax.f32 %v4166, %v4167
        %v4169 = vmax.f32 %v3100, %v3104
        %v4170 = vrot.slane %v4169, 4
        %v4171 = vmax.f32 %v4169, %v4170
        %v4172 = vrot.slane %v4171, 2
        %v4173 = vmax.f32 %v4171, %v4172
        %v4174 = vrot.slane %v4173, 1
        %v4175 = vmax.f32 %v4173, %v4174
        %v4176 = vmax.f32 %v3102, %v3106
        %v4177 = vrot.slane %v4176, 4
        %v4178 = vmax.f32 %v4176, %v4177
        %v4179 = vrot.slane %v4178, 2
        %v4180 = vmax.f32 %v4178, %v4179
        %v4181 = vrot.slane %v4180, 1
        %v4182 = vmax.f32 %v4180, %v4181
        %v4183 = vmax.f32 %v3293, %v3297
        %v4184 = vrot.slane %v4183, 4
        %v4185 = vmax.f32 %v4183, %v4184
        %v4186 = vrot.slane %v4185, 2
        %v4187 = vmax.f32 %v4185, %v4186
        %v4188 = vrot.slane %v4187, 1
        %v4189 = vmax.f32 %v4187, %v4188
        %v4190 = vmax.f32 %v3295, %v3299
        %v4191 = vrot.slane %v4190, 4
        %v4192 = vmax.f32 %v4190, %v4191
        %v4193 = vrot.slane %v4192, 2
        %v4194 = vmax.f32 %v4192, %v4193
        %v4195 = vrot.slane %v4194, 1
        %v4196 = vmax.f32 %v4194, %v4195
        %v4197 = vld [vmem:[#allocation2] sm:$0xff]
        %v4198 = vld [vmem:[#allocation2 + $0x8] sm:$0xff]
        %v4199 = vld [vmem:[#allocation2 + $0x10] sm:$0xff]
        %v4200 = vld [vmem:[#allocation2 + $0x18] sm:$0xff]
        %v4201 = vld [vmem:[#allocation2 + $0x20] sm:$0xff]
        %v4202 = vld [vmem:[#allocation2 + $0x28] sm:$0xff]
        %v4203 = vld [vmem:[#allocation2 + $0x30] sm:$0xff]
        %v4204 = vld [vmem:[#allocation2 + $0x38] sm:$0xff]
        %v4205 = vld [vmem:[#allocation2 + $0x40] sm:$0xff]
        %v4206 = vld [vmem:[#allocation2 + $0x48] sm:$0xff]
        %v4207 = vld [vmem:[#allocation2 + $0x50] sm:$0xff]
        %v4208 = vld [vmem:[#allocation2 + $0x58] sm:$0xff]
        %v4209 = vld [vmem:[#allocation2 + $0x60] sm:$0xff]
        %v4210 = vld [vmem:[#allocation2 + $0x68] sm:$0xff]
        %v4211 = vld [vmem:[#allocation2 + $0x70] sm:$0xff]
        %v4212 = vld [vmem:[#allocation2 + $0x78] sm:$0xff]
        %vm4341 = vcmask 1041409
        %v4342 = vsel %vm4341, %v3363, %v3307
        %vm4343 = vcmask 1042434
        %v4344 = vsel %vm4343, %v3419, %v4342
        %vm4345 = vcmask 1043459
        %v4346 = vsel %vm4345, %v3475, %v4344
        %vm4347 = vcmask 1044484
        %v4348 = vsel %vm4347, %v3531, %v4346
        %vm4349 = vcmask 1045509
        %v4350 = vsel %vm4349, %v3587, %v4348
        %vm4351 = vcmask 1046534
        %v4352 = vsel %vm4351, %v3643, %v4350
        %vm4353 = vcmask 1047559
        %v4354 = vsel %vm4353, %v3699, %v4352
        %v4355 = vsel %vm4341, %v3370, %v3314
        %v4356 = vsel %vm4343, %v3426, %v4355
        %v4357 = vsel %vm4345, %v3482, %v4356
        %v4358 = vsel %vm4347, %v3538, %v4357
        %v4359 = vsel %vm4349, %v3594, %v4358
        %v4360 = vsel %vm4351, %v3650, %v4359
        %v4361 = vsel %vm4353, %v3706, %v4360
        %v4362 = vsel %vm4341, %v3377, %v3321
        %v4363 = vsel %vm4343, %v3433, %v4362
        %v4364 = vsel %vm4345, %v3489, %v4363
        %v4365 = vsel %vm4347, %v3545, %v4364
        %v4366 = vsel %vm4349, %v3601, %v4365
        %v4367 = vsel %vm4351, %v3657, %v4366
        %v4368 = vsel %vm4353, %v3713, %v4367
        %v4369 = vsel %vm4341, %v3384, %v3328
        %v4370 = vsel %vm4343, %v3440, %v4369
        %v4371 = vsel %vm4345, %v3496, %v4370
        %v4372 = vsel %vm4347, %v3552, %v4371
        %v4373 = vsel %vm4349, %v3608, %v4372
        %v4374 = vsel %vm4351, %v3664, %v4373
        %v4375 = vsel %vm4353, %v3720, %v4374
        %v4376 = vsel %vm4341, %v3391, %v3335
        %v4377 = vsel %vm4343, %v3447, %v4376
        %v4378 = vsel %vm4345, %v3503, %v4377
        %v4379 = vsel %vm4347, %v3559, %v4378
        %v4380 = vsel %vm4349, %v3615, %v4379
        %v4381 = vsel %vm4351, %v3671, %v4380
        %v4382 = vsel %vm4353, %v3727, %v4381
        %v4383 = vsel %vm4341, %v3398, %v3342
        %v4384 = vsel %vm4343, %v3454, %v4383
        %v4385 = vsel %vm4345, %v3510, %v4384
        %v4386 = vsel %vm4347, %v3566, %v4385
        %v4387 = vsel %vm4349, %v3622, %v4386
        %v4388 = vsel %vm4351, %v3678, %v4387
        %v4389 = vsel %vm4353, %v3734, %v4388
        %v4390 = vsel %vm4341, %v3405, %v3349
        %v4391 = vsel %vm4343, %v3461, %v4390
        %v4392 = vsel %vm4345, %v3517, %v4391
        %v4393 = vsel %vm4347, %v3573, %v4392
        %v4394 = vsel %vm4349, %v3629, %v4393
        %v4395 = vsel %vm4351, %v3685, %v4394
        %v4396 = vsel %vm4353, %v3741, %v4395
        %v4397 = vsel %vm4341, %v3412, %v3356
        %v4398 = vsel %vm4343, %v3468, %v4397
        %v4399 = vsel %vm4345, %v3524, %v4398
        %v4400 = vsel %vm4347, %v3580, %v4399
        %v4401 = vsel %vm4349, %v3636, %v4400
        %v4402 = vsel %vm4351, %v3692, %v4401
        %v4403 = vsel %vm4353, %v3748, %v4402
        %v4404 = vsel %vm4341, %v3811, %v3755
        %v4405 = vsel %vm4343, %v3867, %v4404
        %v4406 = vsel %vm4345, %v3923, %v4405
        %v4407 = vsel %vm4347, %v3979, %v4406
        %v4408 = vsel %vm4349, %v4035, %v4407
        %v4409 = vsel %vm4351, %v4091, %v4408
        %v4410 = vsel %vm4353, %v4147, %v4409
        %v4411 = vsel %vm4341, %v3818, %v3762
        %v4412 = vsel %vm4343, %v3874, %v4411
        %v4413 = vsel %vm4345, %v3930, %v4412
        %v4414 = vsel %vm4347, %v3986, %v4413
        %v4415 = vsel %vm4349, %v4042, %v4414
        %v4416 = vsel %vm4351, %v4098, %v4415
        %v4417 = vsel %vm4353, %v4154, %v4416
        %v4418 = vsel %vm4341, %v3825, %v3769
        %v4419 = vsel %vm4343, %v3881, %v4418
        %v4420 = vsel %vm4345, %v3937, %v4419
        %v4421 = vsel %vm4347, %v3993, %v4420
        %v4422 = vsel %vm4349, %v4049, %v4421
        %v4423 = vsel %vm4351, %v4105, %v4422
        %v4424 = vsel %vm4353, %v4161, %v4423
        %v4425 = vsel %vm4341, %v3832, %v3776
        %v4426 = vsel %vm4343, %v3888, %v4425
        %v4427 = vsel %vm4345, %v3944, %v4426
        %v4428 = vsel %vm4347, %v4000, %v4427
        %v4429 = vsel %vm4349, %v4056, %v4428
        %v4430 = vsel %vm4351, %v4112, %v4429
        %v4431 = vsel %vm4353, %v4168, %v4430
        %v4432 = vsel %vm4341, %v3839, %v3783
        %v4433 = vsel %vm4343, %v3895, %v4432
        %v4434 = vsel %vm4345, %v3951, %v4433
        %v4435 = vsel %vm4347, %v4007, %v4434
        %v4436 = vsel %vm4349, %v4063, %v4435
        %v4437 = vsel %vm4351, %v4119, %v4436
        %v4438 = vsel %vm4353, %v4175, %v4437
        %v4439 = vsel %vm4341, %v3846, %v3790
        %v4440 = vsel %vm4343, %v3902, %v4439
        %v4441 = vsel %vm4345, %v3958, %v4440
        %v4442 = vsel %vm4347, %v4014, %v4441
        %v4443 = vsel %vm4349, %v4070, %v4442
        %v4444 = vsel %vm4351, %v4126, %v4443
        %v4445 = vsel %vm4353, %v4182, %v4444
        %v4446 = vsel %vm4341, %v3853, %v3797
        %v4447 = vsel %vm4343, %v3909, %v4446
        %v4448 = vsel %vm4345, %v3965, %v4447
        %v4449 = vsel %vm4347, %v4021, %v4448
        %v4450 = vsel %vm4349, %v4077, %v4449
        %v4451 = vsel %vm4351, %v4133, %v4450
        %v4452 = vsel %vm4353, %v4189, %v4451
        %v4453 = vsel %vm4341, %v3860, %v3804
        %v4454 = vsel %vm4343, %v3916, %v4453
        %v4455 = vsel %vm4345, %v3972, %v4454
        %v4456 = vsel %vm4347, %v4028, %v4455
        %v4457 = vsel %vm4349, %v4084, %v4456
        %v4458 = vsel %vm4351, %v4140, %v4457
        %v4459 = vsel %vm4353, %v4196, %v4458
        %v4476 = vmax.f32 %v4197, %v4354
        %v4477 = vmax.f32 %v4198, %v4361
        %v4478 = vmax.f32 %v4199, %v4368
        %v4479 = vmax.f32 %v4200, %v4375
        %v4480 = vmax.f32 %v4201, %v4382
        %v4481 = vmax.f32 %v4202, %v4389
        %v4482 = vmax.f32 %v4203, %v4396
        %v4483 = vmax.f32 %v4204, %v4403
        %v4484 = vmax.f32 %v4205, %v4410
        %v4485 = vmax.f32 %v4206, %v4417
        %v4486 = vmax.f32 %v4207, %v4424
        %v4487 = vmax.f32 %v4208, %v4431
        %v4488 = vmax.f32 %v4209, %v4438
        %v4489 = vmax.f32 %v4210, %v4445
        %v4490 = vmax.f32 %v4211, %v4452
        %v4491 = vmax.f32 %v4212, %v4459
        %4492 = vst [vmem:[#allocation2] sm:$0xff] %v4476
        %4493 = vst [vmem:[#allocation2 + $0x8] sm:$0xff] %v4477
        %4494 = vst [vmem:[#allocation2 + $0x10] sm:$0xff] %v4478
        %4495 = vst [vmem:[#allocation2 + $0x18] sm:$0xff] %v4479
        %4496 = vst [vmem:[#allocation2 + $0x20] sm:$0xff] %v4480
        %4497 = vst [vmem:[#allocation2 + $0x28] sm:$0xff] %v4481
        %4498 = vst [vmem:[#allocation2 + $0x30] sm:$0xff] %v4482
        %4499 = vst [vmem:[#allocation2 + $0x38] sm:$0xff] %v4483
        %4500 = vst [vmem:[#allocation2 + $0x40] sm:$0xff] %v4484
        %4501 = vst [vmem:[#allocation2 + $0x48] sm:$0xff] %v4485
        %4502 = vst [vmem:[#allocation2 + $0x50] sm:$0xff] %v4486
        %4503 = vst [vmem:[#allocation2 + $0x58] sm:$0xff] %v4487
        %4504 = vst [vmem:[#allocation2 + $0x60] sm:$0xff] %v4488
        %4505 = vst [vmem:[#allocation2 + $0x68] sm:$0xff] %v4489
        %4506 = vst [vmem:[#allocation2 + $0x70] sm:$0xff] %v4490
        %4507 = vst [vmem:[#allocation2 + $0x78] sm:$0xff] %v4491
        // Predicated region
        $region113: #{tpu_custom_call.1} parent=71 // pred_check
          %p4508 = pneg %p593
        $region114: #{tpu_custom_call.1} parent=71 // pred_check_branch
          %4510 = sbr.rel (%p4508) target = $region116
        $region115: #{tpu_custom_call.1} parent=71 // pred_region
          %v4511 = vld [vmem:[#allocation2] sm:$0xff]
          %v4512 = vld [vmem:[#allocation2 + $0x8] sm:$0xff]
          %v4513 = vld [vmem:[#allocation2 + $0x10] sm:$0xff]
          %v4514 = vld [vmem:[#allocation2 + $0x18] sm:$0xff]
          %v4515 = vld [vmem:[#allocation2 + $0x20] sm:$0xff]
          %v4516 = vld [vmem:[#allocation2 + $0x28] sm:$0xff]
          %v4517 = vld [vmem:[#allocation2 + $0x30] sm:$0xff]
          %v4518 = vld [vmem:[#allocation2 + $0x38] sm:$0xff]
          %v4519 = vld [vmem:[#allocation2 + $0x40] sm:$0xff]
          %v4520 = vld [vmem:[#allocation2 + $0x48] sm:$0xff]
          %v4521 = vld [vmem:[#allocation2 + $0x50] sm:$0xff]
          %v4522 = vld [vmem:[#allocation2 + $0x58] sm:$0xff]
          %v4523 = vld [vmem:[#allocation2 + $0x60] sm:$0xff]
          %v4524 = vld [vmem:[#allocation2 + $0x68] sm:$0xff]
          %v4525 = vld [vmem:[#allocation2 + $0x70] sm:$0xff]
          %v4526 = vld [vmem:[#allocation2 + $0x78] sm:$0xff]
          %v4527 = vpack.c.bf16 %v4519, %v4511
          %v4528 = vpack.c.bf16 %v4520, %v4512
          %v4529 = vpack.c.bf16 %v4521, %v4513
          %v4530 = vpack.c.bf16 %v4522, %v4514
          %v4531 = vpack.c.bf16 %v4523, %v4515
          %v4532 = vpack.c.bf16 %v4524, %v4516
          %v4533 = vpack.c.bf16 %v4525, %v4517
          %v4534 = vpack.c.bf16 %v4526, %v4518
          %v4535 = vld [vmem:[#allocation12] sm:$0xff]
          %v4536 = vld [vmem:[#allocation12 + $0x8] sm:$0xff]
          %v4537 = vld [vmem:[#allocation12 + $0x10] sm:$0xff]
          %v4538 = vld [vmem:[#allocation12 + $0x18] sm:$0xff]
          %v4539 = vld [vmem:[#allocation12 + $0x20] sm:$0xff]
          %v4540 = vld [vmem:[#allocation12 + $0x28] sm:$0xff]
          %v4541 = vld [vmem:[#allocation12 + $0x30] sm:$0xff]
          %v4542 = vld [vmem:[#allocation12 + $0x38] sm:$0xff]
          %v4543 = vld [vmem:[#allocation12 + $0x40] sm:$0xff]
          %v4544 = vld [vmem:[#allocation12 + $0x48] sm:$0xff]
          %v4545 = vld [vmem:[#allocation12 + $0x50] sm:$0xff]
          %v4546 = vld [vmem:[#allocation12 + $0x58] sm:$0xff]
          %v4547 = vld [vmem:[#allocation12 + $0x60] sm:$0xff]
          %v4548 = vld [vmem:[#allocation12 + $0x68] sm:$0xff]
          %v4549 = vld [vmem:[#allocation12 + $0x70] sm:$0xff]
          %v4550 = vld [vmem:[#allocation12 + $0x78] sm:$0xff]
          %v4551 = vld [vmem:[#allocation12 + $0x80] sm:$0xff]
          %v4552 = vld [vmem:[#allocation12 + $0x88] sm:$0xff]
          %v4553 = vld [vmem:[#allocation12 + $0x90] sm:$0xff]
          %v4554 = vld [vmem:[#allocation12 + $0x98] sm:$0xff]
          %v4555 = vld [vmem:[#allocation12 + $0xa0] sm:$0xff]
          %v4556 = vld [vmem:[#allocation12 + $0xa8] sm:$0xff]
          %v4557 = vld [vmem:[#allocation12 + $0xb0] sm:$0xff]
          %v4558 = vld [vmem:[#allocation12 + $0xb8] sm:$0xff]
          %v4559 = vld [vmem:[#allocation12 + $0xc0] sm:$0xff]
          %v4560 = vld [vmem:[#allocation12 + $0xc8] sm:$0xff]
          %v4561 = vld [vmem:[#allocation12 + $0xd0] sm:$0xff]
          %v4562 = vld [vmem:[#allocation12 + $0xd8] sm:$0xff]
          %v4563 = vld [vmem:[#allocation12 + $0xe0] sm:$0xff]
          %v4564 = vld [vmem:[#allocation12 + $0xe8] sm:$0xff]
          %v4565 = vld [vmem:[#allocation12 + $0xf0] sm:$0xff]
          %v4566 = vld [vmem:[#allocation12 + $0xf8] sm:$0xff]
          %v4567 = vld [vmem:[#allocation12 + $0x100] sm:$0xff]
          %v4568 = vld [vmem:[#allocation12 + $0x108] sm:$0xff]
          %v4569 = vld [vmem:[#allocation12 + $0x110] sm:$0xff]
          %v4570 = vld [vmem:[#allocation12 + $0x118] sm:$0xff]
          %v4571 = vld [vmem:[#allocation12 + $0x120] sm:$0xff]
          %v4572 = vld [vmem:[#allocation12 + $0x128] sm:$0xff]
          %v4573 = vld [vmem:[#allocation12 + $0x130] sm:$0xff]
          %v4574 = vld [vmem:[#allocation12 + $0x138] sm:$0xff]
          %v4575 = vld [vmem:[#allocation12 + $0x140] sm:$0xff]
          %v4576 = vld [vmem:[#allocation12 + $0x148] sm:$0xff]
          %v4577 = vld [vmem:[#allocation12 + $0x150] sm:$0xff]
          %v4578 = vld [vmem:[#allocation12 + $0x158] sm:$0xff]
          %v4579 = vld [vmem:[#allocation12 + $0x160] sm:$0xff]
          %v4580 = vld [vmem:[#allocation12 + $0x168] sm:$0xff]
          %v4581 = vld [vmem:[#allocation12 + $0x170] sm:$0xff]
          %v4582 = vld [vmem:[#allocation12 + $0x178] sm:$0xff]
          %v4583 = vld [vmem:[#allocation12 + $0x180] sm:$0xff]
          %v4584 = vld [vmem:[#allocation12 + $0x188] sm:$0xff]
          %v4585 = vld [vmem:[#allocation12 + $0x190] sm:$0xff]
          %v4586 = vld [vmem:[#allocation12 + $0x198] sm:$0xff]
          %v4587 = vld [vmem:[#allocation12 + $0x1a0] sm:$0xff]
          %v4588 = vld [vmem:[#allocation12 + $0x1a8] sm:$0xff]
          %v4589 = vld [vmem:[#allocation12 + $0x1b0] sm:$0xff]
          %v4590 = vld [vmem:[#allocation12 + $0x1b8] sm:$0xff]
          %v4591 = vld [vmem:[#allocation12 + $0x1c0] sm:$0xff]
          %v4592 = vld [vmem:[#allocation12 + $0x1c8] sm:$0xff]
          %v4593 = vld [vmem:[#allocation12 + $0x1d0] sm:$0xff]
          %v4594 = vld [vmem:[#allocation12 + $0x1d8] sm:$0xff]
          %v4595 = vld [vmem:[#allocation12 + $0x1e0] sm:$0xff]
          %v4596 = vld [vmem:[#allocation12 + $0x1e8] sm:$0xff]
          %v4597 = vld [vmem:[#allocation12 + $0x1f0] sm:$0xff]
          %v4598 = vld [vmem:[#allocation12 + $0x1f8] sm:$0xff]
          %v4599 = vld [vmem:[#allocation12 + $0x200] sm:$0xff]
          %v4600 = vld [vmem:[#allocation12 + $0x208] sm:$0xff]
          %v4601 = vld [vmem:[#allocation12 + $0x210] sm:$0xff]
          %v4602 = vld [vmem:[#allocation12 + $0x218] sm:$0xff]
          %v4603 = vld [vmem:[#allocation12 + $0x220] sm:$0xff]
          %v4604 = vld [vmem:[#allocation12 + $0x228] sm:$0xff]
          %v4605 = vld [vmem:[#allocation12 + $0x230] sm:$0xff]
          %v4606 = vld [vmem:[#allocation12 + $0x238] sm:$0xff]
          %v4607 = vld [vmem:[#allocation12 + $0x240] sm:$0xff]
          %v4608 = vld [vmem:[#allocation12 + $0x248] sm:$0xff]
          %v4609 = vld [vmem:[#allocation12 + $0x250] sm:$0xff]
          %v4610 = vld [vmem:[#allocation12 + $0x258] sm:$0xff]
          %v4611 = vld [vmem:[#allocation12 + $0x260] sm:$0xff]
          %v4612 = vld [vmem:[#allocation12 + $0x268] sm:$0xff]
          %v4613 = vld [vmem:[#allocation12 + $0x270] sm:$0xff]
          %v4614 = vld [vmem:[#allocation12 + $0x278] sm:$0xff]
          %v4615 = vld [vmem:[#allocation12 + $0x280] sm:$0xff]
          %v4616 = vld [vmem:[#allocation12 + $0x288] sm:$0xff]
          %v4617 = vld [vmem:[#allocation12 + $0x290] sm:$0xff]
          %v4618 = vld [vmem:[#allocation12 + $0x298] sm:$0xff]
          %v4619 = vld [vmem:[#allocation12 + $0x2a0] sm:$0xff]
          %v4620 = vld [vmem:[#allocation12 + $0x2a8] sm:$0xff]
          %v4621 = vld [vmem:[#allocation12 + $0x2b0] sm:$0xff]
          %v4622 = vld [vmem:[#allocation12 + $0x2b8] sm:$0xff]
          %v4623 = vld [vmem:[#allocation12 + $0x2c0] sm:$0xff]
          %v4624 = vld [vmem:[#allocation12 + $0x2c8] sm:$0xff]
          %v4625 = vld [vmem:[#allocation12 + $0x2d0] sm:$0xff]
          %v4626 = vld [vmem:[#allocation12 + $0x2d8] sm:$0xff]
          %v4627 = vld [vmem:[#allocation12 + $0x2e0] sm:$0xff]
          %v4628 = vld [vmem:[#allocation12 + $0x2e8] sm:$0xff]
          %v4629 = vld [vmem:[#allocation12 + $0x2f0] sm:$0xff]
          %v4630 = vld [vmem:[#allocation12 + $0x2f8] sm:$0xff]
          %v4631 = vld [vmem:[#allocation12 + $0x300] sm:$0xff]
          %v4632 = vld [vmem:[#allocation12 + $0x308] sm:$0xff]
          %v4633 = vld [vmem:[#allocation12 + $0x310] sm:$0xff]
          %v4634 = vld [vmem:[#allocation12 + $0x318] sm:$0xff]
          %v4635 = vld [vmem:[#allocation12 + $0x320] sm:$0xff]
          %v4636 = vld [vmem:[#allocation12 + $0x328] sm:$0xff]
          %v4637 = vld [vmem:[#allocation12 + $0x330] sm:$0xff]
          %v4638 = vld [vmem:[#allocation12 + $0x338] sm:$0xff]
          %v4639 = vld [vmem:[#allocation12 + $0x340] sm:$0xff]
          %v4640 = vld [vmem:[#allocation12 + $0x348] sm:$0xff]
          %v4641 = vld [vmem:[#allocation12 + $0x350] sm:$0xff]
          %v4642 = vld [vmem:[#allocation12 + $0x358] sm:$0xff]
          %v4643 = vld [vmem:[#allocation12 + $0x360] sm:$0xff]
          %v4644 = vld [vmem:[#allocation12 + $0x368] sm:$0xff]
          %v4645 = vld [vmem:[#allocation12 + $0x370] sm:$0xff]
          %v4646 = vld [vmem:[#allocation12 + $0x378] sm:$0xff]
          %v4647 = vld [vmem:[#allocation12 + $0x380] sm:$0xff]
          %v4648 = vld [vmem:[#allocation12 + $0x388] sm:$0xff]
          %v4649 = vld [vmem:[#allocation12 + $0x390] sm:$0xff]
          %v4650 = vld [vmem:[#allocation12 + $0x398] sm:$0xff]
          %v4651 = vld [vmem:[#allocation12 + $0x3a0] sm:$0xff]
          %v4652 = vld [vmem:[#allocation12 + $0x3a8] sm:$0xff]
          %v4653 = vld [vmem:[#allocation12 + $0x3b0] sm:$0xff]
          %v4654 = vld [vmem:[#allocation12 + $0x3b8] sm:$0xff]
          %v4655 = vld [vmem:[#allocation12 + $0x3c0] sm:$0xff]
          %v4656 = vld [vmem:[#allocation12 + $0x3c8] sm:$0xff]
          %v4657 = vld [vmem:[#allocation12 + $0x3d0] sm:$0xff]
          %v4658 = vld [vmem:[#allocation12 + $0x3d8] sm:$0xff]
          %v4659 = vld [vmem:[#allocation12 + $0x3e0] sm:$0xff]
          %v4660 = vld [vmem:[#allocation12 + $0x3e8] sm:$0xff]
          %v4661 = vld [vmem:[#allocation12 + $0x3f0] sm:$0xff]
          %v4662 = vld [vmem:[#allocation12 + $0x3f8] sm:$0xff]
          %v4663 = vld [vmem:[#allocation12 + $0x400] sm:$0xff]
          %v4664 = vld [vmem:[#allocation12 + $0x408] sm:$0xff]
          %v4665 = vld [vmem:[#allocation12 + $0x410] sm:$0xff]
          %v4666 = vld [vmem:[#allocation12 + $0x418] sm:$0xff]
          %v4667 = vld [vmem:[#allocation12 + $0x420] sm:$0xff]
          %v4668 = vld [vmem:[#allocation12 + $0x428] sm:$0xff]
          %v4669 = vld [vmem:[#allocation12 + $0x430] sm:$0xff]
          %v4670 = vld [vmem:[#allocation12 + $0x438] sm:$0xff]
          %v4671 = vld [vmem:[#allocation12 + $0x440] sm:$0xff]
          %v4672 = vld [vmem:[#allocation12 + $0x448] sm:$0xff]
          %v4673 = vld [vmem:[#allocation12 + $0x450] sm:$0xff]
          %v4674 = vld [vmem:[#allocation12 + $0x458] sm:$0xff]
          %v4675 = vld [vmem:[#allocation12 + $0x460] sm:$0xff]
          %v4676 = vld [vmem:[#allocation12 + $0x468] sm:$0xff]
          %v4677 = vld [vmem:[#allocation12 + $0x470] sm:$0xff]
          %v4678 = vld [vmem:[#allocation12 + $0x478] sm:$0xff]
          %v4679 = vld [vmem:[#allocation12 + $0x480] sm:$0xff]
          %v4680 = vld [vmem:[#allocation12 + $0x488] sm:$0xff]
          %v4681 = vld [vmem:[#allocation12 + $0x490] sm:$0xff]
          %v4682 = vld [vmem:[#allocation12 + $0x498] sm:$0xff]
          %v4683 = vld [vmem:[#allocation12 + $0x4a0] sm:$0xff]
          %v4684 = vld [vmem:[#allocation12 + $0x4a8] sm:$0xff]
          %v4685 = vld [vmem:[#allocation12 + $0x4b0] sm:$0xff]
          %v4686 = vld [vmem:[#allocation12 + $0x4b8] sm:$0xff]
          %v4687 = vld [vmem:[#allocation12 + $0x4c0] sm:$0xff]
          %v4688 = vld [vmem:[#allocation12 + $0x4c8] sm:$0xff]
          %v4689 = vld [vmem:[#allocation12 + $0x4d0] sm:$0xff]
          %v4690 = vld [vmem:[#allocation12 + $0x4d8] sm:$0xff]
          %v4691 = vld [vmem:[#allocation12 + $0x4e0] sm:$0xff]
          %v4692 = vld [vmem:[#allocation12 + $0x4e8] sm:$0xff]
          %v4693 = vld [vmem:[#allocation12 + $0x4f0] sm:$0xff]
          %v4694 = vld [vmem:[#allocation12 + $0x4f8] sm:$0xff]
          %v4695 = vld [vmem:[#allocation12 + $0x500] sm:$0xff]
          %v4696 = vld [vmem:[#allocation12 + $0x508] sm:$0xff]
          %v4697 = vld [vmem:[#allocation12 + $0x510] sm:$0xff]
          %v4698 = vld [vmem:[#allocation12 + $0x518] sm:$0xff]
          %v4699 = vld [vmem:[#allocation12 + $0x520] sm:$0xff]
          %v4700 = vld [vmem:[#allocation12 + $0x528] sm:$0xff]
          %v4701 = vld [vmem:[#allocation12 + $0x530] sm:$0xff]
          %v4702 = vld [vmem:[#allocation12 + $0x538] sm:$0xff]
          %v4703 = vld [vmem:[#allocation12 + $0x540] sm:$0xff]
          %v4704 = vld [vmem:[#allocation12 + $0x548] sm:$0xff]
          %v4705 = vld [vmem:[#allocation12 + $0x550] sm:$0xff]
          %v4706 = vld [vmem:[#allocation12 + $0x558] sm:$0xff]
          %v4707 = vld [vmem:[#allocation12 + $0x560] sm:$0xff]
          %v4708 = vld [vmem:[#allocation12 + $0x568] sm:$0xff]
          %v4709 = vld [vmem:[#allocation12 + $0x570] sm:$0xff]
          %v4710 = vld [vmem:[#allocation12 + $0x578] sm:$0xff]
          %v4711 = vld [vmem:[#allocation12 + $0x580] sm:$0xff]
          %v4712 = vld [vmem:[#allocation12 + $0x588] sm:$0xff]
          %v4713 = vld [vmem:[#allocation12 + $0x590] sm:$0xff]
          %v4714 = vld [vmem:[#allocation12 + $0x598] sm:$0xff]
          %v4715 = vld [vmem:[#allocation12 + $0x5a0] sm:$0xff]
          %v4716 = vld [vmem:[#allocation12 + $0x5a8] sm:$0xff]
          %v4717 = vld [vmem:[#allocation12 + $0x5b0] sm:$0xff]
          %v4718 = vld [vmem:[#allocation12 + $0x5b8] sm:$0xff]
          %v4719 = vld [vmem:[#allocation12 + $0x5c0] sm:$0xff]
          %v4720 = vld [vmem:[#allocation12 + $0x5c8] sm:$0xff]
          %v4721 = vld [vmem:[#allocation12 + $0x5d0] sm:$0xff]
          %v4722 = vld [vmem:[#allocation12 + $0x5d8] sm:$0xff]
          %v4723 = vld [vmem:[#allocation12 + $0x5e0] sm:$0xff]
          %v4724 = vld [vmem:[#allocation12 + $0x5e8] sm:$0xff]
          %v4725 = vld [vmem:[#allocation12 + $0x5f0] sm:$0xff]
          %v4726 = vld [vmem:[#allocation12 + $0x5f8] sm:$0xff]
          %v4727 = vld [vmem:[#allocation12 + $0x600] sm:$0xff]
          %v4728 = vld [vmem:[#allocation12 + $0x608] sm:$0xff]
          %v4729 = vld [vmem:[#allocation12 + $0x610] sm:$0xff]
          %v4730 = vld [vmem:[#allocation12 + $0x618] sm:$0xff]
          %v4731 = vld [vmem:[#allocation12 + $0x620] sm:$0xff]
          %v4732 = vld [vmem:[#allocation12 + $0x628] sm:$0xff]
          %v4733 = vld [vmem:[#allocation12 + $0x630] sm:$0xff]
          %v4734 = vld [vmem:[#allocation12 + $0x638] sm:$0xff]
          %v4735 = vld [vmem:[#allocation12 + $0x640] sm:$0xff]
          %v4736 = vld [vmem:[#allocation12 + $0x648] sm:$0xff]
          %v4737 = vld [vmem:[#allocation12 + $0x650] sm:$0xff]
          %v4738 = vld [vmem:[#allocation12 + $0x658] sm:$0xff]
          %v4739 = vld [vmem:[#allocation12 + $0x660] sm:$0xff]
          %v4740 = vld [vmem:[#allocation12 + $0x668] sm:$0xff]
          %v4741 = vld [vmem:[#allocation12 + $0x670] sm:$0xff]
          %v4742 = vld [vmem:[#allocation12 + $0x678] sm:$0xff]
          %v4743 = vld [vmem:[#allocation12 + $0x680] sm:$0xff]
          %v4744 = vld [vmem:[#allocation12 + $0x688] sm:$0xff]
          %v4745 = vld [vmem:[#allocation12 + $0x690] sm:$0xff]
          %v4746 = vld [vmem:[#allocation12 + $0x698] sm:$0xff]
          %v4747 = vld [vmem:[#allocation12 + $0x6a0] sm:$0xff]
          %v4748 = vld [vmem:[#allocation12 + $0x6a8] sm:$0xff]
          %v4749 = vld [vmem:[#allocation12 + $0x6b0] sm:$0xff]
          %v4750 = vld [vmem:[#allocation12 + $0x6b8] sm:$0xff]
          %v4751 = vld [vmem:[#allocation12 + $0x6c0] sm:$0xff]
          %v4752 = vld [vmem:[#allocation12 + $0x6c8] sm:$0xff]
          %v4753 = vld [vmem:[#allocation12 + $0x6d0] sm:$0xff]
          %v4754 = vld [vmem:[#allocation12 + $0x6d8] sm:$0xff]
          %v4755 = vld [vmem:[#allocation12 + $0x6e0] sm:$0xff]
          %v4756 = vld [vmem:[#allocation12 + $0x6e8] sm:$0xff]
          %v4757 = vld [vmem:[#allocation12 + $0x6f0] sm:$0xff]
          %v4758 = vld [vmem:[#allocation12 + $0x6f8] sm:$0xff]
          %v4759 = vld [vmem:[#allocation12 + $0x700] sm:$0xff]
          %v4760 = vld [vmem:[#allocation12 + $0x708] sm:$0xff]
          %v4761 = vld [vmem:[#allocation12 + $0x710] sm:$0xff]
          %v4762 = vld [vmem:[#allocation12 + $0x718] sm:$0xff]
          %v4763 = vld [vmem:[#allocation12 + $0x720] sm:$0xff]
          %v4764 = vld [vmem:[#allocation12 + $0x728] sm:$0xff]
          %v4765 = vld [vmem:[#allocation12 + $0x730] sm:$0xff]
          %v4766 = vld [vmem:[#allocation12 + $0x738] sm:$0xff]
          %v4767 = vld [vmem:[#allocation12 + $0x740] sm:$0xff]
          %v4768 = vld [vmem:[#allocation12 + $0x748] sm:$0xff]
          %v4769 = vld [vmem:[#allocation12 + $0x750] sm:$0xff]
          %v4770 = vld [vmem:[#allocation12 + $0x758] sm:$0xff]
          %v4771 = vld [vmem:[#allocation12 + $0x760] sm:$0xff]
          %v4772 = vld [vmem:[#allocation12 + $0x768] sm:$0xff]
          %v4773 = vld [vmem:[#allocation12 + $0x770] sm:$0xff]
          %v4774 = vld [vmem:[#allocation12 + $0x778] sm:$0xff]
          %v4775 = vld [vmem:[#allocation12 + $0x780] sm:$0xff]
          %v4776 = vld [vmem:[#allocation12 + $0x788] sm:$0xff]
          %v4777 = vld [vmem:[#allocation12 + $0x790] sm:$0xff]
          %v4778 = vld [vmem:[#allocation12 + $0x798] sm:$0xff]
          %v4779 = vld [vmem:[#allocation12 + $0x7a0] sm:$0xff]
          %v4780 = vld [vmem:[#allocation12 + $0x7a8] sm:$0xff]
          %v4781 = vld [vmem:[#allocation12 + $0x7b0] sm:$0xff]
          %v4782 = vld [vmem:[#allocation12 + $0x7b8] sm:$0xff]
          %v4783 = vld [vmem:[#allocation12 + $0x7c0] sm:$0xff]
          %v4784 = vld [vmem:[#allocation12 + $0x7c8] sm:$0xff]
          %v4785 = vld [vmem:[#allocation12 + $0x7d0] sm:$0xff]
          %v4786 = vld [vmem:[#allocation12 + $0x7d8] sm:$0xff]
          %v4787 = vld [vmem:[#allocation12 + $0x7e0] sm:$0xff]
          %v4788 = vld [vmem:[#allocation12 + $0x7e8] sm:$0xff]
          %v4789 = vld [vmem:[#allocation12 + $0x7f0] sm:$0xff]
          %v4790 = vld [vmem:[#allocation12 + $0x7f8] sm:$0xff]
          %v4791 = vld [vmem:[#allocation14] sm:$0xf]
          %v4793 = vlaneseq
          %v4794 = vshrl.u32 %v4793, 7
          %v4795 = vsub.s32 0, %v4794
          %v4796 = vrot.slane %v4791, %v4795
          %v4797 = vlaneseq
          %v4798 = vshrl.u32 %v4797, 7
          %v4799 = vsub.s32 1, %v4798
          %v4800 = vrot.slane %v4791, %v4799
          %v4801 = vlaneseq
          %v4802 = vshrl.u32 %v4801, 7
          %v4803 = vsub.s32 2, %v4802
          %v4804 = vrot.slane %v4791, %v4803
          %v4805 = vlaneseq
          %v4806 = vshrl.u32 %v4805, 7
          %v4807 = vsub.s32 3, %v4806
          %v4808 = vrot.slane %v4791, %v4807
          %v5069 = vunpack.c.l.b16 %v4535
          %v5070 = vunpack.c.h.b16 %v4535
          %v5071 = vunpack.c.l.b16 %v4536
          %v5072 = vunpack.c.h.b16 %v4536
          %v5073 = vunpack.c.l.b16 %v4537
          %v5074 = vunpack.c.h.b16 %v4537
          %v5075 = vunpack.c.l.b16 %v4538
          %v5076 = vunpack.c.h.b16 %v4538
          %v5077 = vunpack.c.l.b16 %v4539
          %v5078 = vunpack.c.h.b16 %v4539
          %v5079 = vunpack.c.l.b16 %v4540
          %v5080 = vunpack.c.h.b16 %v4540
          %v5081 = vunpack.c.l.b16 %v4541
          %v5082 = vunpack.c.h.b16 %v4541
          %v5083 = vunpack.c.l.b16 %v4542
          %v5084 = vunpack.c.h.b16 %v4542
          %v5085 = vunpack.c.l.b16 %v4543
          %v5086 = vunpack.c.h.b16 %v4543
          %v5087 = vunpack.c.l.b16 %v4544
          %v5088 = vunpack.c.h.b16 %v4544
          %v5089 = vunpack.c.l.b16 %v4545
          %v5090 = vunpack.c.h.b16 %v4545
          %v5091 = vunpack.c.l.b16 %v4546
          %v5092 = vunpack.c.h.b16 %v4546
          %v5093 = vunpack.c.l.b16 %v4547
          %v5094 = vunpack.c.h.b16 %v4547
          %v5095 = vunpack.c.l.b16 %v4548
          %v5096 = vunpack.c.h.b16 %v4548
          %v5097 = vunpack.c.l.b16 %v4549
          %v5098 = vunpack.c.h.b16 %v4549
          %v5099 = vunpack.c.l.b16 %v4550
          %v5100 = vunpack.c.h.b16 %v4550
          %v5101 = vunpack.c.l.b16 %v4551
          %v5102 = vunpack.c.h.b16 %v4551
          %v5103 = vunpack.c.l.b16 %v4552
          %v5104 = vunpack.c.h.b16 %v4552
          %v5105 = vunpack.c.l.b16 %v4553
          %v5106 = vunpack.c.h.b16 %v4553
          %v5107 = vunpack.c.l.b16 %v4554
          %v5108 = vunpack.c.h.b16 %v4554
          %v5109 = vunpack.c.l.b16 %v4555
          %v5110 = vunpack.c.h.b16 %v4555
          %v5111 = vunpack.c.l.b16 %v4556
          %v5112 = vunpack.c.h.b16 %v4556
          %v5113 = vunpack.c.l.b16 %v4557
          %v5114 = vunpack.c.h.b16 %v4557
          %v5115 = vunpack.c.l.b16 %v4558
          %v5116 = vunpack.c.h.b16 %v4558
          %v5117 = vunpack.c.l.b16 %v4559
          %v5118 = vunpack.c.h.b16 %v4559
          %v5119 = vunpack.c.l.b16 %v4560
          %v5120 = vunpack.c.h.b16 %v4560
          %v5121 = vunpack.c.l.b16 %v4561
          %v5122 = vunpack.c.h.b16 %v4561
          %v5123 = vunpack.c.l.b16 %v4562
          %v5124 = vunpack.c.h.b16 %v4562
          %v5125 = vunpack.c.l.b16 %v4563
          %v5126 = vunpack.c.h.b16 %v4563
          %v5127 = vunpack.c.l.b16 %v4564
          %v5128 = vunpack.c.h.b16 %v4564
          %v5129 = vunpack.c.l.b16 %v4565
          %v5130 = vunpack.c.h.b16 %v4565
          %v5131 = vunpack.c.l.b16 %v4566
          %v5132 = vunpack.c.h.b16 %v4566
          %v5133 = vunpack.c.l.b16 %v4567
          %v5134 = vunpack.c.h.b16 %v4567
          %v5135 = vunpack.c.l.b16 %v4568
          %v5136 = vunpack.c.h.b16 %v4568
          %v5137 = vunpack.c.l.b16 %v4569
          %v5138 = vunpack.c.h.b16 %v4569
          %v5139 = vunpack.c.l.b16 %v4570
          %v5140 = vunpack.c.h.b16 %v4570
          %v5141 = vunpack.c.l.b16 %v4571
          %v5142 = vunpack.c.h.b16 %v4571
          %v5143 = vunpack.c.l.b16 %v4572
          %v5144 = vunpack.c.h.b16 %v4572
          %v5145 = vunpack.c.l.b16 %v4573
          %v5146 = vunpack.c.h.b16 %v4573
          %v5147 = vunpack.c.l.b16 %v4574
          %v5148 = vunpack.c.h.b16 %v4574
          %v5149 = vunpack.c.l.b16 %v4575
          %v5150 = vunpack.c.h.b16 %v4575
          %v5151 = vunpack.c.l.b16 %v4576
          %v5152 = vunpack.c.h.b16 %v4576
          %v5153 = vunpack.c.l.b16 %v4577
          %v5154 = vunpack.c.h.b16 %v4577
          %v5155 = vunpack.c.l.b16 %v4578
          %v5156 = vunpack.c.h.b16 %v4578
          %v5157 = vunpack.c.l.b16 %v4579
          %v5158 = vunpack.c.h.b16 %v4579
          %v5159 = vunpack.c.l.b16 %v4580
          %v5160 = vunpack.c.h.b16 %v4580
          %v5161 = vunpack.c.l.b16 %v4581
          %v5162 = vunpack.c.h.b16 %v4581
          %v5163 = vunpack.c.l.b16 %v4582
          %v5164 = vunpack.c.h.b16 %v4582
          %v5165 = vunpack.c.l.b16 %v4583
          %v5166 = vunpack.c.h.b16 %v4583
          %v5167 = vunpack.c.l.b16 %v4584
          %v5168 = vunpack.c.h.b16 %v4584
          %v5169 = vunpack.c.l.b16 %v4585
          %v5170 = vunpack.c.h.b16 %v4585
          %v5171 = vunpack.c.l.b16 %v4586
          %v5172 = vunpack.c.h.b16 %v4586
          %v5173 = vunpack.c.l.b16 %v4587
          %v5174 = vunpack.c.h.b16 %v4587
          %v5175 = vunpack.c.l.b16 %v4588
          %v5176 = vunpack.c.h.b16 %v4588
          %v5177 = vunpack.c.l.b16 %v4589
          %v5178 = vunpack.c.h.b16 %v4589
          %v5179 = vunpack.c.l.b16 %v4590
          %v5180 = vunpack.c.h.b16 %v4590
          %v5181 = vunpack.c.l.b16 %v4591
          %v5182 = vunpack.c.h.b16 %v4591
          %v5183 = vunpack.c.l.b16 %v4592
          %v5184 = vunpack.c.h.b16 %v4592
          %v5185 = vunpack.c.l.b16 %v4593
          %v5186 = vunpack.c.h.b16 %v4593
          %v5187 = vunpack.c.l.b16 %v4594
          %v5188 = vunpack.c.h.b16 %v4594
          %v5189 = vunpack.c.l.b16 %v4595
          %v5190 = vunpack.c.h.b16 %v4595
          %v5191 = vunpack.c.l.b16 %v4596
          %v5192 = vunpack.c.h.b16 %v4596
          %v5193 = vunpack.c.l.b16 %v4597
          %v5194 = vunpack.c.h.b16 %v4597
          %v5195 = vunpack.c.l.b16 %v4598
          %v5196 = vunpack.c.h.b16 %v4598
          %v5197 = vunpack.c.l.b16 %v4599
          %v5198 = vunpack.c.h.b16 %v4599
          %v5199 = vunpack.c.l.b16 %v4600
          %v5200 = vunpack.c.h.b16 %v4600
          %v5201 = vunpack.c.l.b16 %v4601
          %v5202 = vunpack.c.h.b16 %v4601
          %v5203 = vunpack.c.l.b16 %v4602
          %v5204 = vunpack.c.h.b16 %v4602
          %v5205 = vunpack.c.l.b16 %v4603
          %v5206 = vunpack.c.h.b16 %v4603
          %v5207 = vunpack.c.l.b16 %v4604
          %v5208 = vunpack.c.h.b16 %v4604
          %v5209 = vunpack.c.l.b16 %v4605
          %v5210 = vunpack.c.h.b16 %v4605
          %v5211 = vunpack.c.l.b16 %v4606
          %v5212 = vunpack.c.h.b16 %v4606
          %v5213 = vunpack.c.l.b16 %v4607
          %v5214 = vunpack.c.h.b16 %v4607
          %v5215 = vunpack.c.l.b16 %v4608
          %v5216 = vunpack.c.h.b16 %v4608
          %v5217 = vunpack.c.l.b16 %v4609
          %v5218 = vunpack.c.h.b16 %v4609
          %v5219 = vunpack.c.l.b16 %v4610
          %v5220 = vunpack.c.h.b16 %v4610
          %v5221 = vunpack.c.l.b16 %v4611
          %v5222 = vunpack.c.h.b16 %v4611
          %v5223 = vunpack.c.l.b16 %v4612
          %v5224 = vunpack.c.h.b16 %v4612
          %v5225 = vunpack.c.l.b16 %v4613
          %v5226 = vunpack.c.h.b16 %v4613
          %v5227 = vunpack.c.l.b16 %v4614
          %v5228 = vunpack.c.h.b16 %v4614
          %v5229 = vunpack.c.l.b16 %v4615
          %v5230 = vunpack.c.h.b16 %v4615
          %v5231 = vunpack.c.l.b16 %v4616
          %v5232 = vunpack.c.h.b16 %v4616
          %v5233 = vunpack.c.l.b16 %v4617
          %v5234 = vunpack.c.h.b16 %v4617
          %v5235 = vunpack.c.l.b16 %v4618
          %v5236 = vunpack.c.h.b16 %v4618
          %v5237 = vunpack.c.l.b16 %v4619
          %v5238 = vunpack.c.h.b16 %v4619
          %v5239 = vunpack.c.l.b16 %v4620
          %v5240 = vunpack.c.h.b16 %v4620
          %v5241 = vunpack.c.l.b16 %v4621
          %v5242 = vunpack.c.h.b16 %v4621
          %v5243 = vunpack.c.l.b16 %v4622
          %v5244 = vunpack.c.h.b16 %v4622
          %v5245 = vunpack.c.l.b16 %v4623
          %v5246 = vunpack.c.h.b16 %v4623
          %v5247 = vunpack.c.l.b16 %v4624
          %v5248 = vunpack.c.h.b16 %v4624
          %v5249 = vunpack.c.l.b16 %v4625
          %v5250 = vunpack.c.h.b16 %v4625
          %v5251 = vunpack.c.l.b16 %v4626
          %v5252 = vunpack.c.h.b16 %v4626
          %v5253 = vunpack.c.l.b16 %v4627
          %v5254 = vunpack.c.h.b16 %v4627
          %v5255 = vunpack.c.l.b16 %v4628
          %v5256 = vunpack.c.h.b16 %v4628
          %v5257 = vunpack.c.l.b16 %v4629
          %v5258 = vunpack.c.h.b16 %v4629
          %v5259 = vunpack.c.l.b16 %v4630
          %v5260 = vunpack.c.h.b16 %v4630
          %v5261 = vunpack.c.l.b16 %v4631
          %v5262 = vunpack.c.h.b16 %v4631
          %v5263 = vunpack.c.l.b16 %v4632
          %v5264 = vunpack.c.h.b16 %v4632
          %v5265 = vunpack.c.l.b16 %v4633
          %v5266 = vunpack.c.h.b16 %v4633
          %v5267 = vunpack.c.l.b16 %v4634
          %v5268 = vunpack.c.h.b16 %v4634
          %v5269 = vunpack.c.l.b16 %v4635
          %v5270 = vunpack.c.h.b16 %v4635
          %v5271 = vunpack.c.l.b16 %v4636
          %v5272 = vunpack.c.h.b16 %v4636
          %v5273 = vunpack.c.l.b16 %v4637
          %v5274 = vunpack.c.h.b16 %v4637
          %v5275 = vunpack.c.l.b16 %v4638
          %v5276 = vunpack.c.h.b16 %v4638
          %v5277 = vunpack.c.l.b16 %v4639
          %v5278 = vunpack.c.h.b16 %v4639
          %v5279 = vunpack.c.l.b16 %v4640
          %v5280 = vunpack.c.h.b16 %v4640
          %v5281 = vunpack.c.l.b16 %v4641
          %v5282 = vunpack.c.h.b16 %v4641
          %v5283 = vunpack.c.l.b16 %v4642
          %v5284 = vunpack.c.h.b16 %v4642
          %v5285 = vunpack.c.l.b16 %v4643
          %v5286 = vunpack.c.h.b16 %v4643
          %v5287 = vunpack.c.l.b16 %v4644
          %v5288 = vunpack.c.h.b16 %v4644
          %v5289 = vunpack.c.l.b16 %v4645
          %v5290 = vunpack.c.h.b16 %v4645
          %v5291 = vunpack.c.l.b16 %v4646
          %v5292 = vunpack.c.h.b16 %v4646
          %v5293 = vunpack.c.l.b16 %v4647
          %v5294 = vunpack.c.h.b16 %v4647
          %v5295 = vunpack.c.l.b16 %v4648
          %v5296 = vunpack.c.h.b16 %v4648
          %v5297 = vunpack.c.l.b16 %v4649
          %v5298 = vunpack.c.h.b16 %v4649
          %v5299 = vunpack.c.l.b16 %v4650
          %v5300 = vunpack.c.h.b16 %v4650
          %v5301 = vunpack.c.l.b16 %v4651
          %v5302 = vunpack.c.h.b16 %v4651
          %v5303 = vunpack.c.l.b16 %v4652
          %v5304 = vunpack.c.h.b16 %v4652
          %v5305 = vunpack.c.l.b16 %v4653
          %v5306 = vunpack.c.h.b16 %v4653
          %v5307 = vunpack.c.l.b16 %v4654
          %v5308 = vunpack.c.h.b16 %v4654
          %v5309 = vunpack.c.l.b16 %v4655
          %v5310 = vunpack.c.h.b16 %v4655
          %v5311 = vunpack.c.l.b16 %v4656
          %v5312 = vunpack.c.h.b16 %v4656
          %v5313 = vunpack.c.l.b16 %v4657
          %v5314 = vunpack.c.h.b16 %v4657
          %v5315 = vunpack.c.l.b16 %v4658
          %v5316 = vunpack.c.h.b16 %v4658
          %v5317 = vunpack.c.l.b16 %v4659
          %v5318 = vunpack.c.h.b16 %v4659
          %v5319 = vunpack.c.l.b16 %v4660
          %v5320 = vunpack.c.h.b16 %v4660
          %v5321 = vunpack.c.l.b16 %v4661
          %v5322 = vunpack.c.h.b16 %v4661
          %v5323 = vunpack.c.l.b16 %v4662
          %v5324 = vunpack.c.h.b16 %v4662
          %v5325 = vunpack.c.l.b16 %v4663
          %v5326 = vunpack.c.h.b16 %v4663
          %v5327 = vunpack.c.l.b16 %v4664
          %v5328 = vunpack.c.h.b16 %v4664
          %v5329 = vunpack.c.l.b16 %v4665
          %v5330 = vunpack.c.h.b16 %v4665
          %v5331 = vunpack.c.l.b16 %v4666
          %v5332 = vunpack.c.h.b16 %v4666
          %v5333 = vunpack.c.l.b16 %v4667
          %v5334 = vunpack.c.h.b16 %v4667
          %v5335 = vunpack.c.l.b16 %v4668
          %v5336 = vunpack.c.h.b16 %v4668
          %v5337 = vunpack.c.l.b16 %v4669
          %v5338 = vunpack.c.h.b16 %v4669
          %v5339 = vunpack.c.l.b16 %v4670
          %v5340 = vunpack.c.h.b16 %v4670
          %v5341 = vunpack.c.l.b16 %v4671
          %v5342 = vunpack.c.h.b16 %v4671
          %v5343 = vunpack.c.l.b16 %v4672
          %v5344 = vunpack.c.h.b16 %v4672
          %v5345 = vunpack.c.l.b16 %v4673
          %v5346 = vunpack.c.h.b16 %v4673
          %v5347 = vunpack.c.l.b16 %v4674
          %v5348 = vunpack.c.h.b16 %v4674
          %v5349 = vunpack.c.l.b16 %v4675
          %v5350 = vunpack.c.h.b16 %v4675
          %v5351 = vunpack.c.l.b16 %v4676
          %v5352 = vunpack.c.h.b16 %v4676
          %v5353 = vunpack.c.l.b16 %v4677
          %v5354 = vunpack.c.h.b16 %v4677
          %v5355 = vunpack.c.l.b16 %v4678
          %v5356 = vunpack.c.h.b16 %v4678
          %v5357 = vunpack.c.l.b16 %v4679
          %v5358 = vunpack.c.h.b16 %v4679
          %v5359 = vunpack.c.l.b16 %v4680
          %v5360 = vunpack.c.h.b16 %v4680
          %v5361 = vunpack.c.l.b16 %v4681
          %v5362 = vunpack.c.h.b16 %v4681
          %v5363 = vunpack.c.l.b16 %v4682
          %v5364 = vunpack.c.h.b16 %v4682
          %v5365 = vunpack.c.l.b16 %v4683
          %v5366 = vunpack.c.h.b16 %v4683
          %v5367 = vunpack.c.l.b16 %v4684
          %v5368 = vunpack.c.h.b16 %v4684
          %v5369 = vunpack.c.l.b16 %v4685
          %v5370 = vunpack.c.h.b16 %v4685
          %v5371 = vunpack.c.l.b16 %v4686
          %v5372 = vunpack.c.h.b16 %v4686
          %v5373 = vunpack.c.l.b16 %v4687
          %v5374 = vunpack.c.h.b16 %v4687
          %v5375 = vunpack.c.l.b16 %v4688
          %v5376 = vunpack.c.h.b16 %v4688
          %v5377 = vunpack.c.l.b16 %v4689
          %v5378 = vunpack.c.h.b16 %v4689
          %v5379 = vunpack.c.l.b16 %v4690
          %v5380 = vunpack.c.h.b16 %v4690
          %v5381 = vunpack.c.l.b16 %v4691
          %v5382 = vunpack.c.h.b16 %v4691
          %v5383 = vunpack.c.l.b16 %v4692
          %v5384 = vunpack.c.h.b16 %v4692
          %v5385 = vunpack.c.l.b16 %v4693
          %v5386 = vunpack.c.h.b16 %v4693
          %v5387 = vunpack.c.l.b16 %v4694
          %v5388 = vunpack.c.h.b16 %v4694
          %v5389 = vunpack.c.l.b16 %v4695
          %v5390 = vunpack.c.h.b16 %v4695
          %v5391 = vunpack.c.l.b16 %v4696
          %v5392 = vunpack.c.h.b16 %v4696
          %v5393 = vunpack.c.l.b16 %v4697
          %v5394 = vunpack.c.h.b16 %v4697
          %v5395 = vunpack.c.l.b16 %v4698
          %v5396 = vunpack.c.h.b16 %v4698
          %v5397 = vunpack.c.l.b16 %v4699
          %v5398 = vunpack.c.h.b16 %v4699
          %v5399 = vunpack.c.l.b16 %v4700
          %v5400 = vunpack.c.h.b16 %v4700
          %v5401 = vunpack.c.l.b16 %v4701
          %v5402 = vunpack.c.h.b16 %v4701
          %v5403 = vunpack.c.l.b16 %v4702
          %v5404 = vunpack.c.h.b16 %v4702
          %v5405 = vunpack.c.l.b16 %v4703
          %v5406 = vunpack.c.h.b16 %v4703
          %v5407 = vunpack.c.l.b16 %v4704
          %v5408 = vunpack.c.h.b16 %v4704
          %v5409 = vunpack.c.l.b16 %v4705
          %v5410 = vunpack.c.h.b16 %v4705
          %v5411 = vunpack.c.l.b16 %v4706
          %v5412 = vunpack.c.h.b16 %v4706
          %v5413 = vunpack.c.l.b16 %v4707
          %v5414 = vunpack.c.h.b16 %v4707
          %v5415 = vunpack.c.l.b16 %v4708
          %v5416 = vunpack.c.h.b16 %v4708
          %v5417 = vunpack.c.l.b16 %v4709
          %v5418 = vunpack.c.h.b16 %v4709
          %v5419 = vunpack.c.l.b16 %v4710
          %v5420 = vunpack.c.h.b16 %v4710
          %v5421 = vunpack.c.l.b16 %v4711
          %v5422 = vunpack.c.h.b16 %v4711
          %v5423 = vunpack.c.l.b16 %v4712
          %v5424 = vunpack.c.h.b16 %v4712
          %v5425 = vunpack.c.l.b16 %v4713
          %v5426 = vunpack.c.h.b16 %v4713
          %v5427 = vunpack.c.l.b16 %v4714
          %v5428 = vunpack.c.h.b16 %v4714
          %v5429 = vunpack.c.l.b16 %v4715
          %v5430 = vunpack.c.h.b16 %v4715
          %v5431 = vunpack.c.l.b16 %v4716
          %v5432 = vunpack.c.h.b16 %v4716
          %v5433 = vunpack.c.l.b16 %v4717
          %v5434 = vunpack.c.h.b16 %v4717
          %v5435 = vunpack.c.l.b16 %v4718
          %v5436 = vunpack.c.h.b16 %v4718
          %v5437 = vunpack.c.l.b16 %v4719
          %v5438 = vunpack.c.h.b16 %v4719
          %v5439 = vunpack.c.l.b16 %v4720
          %v5440 = vunpack.c.h.b16 %v4720
          %v5441 = vunpack.c.l.b16 %v4721
          %v5442 = vunpack.c.h.b16 %v4721
          %v5443 = vunpack.c.l.b16 %v4722
          %v5444 = vunpack.c.h.b16 %v4722
          %v5445 = vunpack.c.l.b16 %v4723
          %v5446 = vunpack.c.h.b16 %v4723
          %v5447 = vunpack.c.l.b16 %v4724
          %v5448 = vunpack.c.h.b16 %v4724
          %v5449 = vunpack.c.l.b16 %v4725
          %v5450 = vunpack.c.h.b16 %v4725
          %v5451 = vunpack.c.l.b16 %v4726
          %v5452 = vunpack.c.h.b16 %v4726
          %v5453 = vunpack.c.l.b16 %v4727
          %v5454 = vunpack.c.h.b16 %v4727
          %v5455 = vunpack.c.l.b16 %v4728
          %v5456 = vunpack.c.h.b16 %v4728
          %v5457 = vunpack.c.l.b16 %v4729
          %v5458 = vunpack.c.h.b16 %v4729
          %v5459 = vunpack.c.l.b16 %v4730
          %v5460 = vunpack.c.h.b16 %v4730
          %v5461 = vunpack.c.l.b16 %v4731
          %v5462 = vunpack.c.h.b16 %v4731
          %v5463 = vunpack.c.l.b16 %v4732
          %v5464 = vunpack.c.h.b16 %v4732
          %v5465 = vunpack.c.l.b16 %v4733
          %v5466 = vunpack.c.h.b16 %v4733
          %v5467 = vunpack.c.l.b16 %v4734
          %v5468 = vunpack.c.h.b16 %v4734
          %v5469 = vunpack.c.l.b16 %v4735
          %v5470 = vunpack.c.h.b16 %v4735
          %v5471 = vunpack.c.l.b16 %v4736
          %v5472 = vunpack.c.h.b16 %v4736
          %v5473 = vunpack.c.l.b16 %v4737
          %v5474 = vunpack.c.h.b16 %v4737
          %v5475 = vunpack.c.l.b16 %v4738
          %v5476 = vunpack.c.h.b16 %v4738
          %v5477 = vunpack.c.l.b16 %v4739
          %v5478 = vunpack.c.h.b16 %v4739
          %v5479 = vunpack.c.l.b16 %v4740
          %v5480 = vunpack.c.h.b16 %v4740
          %v5481 = vunpack.c.l.b16 %v4741
          %v5482 = vunpack.c.h.b16 %v4741
          %v5483 = vunpack.c.l.b16 %v4742
          %v5484 = vunpack.c.h.b16 %v4742
          %v5485 = vunpack.c.l.b16 %v4743
          %v5486 = vunpack.c.h.b16 %v4743
          %v5487 = vunpack.c.l.b16 %v4744
          %v5488 = vunpack.c.h.b16 %v4744
          %v5489 = vunpack.c.l.b16 %v4745
          %v5490 = vunpack.c.h.b16 %v4745
          %v5491 = vunpack.c.l.b16 %v4746
          %v5492 = vunpack.c.h.b16 %v4746
          %v5493 = vunpack.c.l.b16 %v4747
          %v5494 = vunpack.c.h.b16 %v4747
          %v5495 = vunpack.c.l.b16 %v4748
          %v5496 = vunpack.c.h.b16 %v4748
          %v5497 = vunpack.c.l.b16 %v4749
          %v5498 = vunpack.c.h.b16 %v4749
          %v5499 = vunpack.c.l.b16 %v4750
          %v5500 = vunpack.c.h.b16 %v4750
          %v5501 = vunpack.c.l.b16 %v4751
          %v5502 = vunpack.c.h.b16 %v4751
          %v5503 = vunpack.c.l.b16 %v4752
          %v5504 = vunpack.c.h.b16 %v4752
          %v5505 = vunpack.c.l.b16 %v4753
          %v5506 = vunpack.c.h.b16 %v4753
          %v5507 = vunpack.c.l.b16 %v4754
          %v5508 = vunpack.c.h.b16 %v4754
          %v5509 = vunpack.c.l.b16 %v4755
          %v5510 = vunpack.c.h.b16 %v4755
          %v5511 = vunpack.c.l.b16 %v4756
          %v5512 = vunpack.c.h.b16 %v4756
          %v5513 = vunpack.c.l.b16 %v4757
          %v5514 = vunpack.c.h.b16 %v4757
          %v5515 = vunpack.c.l.b16 %v4758
          %v5516 = vunpack.c.h.b16 %v4758
          %v5517 = vunpack.c.l.b16 %v4759
          %v5518 = vunpack.c.h.b16 %v4759
          %v5519 = vunpack.c.l.b16 %v4760
          %v5520 = vunpack.c.h.b16 %v4760
          %v5521 = vunpack.c.l.b16 %v4761
          %v5522 = vunpack.c.h.b16 %v4761
          %v5523 = vunpack.c.l.b16 %v4762
          %v5524 = vunpack.c.h.b16 %v4762
          %v5525 = vunpack.c.l.b16 %v4763
          %v5526 = vunpack.c.h.b16 %v4763
          %v5527 = vunpack.c.l.b16 %v4764
          %v5528 = vunpack.c.h.b16 %v4764
          %v5529 = vunpack.c.l.b16 %v4765
          %v5530 = vunpack.c.h.b16 %v4765
          %v5531 = vunpack.c.l.b16 %v4766
          %v5532 = vunpack.c.h.b16 %v4766
          %v5533 = vunpack.c.l.b16 %v4767
          %v5534 = vunpack.c.h.b16 %v4767
          %v5535 = vunpack.c.l.b16 %v4768
          %v5536 = vunpack.c.h.b16 %v4768
          %v5537 = vunpack.c.l.b16 %v4769
          %v5538 = vunpack.c.h.b16 %v4769
          %v5539 = vunpack.c.l.b16 %v4770
          %v5540 = vunpack.c.h.b16 %v4770
          %v5541 = vunpack.c.l.b16 %v4771
          %v5542 = vunpack.c.h.b16 %v4771
          %v5543 = vunpack.c.l.b16 %v4772
          %v5544 = vunpack.c.h.b16 %v4772
          %v5545 = vunpack.c.l.b16 %v4773
          %v5546 = vunpack.c.h.b16 %v4773
          %v5547 = vunpack.c.l.b16 %v4774
          %v5548 = vunpack.c.h.b16 %v4774
          %v5549 = vunpack.c.l.b16 %v4775
          %v5550 = vunpack.c.h.b16 %v4775
          %v5551 = vunpack.c.l.b16 %v4776
          %v5552 = vunpack.c.h.b16 %v4776
          %v5553 = vunpack.c.l.b16 %v4777
          %v5554 = vunpack.c.h.b16 %v4777
          %v5555 = vunpack.c.l.b16 %v4778
          %v5556 = vunpack.c.h.b16 %v4778
          %v5557 = vunpack.c.l.b16 %v4779
          %v5558 = vunpack.c.h.b16 %v4779
          %v5559 = vunpack.c.l.b16 %v4780
          %v5560 = vunpack.c.h.b16 %v4780
          %v5561 = vunpack.c.l.b16 %v4781
          %v5562 = vunpack.c.h.b16 %v4781
          %v5563 = vunpack.c.l.b16 %v4782
          %v5564 = vunpack.c.h.b16 %v4782
          %v5565 = vunpack.c.l.b16 %v4783
          %v5566 = vunpack.c.h.b16 %v4783
          %v5567 = vunpack.c.l.b16 %v4784
          %v5568 = vunpack.c.h.b16 %v4784
          %v5569 = vunpack.c.l.b16 %v4785
          %v5570 = vunpack.c.h.b16 %v4785
          %v5571 = vunpack.c.l.b16 %v4786
          %v5572 = vunpack.c.h.b16 %v4786
          %v5573 = vunpack.c.l.b16 %v4787
          %v5574 = vunpack.c.h.b16 %v4787
          %v5575 = vunpack.c.l.b16 %v4788
          %v5576 = vunpack.c.h.b16 %v4788
          %v5577 = vunpack.c.l.b16 %v4789
          %v5578 = vunpack.c.h.b16 %v4789
          %v5579 = vunpack.c.l.b16 %v4790
          %v5580 = vunpack.c.h.b16 %v4790
          %v5581 = vpack.c.b16 %v5073, %v5069
          %v5582 = vpack.c.b16 %v5074, %v5070
          %v5583 = vpack.c.b16 %v5075, %v5071
          %v5584 = vpack.c.b16 %v5076, %v5072
          %v5585 = vpack.c.b16 %v5081, %v5077
          %v5586 = vpack.c.b16 %v5082, %v5078
          %v5587 = vpack.c.b16 %v5083, %v5079
          %v5588 = vpack.c.b16 %v5084, %v5080
          %v5589 = vpack.c.b16 %v5089, %v5085
          %v5590 = vpack.c.b16 %v5090, %v5086
          %v5591 = vpack.c.b16 %v5091, %v5087
          %v5592 = vpack.c.b16 %v5092, %v5088
          %v5593 = vpack.c.b16 %v5097, %v5093
          %v5594 = vpack.c.b16 %v5098, %v5094
          %v5595 = vpack.c.b16 %v5099, %v5095
          %v5596 = vpack.c.b16 %v5100, %v5096
          %v5597 = vpack.c.b16 %v5105, %v5101
          %v5598 = vpack.c.b16 %v5106, %v5102
          %v5599 = vpack.c.b16 %v5107, %v5103
          %v5600 = vpack.c.b16 %v5108, %v5104
          %v5601 = vpack.c.b16 %v5113, %v5109
          %v5602 = vpack.c.b16 %v5114, %v5110
          %v5603 = vpack.c.b16 %v5115, %v5111
          %v5604 = vpack.c.b16 %v5116, %v5112
          %v5605 = vpack.c.b16 %v5121, %v5117
          %v5606 = vpack.c.b16 %v5122, %v5118
          %v5607 = vpack.c.b16 %v5123, %v5119
          %v5608 = vpack.c.b16 %v5124, %v5120
          %v5609 = vpack.c.b16 %v5129, %v5125
          %v5610 = vpack.c.b16 %v5130, %v5126
          %v5611 = vpack.c.b16 %v5131, %v5127
          %v5612 = vpack.c.b16 %v5132, %v5128
          %v5613 = vpack.c.b16 %v5137, %v5133
          %v5614 = vpack.c.b16 %v5138, %v5134
          %v5615 = vpack.c.b16 %v5139, %v5135
          %v5616 = vpack.c.b16 %v5140, %v5136
          %v5617 = vpack.c.b16 %v5145, %v5141
          %v5618 = vpack.c.b16 %v5146, %v5142
          %v5619 = vpack.c.b16 %v5147, %v5143
          %v5620 = vpack.c.b16 %v5148, %v5144
          %v5621 = vpack.c.b16 %v5153, %v5149
          %v5622 = vpack.c.b16 %v5154, %v5150
          %v5623 = vpack.c.b16 %v5155, %v5151
          %v5624 = vpack.c.b16 %v5156, %v5152
          %v5625 = vpack.c.b16 %v5161, %v5157
          %v5626 = vpack.c.b16 %v5162, %v5158
          %v5627 = vpack.c.b16 %v5163, %v5159
          %v5628 = vpack.c.b16 %v5164, %v5160
          %v5629 = vpack.c.b16 %v5169, %v5165
          %v5630 = vpack.c.b16 %v5170, %v5166
          %v5631 = vpack.c.b16 %v5171, %v5167
          %v5632 = vpack.c.b16 %v5172, %v5168
          %v5633 = vpack.c.b16 %v5177, %v5173
          %v5634 = vpack.c.b16 %v5178, %v5174
          %v5635 = vpack.c.b16 %v5179, %v5175
          %v5636 = vpack.c.b16 %v5180, %v5176
          %v5637 = vpack.c.b16 %v5185, %v5181
          %v5638 = vpack.c.b16 %v5186, %v5182
          %v5639 = vpack.c.b16 %v5187, %v5183
          %v5640 = vpack.c.b16 %v5188, %v5184
          %v5641 = vpack.c.b16 %v5193, %v5189
          %v5642 = vpack.c.b16 %v5194, %v5190
          %v5643 = vpack.c.b16 %v5195, %v5191
          %v5644 = vpack.c.b16 %v5196, %v5192
          %v5645 = vpack.c.b16 %v5201, %v5197
          %v5646 = vpack.c.b16 %v5202, %v5198
          %v5647 = vpack.c.b16 %v5203, %v5199
          %v5648 = vpack.c.b16 %v5204, %v5200
          %v5649 = vpack.c.b16 %v5209, %v5205
          %v5650 = vpack.c.b16 %v5210, %v5206
          %v5651 = vpack.c.b16 %v5211, %v5207
          %v5652 = vpack.c.b16 %v5212, %v5208
          %v5653 = vpack.c.b16 %v5217, %v5213
          %v5654 = vpack.c.b16 %v5218, %v5214
          %v5655 = vpack.c.b16 %v5219, %v5215
          %v5656 = vpack.c.b16 %v5220, %v5216
          %v5657 = vpack.c.b16 %v5225, %v5221
          %v5658 = vpack.c.b16 %v5226, %v5222
          %v5659 = vpack.c.b16 %v5227, %v5223
          %v5660 = vpack.c.b16 %v5228, %v5224
          %v5661 = vpack.c.b16 %v5233, %v5229
          %v5662 = vpack.c.b16 %v5234, %v5230
          %v5663 = vpack.c.b16 %v5235, %v5231
          %v5664 = vpack.c.b16 %v5236, %v5232
          %v5665 = vpack.c.b16 %v5241, %v5237
          %v5666 = vpack.c.b16 %v5242, %v5238
          %v5667 = vpack.c.b16 %v5243, %v5239
          %v5668 = vpack.c.b16 %v5244, %v5240
          %v5669 = vpack.c.b16 %v5249, %v5245
          %v5670 = vpack.c.b16 %v5250, %v5246
          %v5671 = vpack.c.b16 %v5251, %v5247
          %v5672 = vpack.c.b16 %v5252, %v5248
          %v5673 = vpack.c.b16 %v5257, %v5253
          %v5674 = vpack.c.b16 %v5258, %v5254
          %v5675 = vpack.c.b16 %v5259, %v5255
          %v5676 = vpack.c.b16 %v5260, %v5256
          %v5677 = vpack.c.b16 %v5265, %v5261
          %v5678 = vpack.c.b16 %v5266, %v5262
          %v5679 = vpack.c.b16 %v5267, %v5263
          %v5680 = vpack.c.b16 %v5268, %v5264
          %v5681 = vpack.c.b16 %v5273, %v5269
          %v5682 = vpack.c.b16 %v5274, %v5270
          %v5683 = vpack.c.b16 %v5275, %v5271
          %v5684 = vpack.c.b16 %v5276, %v5272
          %v5685 = vpack.c.b16 %v5281, %v5277
          %v5686 = vpack.c.b16 %v5282, %v5278
          %v5687 = vpack.c.b16 %v5283, %v5279
          %v5688 = vpack.c.b16 %v5284, %v5280
          %v5689 = vpack.c.b16 %v5289, %v5285
          %v5690 = vpack.c.b16 %v5290, %v5286
          %v5691 = vpack.c.b16 %v5291, %v5287
          %v5692 = vpack.c.b16 %v5292, %v5288
          %v5693 = vpack.c.b16 %v5297, %v5293
          %v5694 = vpack.c.b16 %v5298, %v5294
          %v5695 = vpack.c.b16 %v5299, %v5295
          %v5696 = vpack.c.b16 %v5300, %v5296
          %v5697 = vpack.c.b16 %v5305, %v5301
          %v5698 = vpack.c.b16 %v5306, %v5302
          %v5699 = vpack.c.b16 %v5307, %v5303
          %v5700 = vpack.c.b16 %v5308, %v5304
          %v5701 = vpack.c.b16 %v5313, %v5309
          %v5702 = vpack.c.b16 %v5314, %v5310
          %v5703 = vpack.c.b16 %v5315, %v5311
          %v5704 = vpack.c.b16 %v5316, %v5312
          %v5705 = vpack.c.b16 %v5321, %v5317
          %v5706 = vpack.c.b16 %v5322, %v5318
          %v5707 = vpack.c.b16 %v5323, %v5319
          %v5708 = vpack.c.b16 %v5324, %v5320
          %v5709 = vpack.c.b16 %v5329, %v5325
          %v5710 = vpack.c.b16 %v5330, %v5326
          %v5711 = vpack.c.b16 %v5331, %v5327
          %v5712 = vpack.c.b16 %v5332, %v5328
          %v5713 = vpack.c.b16 %v5337, %v5333
          %v5714 = vpack.c.b16 %v5338, %v5334
          %v5715 = vpack.c.b16 %v5339, %v5335
          %v5716 = vpack.c.b16 %v5340, %v5336
          %v5717 = vpack.c.b16 %v5345, %v5341
          %v5718 = vpack.c.b16 %v5346, %v5342
          %v5719 = vpack.c.b16 %v5347, %v5343
          %v5720 = vpack.c.b16 %v5348, %v5344
          %v5721 = vpack.c.b16 %v5353, %v5349
          %v5722 = vpack.c.b16 %v5354, %v5350
          %v5723 = vpack.c.b16 %v5355, %v5351
          %v5724 = vpack.c.b16 %v5356, %v5352
          %v5725 = vpack.c.b16 %v5361, %v5357
          %v5726 = vpack.c.b16 %v5362, %v5358
          %v5727 = vpack.c.b16 %v5363, %v5359
          %v5728 = vpack.c.b16 %v5364, %v5360
          %v5729 = vpack.c.b16 %v5369, %v5365
          %v5730 = vpack.c.b16 %v5370, %v5366
          %v5731 = vpack.c.b16 %v5371, %v5367
          %v5732 = vpack.c.b16 %v5372, %v5368
          %v5733 = vpack.c.b16 %v5377, %v5373
          %v5734 = vpack.c.b16 %v5378, %v5374
          %v5735 = vpack.c.b16 %v5379, %v5375
          %v5736 = vpack.c.b16 %v5380, %v5376
          %v5737 = vpack.c.b16 %v5385, %v5381
          %v5738 = vpack.c.b16 %v5386, %v5382
          %v5739 = vpack.c.b16 %v5387, %v5383
          %v5740 = vpack.c.b16 %v5388, %v5384
          %v5741 = vpack.c.b16 %v5393, %v5389
          %v5742 = vpack.c.b16 %v5394, %v5390
          %v5743 = vpack.c.b16 %v5395, %v5391
          %v5744 = vpack.c.b16 %v5396, %v5392
          %v5745 = vpack.c.b16 %v5401, %v5397
          %v5746 = vpack.c.b16 %v5402, %v5398
          %v5747 = vpack.c.b16 %v5403, %v5399
          %v5748 = vpack.c.b16 %v5404, %v5400
          %v5749 = vpack.c.b16 %v5409, %v5405
          %v5750 = vpack.c.b16 %v5410, %v5406
          %v5751 = vpack.c.b16 %v5411, %v5407
          %v5752 = vpack.c.b16 %v5412, %v5408
          %v5753 = vpack.c.b16 %v5417, %v5413
          %v5754 = vpack.c.b16 %v5418, %v5414
          %v5755 = vpack.c.b16 %v5419, %v5415
          %v5756 = vpack.c.b16 %v5420, %v5416
          %v5757 = vpack.c.b16 %v5425, %v5421
          %v5758 = vpack.c.b16 %v5426, %v5422
          %v5759 = vpack.c.b16 %v5427, %v5423
          %v5760 = vpack.c.b16 %v5428, %v5424
          %v5761 = vpack.c.b16 %v5433, %v5429
          %v5762 = vpack.c.b16 %v5434, %v5430
          %v5763 = vpack.c.b16 %v5435, %v5431
          %v5764 = vpack.c.b16 %v5436, %v5432
          %v5765 = vpack.c.b16 %v5441, %v5437
          %v5766 = vpack.c.b16 %v5442, %v5438
          %v5767 = vpack.c.b16 %v5443, %v5439
          %v5768 = vpack.c.b16 %v5444, %v5440
          %v5769 = vpack.c.b16 %v5449, %v5445
          %v5770 = vpack.c.b16 %v5450, %v5446
          %v5771 = vpack.c.b16 %v5451, %v5447
          %v5772 = vpack.c.b16 %v5452, %v5448
          %v5773 = vpack.c.b16 %v5457, %v5453
          %v5774 = vpack.c.b16 %v5458, %v5454
          %v5775 = vpack.c.b16 %v5459, %v5455
          %v5776 = vpack.c.b16 %v5460, %v5456
          %v5777 = vpack.c.b16 %v5465, %v5461
          %v5778 = vpack.c.b16 %v5466, %v5462
          %v5779 = vpack.c.b16 %v5467, %v5463
          %v5780 = vpack.c.b16 %v5468, %v5464
          %v5781 = vpack.c.b16 %v5473, %v5469
          %v5782 = vpack.c.b16 %v5474, %v5470
          %v5783 = vpack.c.b16 %v5475, %v5471
          %v5784 = vpack.c.b16 %v5476, %v5472
          %v5785 = vpack.c.b16 %v5481, %v5477
          %v5786 = vpack.c.b16 %v5482, %v5478
          %v5787 = vpack.c.b16 %v5483, %v5479
          %v5788 = vpack.c.b16 %v5484, %v5480
          %v5789 = vpack.c.b16 %v5489, %v5485
          %v5790 = vpack.c.b16 %v5490, %v5486
          %v5791 = vpack.c.b16 %v5491, %v5487
          %v5792 = vpack.c.b16 %v5492, %v5488
          %v5793 = vpack.c.b16 %v5497, %v5493
          %v5794 = vpack.c.b16 %v5498, %v5494
          %v5795 = vpack.c.b16 %v5499, %v5495
          %v5796 = vpack.c.b16 %v5500, %v5496
          %v5797 = vpack.c.b16 %v5505, %v5501
          %v5798 = vpack.c.b16 %v5506, %v5502
          %v5799 = vpack.c.b16 %v5507, %v5503
          %v5800 = vpack.c.b16 %v5508, %v5504
          %v5801 = vpack.c.b16 %v5513, %v5509
          %v5802 = vpack.c.b16 %v5514, %v5510
          %v5803 = vpack.c.b16 %v5515, %v5511
          %v5804 = vpack.c.b16 %v5516, %v5512
          %v5805 = vpack.c.b16 %v5521, %v5517
          %v5806 = vpack.c.b16 %v5522, %v5518
          %v5807 = vpack.c.b16 %v5523, %v5519
          %v5808 = vpack.c.b16 %v5524, %v5520
          %v5809 = vpack.c.b16 %v5529, %v5525
          %v5810 = vpack.c.b16 %v5530, %v5526
          %v5811 = vpack.c.b16 %v5531, %v5527
          %v5812 = vpack.c.b16 %v5532, %v5528
          %v5813 = vpack.c.b16 %v5537, %v5533
          %v5814 = vpack.c.b16 %v5538, %v5534
          %v5815 = vpack.c.b16 %v5539, %v5535
          %v5816 = vpack.c.b16 %v5540, %v5536
          %v5817 = vpack.c.b16 %v5545, %v5541
          %v5818 = vpack.c.b16 %v5546, %v5542
          %v5819 = vpack.c.b16 %v5547, %v5543
          %v5820 = vpack.c.b16 %v5548, %v5544
          %v5821 = vpack.c.b16 %v5553, %v5549
          %v5822 = vpack.c.b16 %v5554, %v5550
          %v5823 = vpack.c.b16 %v5555, %v5551
          %v5824 = vpack.c.b16 %v5556, %v5552
          %v5825 = vpack.c.b16 %v5561, %v5557
          %v5826 = vpack.c.b16 %v5562, %v5558
          %v5827 = vpack.c.b16 %v5563, %v5559
          %v5828 = vpack.c.b16 %v5564, %v5560
          %v5829 = vpack.c.b16 %v5569, %v5565
          %v5830 = vpack.c.b16 %v5570, %v5566
          %v5831 = vpack.c.b16 %v5571, %v5567
          %v5832 = vpack.c.b16 %v5572, %v5568
          %v5833 = vpack.c.b16 %v5577, %v5573
          %v5834 = vpack.c.b16 %v5578, %v5574
          %v5835 = vpack.c.b16 %v5579, %v5575
          %v5836 = vpack.c.b16 %v5580, %v5576
          %6093 = vmatprep.subr.bf16.mxu0 %v5610
          %6094 = vmatpush1.bf16.msra.mxu0 %v5609
          %6095 = vmatprep.subr.bf16.mxu0 %v5606
          %6096 = vmatpush1.bf16.msra.mxu0 %v5605
          %6097 = vmatprep.subr.bf16.mxu0 %v5602
          %6098 = vmatpush1.bf16.msra.mxu0 %v5601
          %6099 = vmatprep.subr.bf16.mxu0 %v5598
          %6100 = vmatpush1.bf16.msra.mxu0 %v5597
          %6101 = vmatprep.subr.bf16.mxu0 %v5594
          %6102 = vmatpush1.bf16.msra.mxu0 %v5593
          %6103 = vmatprep.subr.bf16.mxu0 %v5590
          %6104 = vmatpush1.bf16.msra.mxu0 %v5589
          %6105 = vmatprep.subr.bf16.mxu0 %v5586
          %6106 = vmatpush1.bf16.msra.mxu0 %v5585
          %6107 = vmatprep.subr.bf16.mxu0 %v5582
          %6108 = vmatpush1.bf16.msra.mxu0 %v5581
          %6109 = vmatprep.subr.bf16.mxu0 %v5642
          %6110 = vmatpush2.bf16.msra.mxu0 %v5641
          %6111 = vmatprep.subr.bf16.mxu0 %v5638
          %6112 = vmatpush2.bf16.msra.mxu0 %v5637
          %6113 = vmatprep.subr.bf16.mxu0 %v5634
          %6114 = vmatpush2.bf16.msra.mxu0 %v5633
          %6115 = vmatprep.subr.bf16.mxu0 %v5630
          %6116 = vmatpush2.bf16.msra.mxu0 %v5629
          %6117 = vmatprep.subr.bf16.mxu0 %v5626
          %6118 = vmatpush2.bf16.msra.mxu0 %v5625
          %6119 = vmatprep.subr.bf16.mxu0 %v5622
          %6120 = vmatpush2.bf16.msra.mxu0 %v5621
          %6121 = vmatprep.subr.bf16.mxu0 %v5618
          %6122 = vmatpush2.bf16.msra.mxu0 %v5617
          %6123 = vmatprep.subr.bf16.mxu0 %v5614
          %6124 = vmatpush2.bf16.msra.mxu0 %v5613
          %6125 = vmatprep.mubr.bf16.mxu0 %v4528
          %6126 = vmatmul.mubr.bf16.gmra.mxu0 %v4527
          %v6127 = vpop.f32.mrf.mxu0
          %v6128 = vadd.f32 %v4796, %v6127
          %v6129 = vpop.f32.mrf.mxu0
          %v6130 = vadd.f32 %v4800, %v6129
          %v6131 = vpop.f32.mrf.mxu0
          %v6132 = vadd.f32 %v4796, %v6131
          %v6133 = vpop.f32.mrf.mxu0
          %v6134 = vadd.f32 %v4800, %v6133
          %6135 = vdwg.mxu0
          %6136 = vmatprep.subr.bf16.mxu0 %v5674
          %6137 = vmatpush1.bf16.msra.mxu0 %v5673
          %6138 = vmatprep.subr.bf16.mxu0 %v5670
          %6139 = vmatpush1.bf16.msra.mxu0 %v5669
          %6140 = vmatprep.subr.bf16.mxu0 %v5666
          %6141 = vmatpush1.bf16.msra.mxu0 %v5665
          %6142 = vmatprep.subr.bf16.mxu0 %v5662
          %6143 = vmatpush1.bf16.msra.mxu0 %v5661
          %6144 = vmatprep.subr.bf16.mxu0 %v5658
          %6145 = vmatpush1.bf16.msra.mxu0 %v5657
          %6146 = vmatprep.subr.bf16.mxu0 %v5654
          %6147 = vmatpush1.bf16.msra.mxu0 %v5653
          %6148 = vmatprep.subr.bf16.mxu0 %v5650
          %6149 = vmatpush1.bf16.msra.mxu0 %v5649
          %6150 = vmatprep.subr.bf16.mxu0 %v5646
          %6151 = vmatpush1.bf16.msra.mxu0 %v5645
          %6152 = vmatprep.subr.bf16.mxu0 %v5706
          %6153 = vmatpush2.bf16.msra.mxu0 %v5705
          %6154 = vmatprep.subr.bf16.mxu0 %v5702
          %6155 = vmatpush2.bf16.msra.mxu0 %v5701
          %6156 = vmatprep.subr.bf16.mxu0 %v5698
          %6157 = vmatpush2.bf16.msra.mxu0 %v5697
          %6158 = vmatprep.subr.bf16.mxu0 %v5694
          %6159 = vmatpush2.bf16.msra.mxu0 %v5693
          %6160 = vmatprep.subr.bf16.mxu0 %v5690
          %6161 = vmatpush2.bf16.msra.mxu0 %v5689
          %6162 = vmatprep.subr.bf16.mxu0 %v5686
          %6163 = vmatpush2.bf16.msra.mxu0 %v5685
          %6164 = vmatprep.subr.bf16.mxu0 %v5682
          %6165 = vmatpush2.bf16.msra.mxu0 %v5681
          %6166 = vmatprep.subr.bf16.mxu0 %v5678
          %6167 = vmatpush2.bf16.msra.mxu0 %v5677
          %6168 = vmatprep.mubr.bf16.mxu0 %v4530
          %6169 = vmatmul.mubr.bf16.gmra.mxu0 %v4529
          %v6170 = vpop.f32.mrf.mxu0
          %v6171 = vadd.f32 %v6128, %v6170
          %v6172 = vpop.f32.mrf.mxu0
          %v6173 = vadd.f32 %v6130, %v6172
          %v6174 = vpop.f32.mrf.mxu0
          %v6175 = vadd.f32 %v6132, %v6174
          %v6176 = vpop.f32.mrf.mxu0
          %v6177 = vadd.f32 %v6134, %v6176
          %6178 = vdwg.mxu0
          %6179 = vmatprep.subr.bf16.mxu0 %v5738
          %6180 = vmatpush1.bf16.msra.mxu0 %v5737
          %6181 = vmatprep.subr.bf16.mxu0 %v5734
          %6182 = vmatpush1.bf16.msra.mxu0 %v5733
          %6183 = vmatprep.subr.bf16.mxu0 %v5730
          %6184 = vmatpush1.bf16.msra.mxu0 %v5729
          %6185 = vmatprep.subr.bf16.mxu0 %v5726
          %6186 = vmatpush1.bf16.msra.mxu0 %v5725
          %6187 = vmatprep.subr.bf16.mxu0 %v5722
          %6188 = vmatpush1.bf16.msra.mxu0 %v5721
          %6189 = vmatprep.subr.bf16.mxu0 %v5718
          %6190 = vmatpush1.bf16.msra.mxu0 %v5717
          %6191 = vmatprep.subr.bf16.mxu0 %v5714
          %6192 = vmatpush1.bf16.msra.mxu0 %v5713
          %6193 = vmatprep.subr.bf16.mxu0 %v5710
          %6194 = vmatpush1.bf16.msra.mxu0 %v5709
          %6195 = vmatprep.subr.bf16.mxu0 %v5770
          %6196 = vmatpush2.bf16.msra.mxu0 %v5769
          %6197 = vmatprep.subr.bf16.mxu0 %v5766
          %6198 = vmatpush2.bf16.msra.mxu0 %v5765
          %6199 = vmatprep.subr.bf16.mxu0 %v5762
          %6200 = vmatpush2.bf16.msra.mxu0 %v5761
          %6201 = vmatprep.subr.bf16.mxu0 %v5758
          %6202 = vmatpush2.bf16.msra.mxu0 %v5757
          %6203 = vmatprep.subr.bf16.mxu0 %v5754
          %6204 = vmatpush2.bf16.msra.mxu0 %v5753
          %6205 = vmatprep.subr.bf16.mxu0 %v5750
          %6206 = vmatpush2.bf16.msra.mxu0 %v5749
          %6207 = vmatprep.subr.bf16.mxu0 %v5746
          %6208 = vmatpush2.bf16.msra.mxu0 %v5745
          %6209 = vmatprep.subr.bf16.mxu0 %v5742
          %6210 = vmatpush2.bf16.msra.mxu0 %v5741
          %6211 = vmatprep.mubr.bf16.mxu0 %v4532
          %6212 = vmatmul.mubr.bf16.gmra.mxu0 %v4531
          %v6213 = vpop.f32.mrf.mxu0
          %v6214 = vadd.f32 %v6171, %v6213
          %v6215 = vpop.f32.mrf.mxu0
          %v6216 = vadd.f32 %v6173, %v6215
          %v6217 = vpop.f32.mrf.mxu0
          %v6218 = vadd.f32 %v6175, %v6217
          %v6219 = vpop.f32.mrf.mxu0
          %v6220 = vadd.f32 %v6177, %v6219
          %6221 = vdwg.mxu0
          %6222 = vmatprep.subr.bf16.mxu0 %v5802
          %6223 = vmatpush1.bf16.msra.mxu0 %v5801
          %6224 = vmatprep.subr.bf16.mxu0 %v5798
          %6225 = vmatpush1.bf16.msra.mxu0 %v5797
          %6226 = vmatprep.subr.bf16.mxu0 %v5794
          %6227 = vmatpush1.bf16.msra.mxu0 %v5793
          %6228 = vmatprep.subr.bf16.mxu0 %v5790
          %6229 = vmatpush1.bf16.msra.mxu0 %v5789
          %6230 = vmatprep.subr.bf16.mxu0 %v5786
          %6231 = vmatpush1.bf16.msra.mxu0 %v5785
          %6232 = vmatprep.subr.bf16.mxu0 %v5782
          %6233 = vmatpush1.bf16.msra.mxu0 %v5781
          %6234 = vmatprep.subr.bf16.mxu0 %v5778
          %6235 = vmatpush1.bf16.msra.mxu0 %v5777
          %6236 = vmatprep.subr.bf16.mxu0 %v5774
          %6237 = vmatpush1.bf16.msra.mxu0 %v5773
          %6238 = vmatprep.subr.bf16.mxu0 %v5834
          %6239 = vmatpush2.bf16.msra.mxu0 %v5833
          %6240 = vmatprep.subr.bf16.mxu0 %v5830
          %6241 = vmatpush2.bf16.msra.mxu0 %v5829
          %6242 = vmatprep.subr.bf16.mxu0 %v5826
          %6243 = vmatpush2.bf16.msra.mxu0 %v5825
          %6244 = vmatprep.subr.bf16.mxu0 %v5822
          %6245 = vmatpush2.bf16.msra.mxu0 %v5821
          %6246 = vmatprep.subr.bf16.mxu0 %v5818
          %6247 = vmatpush2.bf16.msra.mxu0 %v5817
          %6248 = vmatprep.subr.bf16.mxu0 %v5814
          %6249 = vmatpush2.bf16.msra.mxu0 %v5813
          %6250 = vmatprep.subr.bf16.mxu0 %v5810
          %6251 = vmatpush2.bf16.msra.mxu0 %v5809
          %6252 = vmatprep.subr.bf16.mxu0 %v5806
          %6253 = vmatpush2.bf16.msra.mxu0 %v5805
          %6254 = vmatprep.mubr.bf16.mxu0 %v4534
          %6255 = vmatmul.mubr.bf16.gmra.mxu0 %v4533
          %v6256 = vpop.f32.mrf.mxu0
          %v6257 = vadd.f32 %v6214, %v6256
          %v6258 = vpop.f32.mrf.mxu0
          %v6259 = vadd.f32 %v6216, %v6258
          %v6260 = vpop.f32.mrf.mxu0
          %v6261 = vadd.f32 %v6218, %v6260
          %v6262 = vpop.f32.mrf.mxu0
          %v6263 = vadd.f32 %v6220, %v6262
          %6264 = vdwg.mxu0
          %6265 = vmatprep.subr.bf16.mxu0 %v5612
          %6266 = vmatpush1.bf16.msra.mxu0 %v5611
          %6267 = vmatprep.subr.bf16.mxu0 %v5608
          %6268 = vmatpush1.bf16.msra.mxu0 %v5607
          %6269 = vmatprep.subr.bf16.mxu0 %v5604
          %6270 = vmatpush1.bf16.msra.mxu0 %v5603
          %6271 = vmatprep.subr.bf16.mxu0 %v5600
          %6272 = vmatpush1.bf16.msra.mxu0 %v5599
          %6273 = vmatprep.subr.bf16.mxu0 %v5596
          %6274 = vmatpush1.bf16.msra.mxu0 %v5595
          %6275 = vmatprep.subr.bf16.mxu0 %v5592
          %6276 = vmatpush1.bf16.msra.mxu0 %v5591
          %6277 = vmatprep.subr.bf16.mxu0 %v5588
          %6278 = vmatpush1.bf16.msra.mxu0 %v5587
          %6279 = vmatprep.subr.bf16.mxu0 %v5584
          %6280 = vmatpush1.bf16.msra.mxu0 %v5583
          %6281 = vmatprep.subr.bf16.mxu0 %v5644
          %6282 = vmatpush2.bf16.msra.mxu0 %v5643
          %6283 = vmatprep.subr.bf16.mxu0 %v5640
          %6284 = vmatpush2.bf16.msra.mxu0 %v5639
          %6285 = vmatprep.subr.bf16.mxu0 %v5636
          %6286 = vmatpush2.bf16.msra.mxu0 %v5635
          %6287 = vmatprep.subr.bf16.mxu0 %v5632
          %6288 = vmatpush2.bf16.msra.mxu0 %v5631
          %6289 = vmatprep.subr.bf16.mxu0 %v5628
          %6290 = vmatpush2.bf16.msra.mxu0 %v5627
          %6291 = vmatprep.subr.bf16.mxu0 %v5624
          %6292 = vmatpush2.bf16.msra.mxu0 %v5623
          %6293 = vmatprep.subr.bf16.mxu0 %v5620
          %6294 = vmatpush2.bf16.msra.mxu0 %v5619
          %6295 = vmatprep.subr.bf16.mxu0 %v5616
          %6296 = vmatpush2.bf16.msra.mxu0 %v5615
          %6297 = vmatprep.mubr.bf16.mxu0 %v4528
          %6298 = vmatmul.mubr.bf16.gmra.mxu0 %v4527
          %v6299 = vpop.f32.mrf.mxu0
          %v6300 = vadd.f32 %v4804, %v6299
          %v6301 = vpop.f32.mrf.mxu0
          %v6302 = vadd.f32 %v4808, %v6301
          %v6303 = vpop.f32.mrf.mxu0
          %v6304 = vadd.f32 %v4804, %v6303
          %v6305 = vpop.f32.mrf.mxu0
          %v6306 = vadd.f32 %v4808, %v6305
          %6307 = vdwg.mxu0
          %6308 = vmatprep.subr.bf16.mxu0 %v5676
          %6309 = vmatpush1.bf16.msra.mxu0 %v5675
          %6310 = vmatprep.subr.bf16.mxu0 %v5672
          %6311 = vmatpush1.bf16.msra.mxu0 %v5671
          %6312 = vmatprep.subr.bf16.mxu0 %v5668
          %6313 = vmatpush1.bf16.msra.mxu0 %v5667
          %6314 = vmatprep.subr.bf16.mxu0 %v5664
          %6315 = vmatpush1.bf16.msra.mxu0 %v5663
          %6316 = vmatprep.subr.bf16.mxu0 %v5660
          %6317 = vmatpush1.bf16.msra.mxu0 %v5659
          %6318 = vmatprep.subr.bf16.mxu0 %v5656
          %6319 = vmatpush1.bf16.msra.mxu0 %v5655
          %6320 = vmatprep.subr.bf16.mxu0 %v5652
          %6321 = vmatpush1.bf16.msra.mxu0 %v5651
          %6322 = vmatprep.subr.bf16.mxu0 %v5648
          %6323 = vmatpush1.bf16.msra.mxu0 %v5647
          %6324 = vmatprep.subr.bf16.mxu0 %v5708
          %6325 = vmatpush2.bf16.msra.mxu0 %v5707
          %6326 = vmatprep.subr.bf16.mxu0 %v5704
          %6327 = vmatpush2.bf16.msra.mxu0 %v5703
          %6328 = vmatprep.subr.bf16.mxu0 %v5700
          %6329 = vmatpush2.bf16.msra.mxu0 %v5699
          %6330 = vmatprep.subr.bf16.mxu0 %v5696
          %6331 = vmatpush2.bf16.msra.mxu0 %v5695
          %6332 = vmatprep.subr.bf16.mxu0 %v5692
          %6333 = vmatpush2.bf16.msra.mxu0 %v5691
          %6334 = vmatprep.subr.bf16.mxu0 %v5688
          %6335 = vmatpush2.bf16.msra.mxu0 %v5687
          %6336 = vmatprep.subr.bf16.mxu0 %v5684
          %6337 = vmatpush2.bf16.msra.mxu0 %v5683
          %6338 = vmatprep.subr.bf16.mxu0 %v5680
          %6339 = vmatpush2.bf16.msra.mxu0 %v5679
          %6340 = vmatprep.mubr.bf16.mxu0 %v4530
          %6341 = vmatmul.mubr.bf16.gmra.mxu0 %v4529
          %v6342 = vpop.f32.mrf.mxu0
          %v6343 = vadd.f32 %v6300, %v6342
          %v6344 = vpop.f32.mrf.mxu0
          %v6345 = vadd.f32 %v6302, %v6344
          %v6346 = vpop.f32.mrf.mxu0
          %v6347 = vadd.f32 %v6304, %v6346
          %v6348 = vpop.f32.mrf.mxu0
          %v6349 = vadd.f32 %v6306, %v6348
          %6350 = vdwg.mxu0
          %6351 = vmatprep.subr.bf16.mxu0 %v5740
          %6352 = vmatpush1.bf16.msra.mxu0 %v5739
          %6353 = vmatprep.subr.bf16.mxu0 %v5736
          %6354 = vmatpush1.bf16.msra.mxu0 %v5735
          %6355 = vmatprep.subr.bf16.mxu0 %v5732
          %6356 = vmatpush1.bf16.msra.mxu0 %v5731
          %6357 = vmatprep.subr.bf16.mxu0 %v5728
          %6358 = vmatpush1.bf16.msra.mxu0 %v5727
          %6359 = vmatprep.subr.bf16.mxu0 %v5724
          %6360 = vmatpush1.bf16.msra.mxu0 %v5723
          %6361 = vmatprep.subr.bf16.mxu0 %v5720
          %6362 = vmatpush1.bf16.msra.mxu0 %v5719
          %6363 = vmatprep.subr.bf16.mxu0 %v5716
          %6364 = vmatpush1.bf16.msra.mxu0 %v5715
          %6365 = vmatprep.subr.bf16.mxu0 %v5712
          %6366 = vmatpush1.bf16.msra.mxu0 %v5711
          %6367 = vmatprep.subr.bf16.mxu0 %v5772
          %6368 = vmatpush2.bf16.msra.mxu0 %v5771
          %6369 = vmatprep.subr.bf16.mxu0 %v5768
          %6370 = vmatpush2.bf16.msra.mxu0 %v5767
          %6371 = vmatprep.subr.bf16.mxu0 %v5764
          %6372 = vmatpush2.bf16.msra.mxu0 %v5763
          %6373 = vmatprep.subr.bf16.mxu0 %v5760
          %6374 = vmatpush2.bf16.msra.mxu0 %v5759
          %6375 = vmatprep.subr.bf16.mxu0 %v5756
          %6376 = vmatpush2.bf16.msra.mxu0 %v5755
          %6377 = vmatprep.subr.bf16.mxu0 %v5752
          %6378 = vmatpush2.bf16.msra.mxu0 %v5751
          %6379 = vmatprep.subr.bf16.mxu0 %v5748
          %6380 = vmatpush2.bf16.msra.mxu0 %v5747
          %6381 = vmatprep.subr.bf16.mxu0 %v5744
          %6382 = vmatpush2.bf16.msra.mxu0 %v5743
          %6383 = vmatprep.mubr.bf16.mxu0 %v4532
          %6384 = vmatmul.mubr.bf16.gmra.mxu0 %v4531
          %v6385 = vpop.f32.mrf.mxu0
          %v6386 = vadd.f32 %v6343, %v6385
          %v6387 = vpop.f32.mrf.mxu0
          %v6388 = vadd.f32 %v6345, %v6387
          %v6389 = vpop.f32.mrf.mxu0
          %v6390 = vadd.f32 %v6347, %v6389
          %v6391 = vpop.f32.mrf.mxu0
          %v6392 = vadd.f32 %v6349, %v6391
          %6393 = vdwg.mxu0
          %6394 = vmatprep.subr.bf16.mxu0 %v5804
          %6395 = vmatpush1.bf16.msra.mxu0 %v5803
          %6396 = vmatprep.subr.bf16.mxu0 %v5800
          %6397 = vmatpush1.bf16.msra.mxu0 %v5799
          %6398 = vmatprep.subr.bf16.mxu0 %v5796
          %6399 = vmatpush1.bf16.msra.mxu0 %v5795
          %6400 = vmatprep.subr.bf16.mxu0 %v5792
          %6401 = vmatpush1.bf16.msra.mxu0 %v5791
          %6402 = vmatprep.subr.bf16.mxu0 %v5788
          %6403 = vmatpush1.bf16.msra.mxu0 %v5787
          %6404 = vmatprep.subr.bf16.mxu0 %v5784
          %6405 = vmatpush1.bf16.msra.mxu0 %v5783
          %6406 = vmatprep.subr.bf16.mxu0 %v5780
          %6407 = vmatpush1.bf16.msra.mxu0 %v5779
          %6408 = vmatprep.subr.bf16.mxu0 %v5776
          %6409 = vmatpush1.bf16.msra.mxu0 %v5775
          %6410 = vmatprep.subr.bf16.mxu0 %v5836
          %6411 = vmatpush2.bf16.msra.mxu0 %v5835
          %6412 = vmatprep.subr.bf16.mxu0 %v5832
          %6413 = vmatpush2.bf16.msra.mxu0 %v5831
          %6414 = vmatprep.subr.bf16.mxu0 %v5828
          %6415 = vmatpush2.bf16.msra.mxu0 %v5827
          %6416 = vmatprep.subr.bf16.mxu0 %v5824
          %6417 = vmatpush2.bf16.msra.mxu0 %v5823
          %6418 = vmatprep.subr.bf16.mxu0 %v5820
          %6419 = vmatpush2.bf16.msra.mxu0 %v5819
          %6420 = vmatprep.subr.bf16.mxu0 %v5816
          %6421 = vmatpush2.bf16.msra.mxu0 %v5815
          %6422 = vmatprep.subr.bf16.mxu0 %v5812
          %6423 = vmatpush2.bf16.msra.mxu0 %v5811
          %6424 = vmatprep.subr.bf16.mxu0 %v5808
          %6425 = vmatpush2.bf16.msra.mxu0 %v5807
          %6426 = vmatprep.mubr.bf16.mxu0 %v4534
          %6427 = vmatmul.mubr.bf16.gmra.mxu0 %v4533
          %v6428 = vpop.f32.mrf.mxu0
          %v6429 = vadd.f32 %v6386, %v6428
          %v6430 = vpop.f32.mrf.mxu0
          %v6431 = vadd.f32 %v6388, %v6430
          %v6432 = vpop.f32.mrf.mxu0
          %v6433 = vadd.f32 %v6390, %v6432
          %v6434 = vpop.f32.mrf.mxu0
          %v6435 = vadd.f32 %v6392, %v6434
          %6436 = vdwg.mxu0
          %v6437 = vmax.f32 %v6257, 0.0
          %v6438 = vmax.f32 %v6259, 0.0
          %v6439 = vmax.f32 %v6429, 0.0
          %v6440 = vmax.f32 %v6431, 0.0
          %v6441 = vmax.f32 %v6261, 0.0
          %v6442 = vmax.f32 %v6263, 0.0
          %v6443 = vmax.f32 %v6433, 0.0
          %v6444 = vmax.f32 %v6435, 0.0
          %v6445 = vpack.c.bf16 %v6441, %v6437
          %v6446 = vpack.c.bf16 %v6442, %v6438
          %v6447 = vpack.c.bf16 %v6443, %v6439
          %v6448 = vpack.c.bf16 %v6444, %v6440
          %v6449 = vld [vmem:[%s9] sm:$0xff]
          %v6450 = vld [vmem:[%s9 + $0x8] sm:$0xff]
          %v6451 = vld [vmem:[%s9 + $0x10] sm:$0xff]
          %v6452 = vld [vmem:[%s9 + $0x18] sm:$0xff]
          %v6453 = vld [vmem:[%s9 + $0x20] sm:$0xff]
          %v6454 = vld [vmem:[%s9 + $0x28] sm:$0xff]
          %v6455 = vld [vmem:[%s9 + $0x30] sm:$0xff]
          %v6456 = vld [vmem:[%s9 + $0x38] sm:$0xff]
          %v6457 = vld [vmem:[%s9 + $0x40] sm:$0xff]
          %v6458 = vld [vmem:[%s9 + $0x48] sm:$0xff]
          %v6459 = vld [vmem:[%s9 + $0x50] sm:$0xff]
          %v6460 = vld [vmem:[%s9 + $0x58] sm:$0xff]
          %v6461 = vld [vmem:[%s9 + $0x60] sm:$0xff]
          %v6462 = vld [vmem:[%s9 + $0x68] sm:$0xff]
          %v6463 = vld [vmem:[%s9 + $0x70] sm:$0xff]
          %v6464 = vld [vmem:[%s9 + $0x78] sm:$0xff]
          %v6465 = vld [vmem:[%s9 + $0x80] sm:$0xff]
          %v6466 = vld [vmem:[%s9 + $0x88] sm:$0xff]
          %v6467 = vld [vmem:[%s9 + $0x90] sm:$0xff]
          %v6468 = vld [vmem:[%s9 + $0x98] sm:$0xff]
          %v6469 = vld [vmem:[%s9 + $0xa0] sm:$0xff]
          %v6470 = vld [vmem:[%s9 + $0xa8] sm:$0xff]
          %v6471 = vld [vmem:[%s9 + $0xb0] sm:$0xff]
          %v6472 = vld [vmem:[%s9 + $0xb8] sm:$0xff]
          %v6473 = vld [vmem:[%s9 + $0xc0] sm:$0xff]
          %v6474 = vld [vmem:[%s9 + $0xc8] sm:$0xff]
          %v6475 = vld [vmem:[%s9 + $0xd0] sm:$0xff]
          %v6476 = vld [vmem:[%s9 + $0xd8] sm:$0xff]
          %v6477 = vld [vmem:[%s9 + $0xe0] sm:$0xff]
          %v6478 = vld [vmem:[%s9 + $0xe8] sm:$0xff]
          %v6479 = vld [vmem:[%s9 + $0xf0] sm:$0xff]
          %v6480 = vld [vmem:[%s9 + $0xf8] sm:$0xff]
          %v6481 = vld [vmem:[%s9 + $0x100] sm:$0xff]
          %v6482 = vld [vmem:[%s9 + $0x108] sm:$0xff]
          %v6483 = vld [vmem:[%s9 + $0x110] sm:$0xff]
          %v6484 = vld [vmem:[%s9 + $0x118] sm:$0xff]
          %v6485 = vld [vmem:[%s9 + $0x120] sm:$0xff]
          %v6486 = vld [vmem:[%s9 + $0x128] sm:$0xff]
          %v6487 = vld [vmem:[%s9 + $0x130] sm:$0xff]
          %v6488 = vld [vmem:[%s9 + $0x138] sm:$0xff]
          %v6489 = vld [vmem:[%s9 + $0x140] sm:$0xff]
          %v6490 = vld [vmem:[%s9 + $0x148] sm:$0xff]
          %v6491 = vld [vmem:[%s9 + $0x150] sm:$0xff]
          %v6492 = vld [vmem:[%s9 + $0x158] sm:$0xff]
          %v6493 = vld [vmem:[%s9 + $0x160] sm:$0xff]
          %v6494 = vld [vmem:[%s9 + $0x168] sm:$0xff]
          %v6495 = vld [vmem:[%s9 + $0x170] sm:$0xff]
          %v6496 = vld [vmem:[%s9 + $0x178] sm:$0xff]
          %v6497 = vld [vmem:[%s9 + $0x180] sm:$0xff]
          %v6498 = vld [vmem:[%s9 + $0x188] sm:$0xff]
          %v6499 = vld [vmem:[%s9 + $0x190] sm:$0xff]
          %v6500 = vld [vmem:[%s9 + $0x198] sm:$0xff]
          %v6501 = vld [vmem:[%s9 + $0x1a0] sm:$0xff]
          %v6502 = vld [vmem:[%s9 + $0x1a8] sm:$0xff]
          %v6503 = vld [vmem:[%s9 + $0x1b0] sm:$0xff]
          %v6504 = vld [vmem:[%s9 + $0x1b8] sm:$0xff]
          %v6505 = vld [vmem:[%s9 + $0x1c0] sm:$0xff]
          %v6506 = vld [vmem:[%s9 + $0x1c8] sm:$0xff]
          %v6507 = vld [vmem:[%s9 + $0x1d0] sm:$0xff]
          %v6508 = vld [vmem:[%s9 + $0x1d8] sm:$0xff]
          %v6509 = vld [vmem:[%s9 + $0x1e0] sm:$0xff]
          %v6510 = vld [vmem:[%s9 + $0x1e8] sm:$0xff]
          %v6511 = vld [vmem:[%s9 + $0x1f0] sm:$0xff]
          %v6512 = vld [vmem:[%s9 + $0x1f8] sm:$0xff]
          %v6513 = vld [vmem:[#allocation15] sm:$0x3]
          %v6515 = vlaneseq
          %v6516 = vshrl.u32 %v6515, 7
          %v6517 = vsub.s32 0, %v6516
          %v6518 = vrot.slane %v6513, %v6517
          %v6519 = vlaneseq
          %v6520 = vshrl.u32 %v6519, 7
          %v6521 = vsub.s32 1, %v6520
          %v6522 = vrot.slane %v6513, %v6521
          %v6589 = vunpack.c.l.b16 %v6449
          %v6590 = vunpack.c.h.b16 %v6449
          %v6591 = vunpack.c.l.b16 %v6450
          %v6592 = vunpack.c.h.b16 %v6450
          %v6593 = vunpack.c.l.b16 %v6451
          %v6594 = vunpack.c.h.b16 %v6451
          %v6595 = vunpack.c.l.b16 %v6452
          %v6596 = vunpack.c.h.b16 %v6452
          %v6597 = vunpack.c.l.b16 %v6453
          %v6598 = vunpack.c.h.b16 %v6453
          %v6599 = vunpack.c.l.b16 %v6454
          %v6600 = vunpack.c.h.b16 %v6454
          %v6601 = vunpack.c.l.b16 %v6455
          %v6602 = vunpack.c.h.b16 %v6455
          %v6603 = vunpack.c.l.b16 %v6456
          %v6604 = vunpack.c.h.b16 %v6456
          %v6605 = vunpack.c.l.b16 %v6457
          %v6606 = vunpack.c.h.b16 %v6457
          %v6607 = vunpack.c.l.b16 %v6458
          %v6608 = vunpack.c.h.b16 %v6458
          %v6609 = vunpack.c.l.b16 %v6459
          %v6610 = vunpack.c.h.b16 %v6459
          %v6611 = vunpack.c.l.b16 %v6460
          %v6612 = vunpack.c.h.b16 %v6460
          %v6613 = vunpack.c.l.b16 %v6461
          %v6614 = vunpack.c.h.b16 %v6461
          %v6615 = vunpack.c.l.b16 %v6462
          %v6616 = vunpack.c.h.b16 %v6462
          %v6617 = vunpack.c.l.b16 %v6463
          %v6618 = vunpack.c.h.b16 %v6463
          %v6619 = vunpack.c.l.b16 %v6464
          %v6620 = vunpack.c.h.b16 %v6464
          %v6621 = vunpack.c.l.b16 %v6465
          %v6622 = vunpack.c.h.b16 %v6465
          %v6623 = vunpack.c.l.b16 %v6466
          %v6624 = vunpack.c.h.b16 %v6466
          %v6625 = vunpack.c.l.b16 %v6467
          %v6626 = vunpack.c.h.b16 %v6467
          %v6627 = vunpack.c.l.b16 %v6468
          %v6628 = vunpack.c.h.b16 %v6468
          %v6629 = vunpack.c.l.b16 %v6469
          %v6630 = vunpack.c.h.b16 %v6469
          %v6631 = vunpack.c.l.b16 %v6470
          %v6632 = vunpack.c.h.b16 %v6470
          %v6633 = vunpack.c.l.b16 %v6471
          %v6634 = vunpack.c.h.b16 %v6471
          %v6635 = vunpack.c.l.b16 %v6472
          %v6636 = vunpack.c.h.b16 %v6472
          %v6637 = vunpack.c.l.b16 %v6473
          %v6638 = vunpack.c.h.b16 %v6473
          %v6639 = vunpack.c.l.b16 %v6474
          %v6640 = vunpack.c.h.b16 %v6474
          %v6641 = vunpack.c.l.b16 %v6475
          %v6642 = vunpack.c.h.b16 %v6475
          %v6643 = vunpack.c.l.b16 %v6476
          %v6644 = vunpack.c.h.b16 %v6476
          %v6645 = vunpack.c.l.b16 %v6477
          %v6646 = vunpack.c.h.b16 %v6477
          %v6647 = vunpack.c.l.b16 %v6478
          %v6648 = vunpack.c.h.b16 %v6478
          %v6649 = vunpack.c.l.b16 %v6479
          %v6650 = vunpack.c.h.b16 %v6479
          %v6651 = vunpack.c.l.b16 %v6480
          %v6652 = vunpack.c.h.b16 %v6480
          %v6653 = vunpack.c.l.b16 %v6481
          %v6654 = vunpack.c.h.b16 %v6481
          %v6655 = vunpack.c.l.b16 %v6482
          %v6656 = vunpack.c.h.b16 %v6482
          %v6657 = vunpack.c.l.b16 %v6483
          %v6658 = vunpack.c.h.b16 %v6483
          %v6659 = vunpack.c.l.b16 %v6484
          %v6660 = vunpack.c.h.b16 %v6484
          %v6661 = vunpack.c.l.b16 %v6485
          %v6662 = vunpack.c.h.b16 %v6485
          %v6663 = vunpack.c.l.b16 %v6486
          %v6664 = vunpack.c.h.b16 %v6486
          %v6665 = vunpack.c.l.b16 %v6487
          %v6666 = vunpack.c.h.b16 %v6487
          %v6667 = vunpack.c.l.b16 %v6488
          %v6668 = vunpack.c.h.b16 %v6488
          %v6669 = vunpack.c.l.b16 %v6489
          %v6670 = vunpack.c.h.b16 %v6489
          %v6671 = vunpack.c.l.b16 %v6490
          %v6672 = vunpack.c.h.b16 %v6490
          %v6673 = vunpack.c.l.b16 %v6491
          %v6674 = vunpack.c.h.b16 %v6491
          %v6675 = vunpack.c.l.b16 %v6492
          %v6676 = vunpack.c.h.b16 %v6492
          %v6677 = vunpack.c.l.b16 %v6493
          %v6678 = vunpack.c.h.b16 %v6493
          %v6679 = vunpack.c.l.b16 %v6494
          %v6680 = vunpack.c.h.b16 %v6494
          %v6681 = vunpack.c.l.b16 %v6495
          %v6682 = vunpack.c.h.b16 %v6495
          %v6683 = vunpack.c.l.b16 %v6496
          %v6684 = vunpack.c.h.b16 %v6496
          %v6685 = vunpack.c.l.b16 %v6497
          %v6686 = vunpack.c.h.b16 %v6497
          %v6687 = vunpack.c.l.b16 %v6498
          %v6688 = vunpack.c.h.b16 %v6498
          %v6689 = vunpack.c.l.b16 %v6499
          %v6690 = vunpack.c.h.b16 %v6499
          %v6691 = vunpack.c.l.b16 %v6500
          %v6692 = vunpack.c.h.b16 %v6500
          %v6693 = vunpack.c.l.b16 %v6501
          %v6694 = vunpack.c.h.b16 %v6501
          %v6695 = vunpack.c.l.b16 %v6502
          %v6696 = vunpack.c.h.b16 %v6502
          %v6697 = vunpack.c.l.b16 %v6503
          %v6698 = vunpack.c.h.b16 %v6503
          %v6699 = vunpack.c.l.b16 %v6504
          %v6700 = vunpack.c.h.b16 %v6504
          %v6701 = vunpack.c.l.b16 %v6505
          %v6702 = vunpack.c.h.b16 %v6505
          %v6703 = vunpack.c.l.b16 %v6506
          %v6704 = vunpack.c.h.b16 %v6506
          %v6705 = vunpack.c.l.b16 %v6507
          %v6706 = vunpack.c.h.b16 %v6507
          %v6707 = vunpack.c.l.b16 %v6508
          %v6708 = vunpack.c.h.b16 %v6508
          %v6709 = vunpack.c.l.b16 %v6509
          %v6710 = vunpack.c.h.b16 %v6509
          %v6711 = vunpack.c.l.b16 %v6510
          %v6712 = vunpack.c.h.b16 %v6510
          %v6713 = vunpack.c.l.b16 %v6511
          %v6714 = vunpack.c.h.b16 %v6511
          %v6715 = vunpack.c.l.b16 %v6512
          %v6716 = vunpack.c.h.b16 %v6512
          %v6717 = vpack.c.b16 %v6591, %v6589
          %v6718 = vpack.c.b16 %v6592, %v6590
          %v6719 = vpack.c.b16 %v6595, %v6593
          %v6720 = vpack.c.b16 %v6596, %v6594
          %v6721 = vpack.c.b16 %v6599, %v6597
          %v6722 = vpack.c.b16 %v6600, %v6598
          %v6723 = vpack.c.b16 %v6603, %v6601
          %v6724 = vpack.c.b16 %v6604, %v6602
          %v6725 = vpack.c.b16 %v6607, %v6605
          %v6726 = vpack.c.b16 %v6608, %v6606
          %v6727 = vpack.c.b16 %v6611, %v6609
          %v6728 = vpack.c.b16 %v6612, %v6610
          %v6729 = vpack.c.b16 %v6615, %v6613
          %v6730 = vpack.c.b16 %v6616, %v6614
          %v6731 = vpack.c.b16 %v6619, %v6617
          %v6732 = vpack.c.b16 %v6620, %v6618
          %v6733 = vpack.c.b16 %v6623, %v6621
          %v6734 = vpack.c.b16 %v6624, %v6622
          %v6735 = vpack.c.b16 %v6627, %v6625
          %v6736 = vpack.c.b16 %v6628, %v6626
          %v6737 = vpack.c.b16 %v6631, %v6629
          %v6738 = vpack.c.b16 %v6632, %v6630
          %v6739 = vpack.c.b16 %v6635, %v6633
          %v6740 = vpack.c.b16 %v6636, %v6634
          %v6741 = vpack.c.b16 %v6639, %v6637
          %v6742 = vpack.c.b16 %v6640, %v6638
          %v6743 = vpack.c.b16 %v6643, %v6641
          %v6744 = vpack.c.b16 %v6644, %v6642
          %v6745 = vpack.c.b16 %v6647, %v6645
          %v6746 = vpack.c.b16 %v6648, %v6646
          %v6747 = vpack.c.b16 %v6651, %v6649
          %v6748 = vpack.c.b16 %v6652, %v6650
          %v6749 = vpack.c.b16 %v6655, %v6653
          %v6750 = vpack.c.b16 %v6656, %v6654
          %v6751 = vpack.c.b16 %v6659, %v6657
          %v6752 = vpack.c.b16 %v6660, %v6658
          %v6753 = vpack.c.b16 %v6663, %v6661
          %v6754 = vpack.c.b16 %v6664, %v6662
          %v6755 = vpack.c.b16 %v6667, %v6665
          %v6756 = vpack.c.b16 %v6668, %v6666
          %v6757 = vpack.c.b16 %v6671, %v6669
          %v6758 = vpack.c.b16 %v6672, %v6670
          %v6759 = vpack.c.b16 %v6675, %v6673
          %v6760 = vpack.c.b16 %v6676, %v6674
          %v6761 = vpack.c.b16 %v6679, %v6677
          %v6762 = vpack.c.b16 %v6680, %v6678
          %v6763 = vpack.c.b16 %v6683, %v6681
          %v6764 = vpack.c.b16 %v6684, %v6682
          %v6765 = vpack.c.b16 %v6687, %v6685
          %v6766 = vpack.c.b16 %v6688, %v6686
          %v6767 = vpack.c.b16 %v6691, %v6689
          %v6768 = vpack.c.b16 %v6692, %v6690
          %v6769 = vpack.c.b16 %v6695, %v6693
          %v6770 = vpack.c.b16 %v6696, %v6694
          %v6771 = vpack.c.b16 %v6699, %v6697
          %v6772 = vpack.c.b16 %v6700, %v6698
          %v6773 = vpack.c.b16 %v6703, %v6701
          %v6774 = vpack.c.b16 %v6704, %v6702
          %v6775 = vpack.c.b16 %v6707, %v6705
          %v6776 = vpack.c.b16 %v6708, %v6706
          %v6777 = vpack.c.b16 %v6711, %v6709
          %v6778 = vpack.c.b16 %v6712, %v6710
          %v6779 = vpack.c.b16 %v6715, %v6713
          %v6780 = vpack.c.b16 %v6716, %v6714
          %6845 = vmatprep.subr.bf16.mxu0 %v6732
          %6846 = vmatpush1.bf16.msra.mxu0 %v6731
          %6847 = vmatprep.subr.bf16.mxu0 %v6730
          %6848 = vmatpush1.bf16.msra.mxu0 %v6729
          %6849 = vmatprep.subr.bf16.mxu0 %v6728
          %6850 = vmatpush1.bf16.msra.mxu0 %v6727
          %6851 = vmatprep.subr.bf16.mxu0 %v6726
          %6852 = vmatpush1.bf16.msra.mxu0 %v6725
          %6853 = vmatprep.subr.bf16.mxu0 %v6724
          %6854 = vmatpush1.bf16.msra.mxu0 %v6723
          %6855 = vmatprep.subr.bf16.mxu0 %v6722
          %6856 = vmatpush1.bf16.msra.mxu0 %v6721
          %6857 = vmatprep.subr.bf16.mxu0 %v6720
          %6858 = vmatpush1.bf16.msra.mxu0 %v6719
          %6859 = vmatprep.subr.bf16.mxu0 %v6718
          %6860 = vmatpush1.bf16.msra.mxu0 %v6717
          %6861 = vmatprep.subr.bf16.mxu0 %v6748
          %6862 = vmatpush2.bf16.msra.mxu0 %v6747
          %6863 = vmatprep.subr.bf16.mxu0 %v6746
          %6864 = vmatpush2.bf16.msra.mxu0 %v6745
          %6865 = vmatprep.subr.bf16.mxu0 %v6744
          %6866 = vmatpush2.bf16.msra.mxu0 %v6743
          %6867 = vmatprep.subr.bf16.mxu0 %v6742
          %6868 = vmatpush2.bf16.msra.mxu0 %v6741
          %6869 = vmatprep.subr.bf16.mxu0 %v6740
          %6870 = vmatpush2.bf16.msra.mxu0 %v6739
          %6871 = vmatprep.subr.bf16.mxu0 %v6738
          %6872 = vmatpush2.bf16.msra.mxu0 %v6737
          %6873 = vmatprep.subr.bf16.mxu0 %v6736
          %6874 = vmatpush2.bf16.msra.mxu0 %v6735
          %6875 = vmatprep.subr.bf16.mxu0 %v6734
          %6876 = vmatpush2.bf16.msra.mxu0 %v6733
          %6877 = vmatprep.mubr.bf16.mxu0 %v6446
          %6878 = vmatmul.mubr.bf16.gmra.mxu0 %v6445
          %v6879 = vpop.f32.mrf.mxu0
          %v6880 = vadd.f32 %v6518, %v6879
          %v6881 = vpop.f32.mrf.mxu0
          %v6882 = vadd.f32 %v6522, %v6881
          %v6883 = vpop.f32.mrf.mxu0
          %v6884 = vadd.f32 %v6518, %v6883
          %v6885 = vpop.f32.mrf.mxu0
          %v6886 = vadd.f32 %v6522, %v6885
          %6887 = vdwg.mxu0
          %6888 = vmatprep.subr.bf16.mxu0 %v6764
          %6889 = vmatpush1.bf16.msra.mxu0 %v6763
          %6890 = vmatprep.subr.bf16.mxu0 %v6762
          %6891 = vmatpush1.bf16.msra.mxu0 %v6761
          %6892 = vmatprep.subr.bf16.mxu0 %v6760
          %6893 = vmatpush1.bf16.msra.mxu0 %v6759
          %6894 = vmatprep.subr.bf16.mxu0 %v6758
          %6895 = vmatpush1.bf16.msra.mxu0 %v6757
          %6896 = vmatprep.subr.bf16.mxu0 %v6756
          %6897 = vmatpush1.bf16.msra.mxu0 %v6755
          %6898 = vmatprep.subr.bf16.mxu0 %v6754
          %6899 = vmatpush1.bf16.msra.mxu0 %v6753
          %6900 = vmatprep.subr.bf16.mxu0 %v6752
          %6901 = vmatpush1.bf16.msra.mxu0 %v6751
          %6902 = vmatprep.subr.bf16.mxu0 %v6750
          %6903 = vmatpush1.bf16.msra.mxu0 %v6749
          %6904 = vmatprep.subr.bf16.mxu0 %v6780
          %6905 = vmatpush2.bf16.msra.mxu0 %v6779
          %6906 = vmatprep.subr.bf16.mxu0 %v6778
          %6907 = vmatpush2.bf16.msra.mxu0 %v6777
          %6908 = vmatprep.subr.bf16.mxu0 %v6776
          %6909 = vmatpush2.bf16.msra.mxu0 %v6775
          %6910 = vmatprep.subr.bf16.mxu0 %v6774
          %6911 = vmatpush2.bf16.msra.mxu0 %v6773
          %6912 = vmatprep.subr.bf16.mxu0 %v6772
          %6913 = vmatpush2.bf16.msra.mxu0 %v6771
          %6914 = vmatprep.subr.bf16.mxu0 %v6770
          %6915 = vmatpush2.bf16.msra.mxu0 %v6769
          %6916 = vmatprep.subr.bf16.mxu0 %v6768
          %6917 = vmatpush2.bf16.msra.mxu0 %v6767
          %6918 = vmatprep.subr.bf16.mxu0 %v6766
          %6919 = vmatpush2.bf16.msra.mxu0 %v6765
          %6920 = vmatprep.mubr.bf16.mxu0 %v6448
          %6921 = vmatmul.mubr.bf16.gmra.mxu0 %v6447
          %v6922 = vpop.f32.mrf.mxu0
          %v6923 = vadd.f32 %v6880, %v6922
          %v6924 = vpop.f32.mrf.mxu0
          %v6925 = vadd.f32 %v6882, %v6924
          %v6926 = vpop.f32.mrf.mxu0
          %v6927 = vadd.f32 %v6884, %v6926
          %v6928 = vpop.f32.mrf.mxu0
          %v6929 = vadd.f32 %v6886, %v6928
          %6930 = vdwg.mxu0
          %v6931 = vmax.f32 %v6923, 0.0
          %v6932 = vmax.f32 %v6925, 0.0
          %v6933 = vmax.f32 %v6927, 0.0
          %v6934 = vmax.f32 %v6929, 0.0
          %v6935 = vpack.c.bf16 %v6933, %v6931
          %v6936 = vpack.c.bf16 %v6934, %v6932
          %v6937 = vld [vmem:[#allocation17] sm:$0xf]
          %v6938 = vld [vmem:[#allocation17 + $0x4] sm:$0xf]
          %v6939 = vld [vmem:[#allocation17 + $0x8] sm:$0xf]
          %v6940 = vld [vmem:[#allocation17 + $0xc] sm:$0xf]
          %v6941 = vld [vmem:[#allocation17 + $0x10] sm:$0xf]
          %v6942 = vld [vmem:[#allocation17 + $0x14] sm:$0xf]
          %v6943 = vld [vmem:[#allocation17 + $0x18] sm:$0xf]
          %v6944 = vld [vmem:[#allocation17 + $0x1c] sm:$0xf]
          %v6945 = vld [vmem:[#allocation17 + $0x20] sm:$0xf]
          %v6946 = vld [vmem:[#allocation17 + $0x24] sm:$0xf]
          %v6947 = vld [vmem:[#allocation17 + $0x28] sm:$0xf]
          %v6948 = vld [vmem:[#allocation17 + $0x2c] sm:$0xf]
          %v6949 = vld [vmem:[#allocation17 + $0x30] sm:$0xf]
          %v6950 = vld [vmem:[#allocation17 + $0x34] sm:$0xf]
          %v6951 = vld [vmem:[#allocation17 + $0x38] sm:$0xf]
          %v6952 = vld [vmem:[#allocation17 + $0x3c] sm:$0xf]
          %v6953 = vld [vmem:[#allocation17 + $0x40] sm:$0xf]
          %v6954 = vld [vmem:[#allocation17 + $0x44] sm:$0xf]
          %v6955 = vld [vmem:[#allocation17 + $0x48] sm:$0xf]
          %v6956 = vld [vmem:[#allocation17 + $0x4c] sm:$0xf]
          %v6957 = vld [vmem:[#allocation17 + $0x50] sm:$0xf]
          %v6958 = vld [vmem:[#allocation17 + $0x54] sm:$0xf]
          %v6959 = vld [vmem:[#allocation17 + $0x58] sm:$0xf]
          %v6960 = vld [vmem:[#allocation17 + $0x5c] sm:$0xf]
          %v6961 = vld [vmem:[#allocation17 + $0x60] sm:$0xf]
          %v6962 = vld [vmem:[#allocation17 + $0x64] sm:$0xf]
          %v6963 = vld [vmem:[#allocation17 + $0x68] sm:$0xf]
          %v6964 = vld [vmem:[#allocation17 + $0x6c] sm:$0xf]
          %v6965 = vld [vmem:[#allocation17 + $0x70] sm:$0xf]
          %v6966 = vld [vmem:[#allocation17 + $0x74] sm:$0xf]
          %v6967 = vld [vmem:[#allocation17 + $0x78] sm:$0xf]
          %v6968 = vld [vmem:[#allocation17 + $0x7c] sm:$0xf]
          %v6969 = vld [vmem:[%s12] sm:$0x1]
          %v6971 = vlaneseq
          %v6972 = vshrl.u32 %v6971, 7
          %v6973 = vsub.s32 0, %v6972
          %v6974 = vrot.slane %v6969, %v6973
          %v7008 = vunpack.c.l.b16 %v6937
          %v7009 = vunpack.c.l.b16 %v6938
          %v7010 = vunpack.c.l.b16 %v6939
          %v7011 = vunpack.c.l.b16 %v6940
          %v7012 = vunpack.c.l.b16 %v6941
          %v7013 = vunpack.c.l.b16 %v6942
          %v7014 = vunpack.c.l.b16 %v6943
          %v7015 = vunpack.c.l.b16 %v6944
          %v7016 = vunpack.c.l.b16 %v6945
          %v7017 = vunpack.c.l.b16 %v6946
          %v7018 = vunpack.c.l.b16 %v6947
          %v7019 = vunpack.c.l.b16 %v6948
          %v7020 = vunpack.c.l.b16 %v6949
          %v7021 = vunpack.c.l.b16 %v6950
          %v7022 = vunpack.c.l.b16 %v6951
          %v7023 = vunpack.c.l.b16 %v6952
          %v7024 = vunpack.c.l.b16 %v6953
          %v7025 = vunpack.c.l.b16 %v6954
          %v7026 = vunpack.c.l.b16 %v6955
          %v7027 = vunpack.c.l.b16 %v6956
          %v7028 = vunpack.c.l.b16 %v6957
          %v7029 = vunpack.c.l.b16 %v6958
          %v7030 = vunpack.c.l.b16 %v6959
          %v7031 = vunpack.c.l.b16 %v6960
          %v7032 = vunpack.c.l.b16 %v6961
          %v7033 = vunpack.c.l.b16 %v6962
          %v7034 = vunpack.c.l.b16 %v6963
          %v7035 = vunpack.c.l.b16 %v6964
          %v7036 = vunpack.c.l.b16 %v6965
          %v7037 = vunpack.c.l.b16 %v6966
          %v7038 = vunpack.c.l.b16 %v6967
          %v7039 = vunpack.c.l.b16 %v6968
          %v7040 = vpack.c.b16 %v7009, %v7008
          %v7041 = vpack.c.b16 %v7011, %v7010
          %v7042 = vpack.c.b16 %v7013, %v7012
          %v7043 = vpack.c.b16 %v7015, %v7014
          %v7044 = vpack.c.b16 %v7017, %v7016
          %v7045 = vpack.c.b16 %v7019, %v7018
          %v7046 = vpack.c.b16 %v7021, %v7020
          %v7047 = vpack.c.b16 %v7023, %v7022
          %v7048 = vpack.c.b16 %v7025, %v7024
          %v7049 = vpack.c.b16 %v7027, %v7026
          %v7050 = vpack.c.b16 %v7029, %v7028
          %v7051 = vpack.c.b16 %v7031, %v7030
          %v7052 = vpack.c.b16 %v7033, %v7032
          %v7053 = vpack.c.b16 %v7035, %v7034
          %v7054 = vpack.c.b16 %v7037, %v7036
          %v7055 = vpack.c.b16 %v7039, %v7038
          %7072 = vmatprep.subr.bf16.mxu0 0
          %7073 = vmatpush1.bf16.msra.mxu0 %v7047
          %7074 = vmatprep.subr.bf16.mxu0 0
          %7075 = vmatpush1.bf16.msra.mxu0 %v7046
          %7076 = vmatprep.subr.bf16.mxu0 0
          %7077 = vmatpush1.bf16.msra.mxu0 %v7045
          %7078 = vmatprep.subr.bf16.mxu0 0
          %7079 = vmatpush1.bf16.msra.mxu0 %v7044
          %7080 = vmatprep.subr.bf16.mxu0 0
          %7081 = vmatpush1.bf16.msra.mxu0 %v7043
          %7082 = vmatprep.subr.bf16.mxu0 0
          %7083 = vmatpush1.bf16.msra.mxu0 %v7042
          %7084 = vmatprep.subr.bf16.mxu0 0
          %7085 = vmatpush1.bf16.msra.mxu0 %v7041
          %7086 = vmatprep.subr.bf16.mxu0 0
          %7087 = vmatpush1.bf16.msra.mxu0 %v7040
          %7088 = vmatprep.subr.bf16.mxu0 0
          %7089 = vmatpush2.bf16.msra.mxu0 %v7055
          %7090 = vmatprep.subr.bf16.mxu0 0
          %7091 = vmatpush2.bf16.msra.mxu0 %v7054
          %7092 = vmatprep.subr.bf16.mxu0 0
          %7093 = vmatpush2.bf16.msra.mxu0 %v7053
          %7094 = vmatprep.subr.bf16.mxu0 0
          %7095 = vmatpush2.bf16.msra.mxu0 %v7052
          %7096 = vmatprep.subr.bf16.mxu0 0
          %7097 = vmatpush2.bf16.msra.mxu0 %v7051
          %7098 = vmatprep.subr.bf16.mxu0 0
          %7099 = vmatpush2.bf16.msra.mxu0 %v7050
          %7100 = vmatprep.subr.bf16.mxu0 0
          %7101 = vmatpush2.bf16.msra.mxu0 %v7049
          %7102 = vmatprep.subr.bf16.mxu0 0
          %7103 = vmatpush2.bf16.msra.mxu0 %v7048
          %7104 = vmatprep.mubr.bf16.mxu0 %v6936
          %7105 = vmatmul.mubr.bf16.gmra.mxu0 %v6935
          %v7106 = vpop.f32.mrf.mxu0
          %v7107 = vadd.f32 %v6974, %v7106
          %v7108 = vpop.f32.mrf.mxu0
          %v7109 = vpop.f32.mrf.mxu0
          %v7110 = vadd.f32 %v6974, %v7109
          %v7111 = vpop.f32.mrf.mxu0
          %7112 = vdwg.mxu0
          %7113 = vst [vmem:[%s578] sm:$0xff] %v7107
          %7114 = vst [vmem:[%s578 + $0x8] sm:$0xff] %v7110
        $region116: #{tpu_custom_call.1} parent=71 // pred_fallthru
          _
        %s7115 = sand.u32 %s332, 1
        %s7116 = scalar_lea.sflag [#allocation5], %s7115
        %s7117 = sand.u32 %s332, 1
        %s7118 = smul.addr %s7117, 16
        %s7119 = scalar_lea.vmem [#allocation18], %s7118
        // Predicated region
        $region117: #{tpu_custom_call.1} parent=71 // pred_check
          %p7120 = pneg %p342
        $region118: #{tpu_custom_call.1} parent=71 // pred_check_branch
          %7122 = sbr.rel (%p7120) target = $region120
        $region119: #{tpu_custom_call.1} parent=71 // pred_region
          %s7123 = smul.u32 2, %s36
          %s7125 = ssub.s32 256, 256
          %7126 = vsyncadd %s7116, %s7125
          %s7127 = smul.addr %s7123, 128
          %s7128 = scalar_lea.hbm %s13, %s7127
          %s7129 = sshll.u32 %s7119, 4
          %s7130 = int_to_ptr.vmem [resolvable:$true] %s7129
          %7135 = dma.vmem_to_hbm [thread:$0]  %s7130, 256, %s7128, %s7116, 128, 128, 8
        $region120: #{tpu_custom_call.1} parent=71 // pred_fallthru
          _
      $region72: #{tpu_custom_call.1} parent=5 // pred_fallthru
        _
      %p7136 = scmp.le.s32.totalorder 2, %s27
      // Predicated region
      $region121: #{tpu_custom_call.1} parent=5 // pred_check
        %p7137 = pneg %p7136
      $region122: #{tpu_custom_call.1} parent=5 // pred_check_branch
        %7139 = sbr.rel (%p7137) target = $region124
      $region123: #{tpu_custom_call.1} parent=5 // pred_region
        %s7140 = ssub.s32 %s27, 2
        // Predicated region
        $region125: #{tpu_custom_call.1} parent=123 // pred_check
          %p7141 = pneg %p348
        $region126: #{tpu_custom_call.1} parent=123 // pred_check_branch
          %7143 = sbr.rel (%p7141) target = $region128
        $region127: #{tpu_custom_call.1} parent=123 // pred_region
          %s7144 = sand.u32 %s333, 1
          %s7145 = scalar_lea.sflag [#allocation5], %s7144
          %s7146 = sand.u32 %s333, 1
          %s7147 = smul.addr %s7146, 16
          %s7148 = scalar_lea.vmem [#allocation18], %s7147
          %7149 = dma.done %s7145, 256
        $region128: #{tpu_custom_call.1} parent=123 // pred_fallthru
          _
      $region124: #{tpu_custom_call.1} parent=5 // pred_fallthru
        _
    $region6: #{tpu_custom_call.1} parent=1 // loop_footer
      %s31 = sadd.s32 1, %s27
    $region7: #{tpu_custom_call.1} parent=1 // loop_footer_branch
      %26 = sbr.rel target = $region3
    $region8: #{tpu_custom_call.1} parent=1 // loop_exit
      _
    %7150 = vsyncpa [#allocation4], 1
    %s7151 = scalar_lea.sflag [#allocation4], 1
    %7152 = vsyncpa %s7151, 1
    %7153 = vsyncpa [#allocation7], 1
    %7154 = vsyncpa [#allocation10], 1
    %7155 = vsyncpa [#allocation13], 1
    %7156 = vsyncpa [#allocation16], 1
    %7157 = vsyncpa [#allocation5], 1
    %s7158 = scalar_lea.sflag [#allocation5], 1
    %7159 = vsyncpa %s7158, 1

</llo_original>
